<compile_context>
chip_gen: v5e
topology: v5e:2x2
jax: 0.10.0
libtpu: 0.0.40
codegen_flags: <defaults>
</compile_context>

<pallas_src>
import jax
import jax.numpy as jnp
from jax.experimental import pallas as pl
from jax.experimental.pallas import tpu as pltpu


def _cirh_kernel(
    xi_ref, xt_ref, a_ref,
    ei_w, ei_b, gi_w, gi_b, gi_sh,
    et_w, et_b, gt_w, gt_b, gt_sh,
    gj_w, gj_b, gj_sh,
    vjh_w, vjh_b, ifca_w, tfcb_w,
    hc_w, hc_b,
    di1_w, di1_b, di2_w, di2_b,
    dt1_w, dt1_b, dt2_w, dt2_b,
    packed_ref, dei_ref, det_ref,
):
    f32 = jnp.float32
    relu = lambda v: jnp.maximum(v, 0.0)

    def dotw(x, w_ref):
        # weights stream from HBM in bf16; widen to f32 so the MXU accumulates f32
        return jnp.dot(x, w_ref[...].astype(f32), preferred_element_type=f32)

    H = ei_w.shape[1]
    C = hc_w.shape[1]

    xi = xi_ref[...]
    xt = xt_ref[...]
    a = a_ref[...]

    # --- IRR encoders (Linear+BN folded) + row-wise L2 normalize via rsqrt (EUP) ---
    vi = relu(dotw(xi, ei_w) + ei_b[...])
    vi = vi * jax.lax.rsqrt(jnp.maximum(jnp.sum(vi * vi, axis=1, keepdims=True), 1e-24))
    vt = relu(dotw(xt, et_w) + et_b[...])
    vt = vt * jax.lax.rsqrt(jnp.maximum(jnp.sum(vt * vt, axis=1, keepdims=True), 1e-24))

    # --- graph convs + CMA: one MXU pass of A for all three branches -------------
    # gj_b / gj_sh already hold the pre-doubled (2*b, 2*shift) CMA terms.
    gi_pre = dotw(vi, gi_w) + gi_b[...]
    gt_pre = dotw(vt, gt_w) + gt_b[...]
    jsum = dotw(vi + vt, gj_w) + gj_b[...]
    gcat = jnp.concatenate([gi_pre, gt_pre, jsum], axis=1)        # (N, 3H)
    ag = jnp.dot(a, gcat, preferred_element_type=f32)
    vgcni = relu(ag[:, :H] + gi_sh[...])
    vgcnt = relu(ag[:, H:2 * H] + gt_sh[...])
    vj = relu(ag[:, 2 * H:] + jsum + gj_sh[...])                  # (A+I)@jsum + 2*sh

    # --- hash heads: VJ pushed through the MXU once for [HJ | img_fc | txt_fc] ---
    vjh = dotw(vj, vjh_w) + vjh_b[...]                            # (N, 3C)
    hj = vjh[:, :C]
    hi = vjh[:, C:2 * C] + dotw(vgcni, ifca_w)
    ht = vjh[:, 2 * C:] + dotw(vgcnt, tfcb_w)
    hcat = jnp.concatenate([hi, hj, ht], axis=1)                  # order matches HC
    h = jnp.tanh(dotw(hcat, hc_w) + hc_b[...])
    bsign = jnp.where(h > 0.0, 1.0, jnp.where(h < 0.0, -1.0, 0.0)).astype(f32)

    # --- decoders (each Linear+BN folded) ----------------------------------------
    zi = h + jnp.tanh(hi)
    zt = h + jnp.tanh(ht)
    dei_ref[...] = dotw(relu(dotw(zi, di1_w) + di1_b[...]), di2_w) + di2_b[...]
    det_ref[...] = dotw(relu(dotw(zt, dt1_w) + dt1_b[...]), dt2_w) + dt2_b[...]

    # --- lane-dense packed output: [HI | HT | H | B] -> (N, 4C) -------------------
    packed_ref[...] = jnp.concatenate([hi, ht, h, bsign], axis=1)


_PARAM_ORDER = (
    "ei_w", "ei_b", "gi_w", "gi_b", "gi_sh",
    "et_w", "et_b", "gt_w", "gt_b", "gt_sh",
    "gj_w", "gj_b", "gj_sh",
    "vjh_w", "vjh_b", "ifca_w", "tfcb_w",
    "hc_w", "hc_b",
    "di1_w", "di1_b", "di2_w", "di2_b",
    "dt1_w", "dt1_b", "dt2_w", "dt2_b",
)


@jax.jit
def cirh_forward(XI, XT, A, fp):
    """XI: (N, FI), XT: (N, FT), A: (N, N). fp: folded (eval-mode) params."""
    N, FI = XI.shape
    FT = XT.shape[1]
    Hh = fp["ei_w"].shape[1]
    C = fp["hc_w"].shape[1]

    flops = 2 * N * (
        FI * Hh + FT * Hh              # encoders
        + 3 * Hh * Hh                  # gcnI1, gcnT1, gcnJ1
        + 3 * N * Hh                   # fused affinity matmul (3H wide)
        + Hh * 3 * C + 2 * Hh * C      # fused vj heads + ifca/tfcb halves
        + 3 * C * C                    # HC
        + 2 * C * Hh                   # decoder first linears
        + Hh * FI + Hh * FT            # decoder second linears
    )
    transcendentals = N * (3 * C + 2)
    param_bytes = sum(int(v.size) * v.dtype.itemsize
                      for v in jax.tree_util.tree_leaves(fp))
    io_bytes = 4 * (int(XI.size) + int(XT.size) + int(A.size)
                    + N * (4 * C + FI + FT))
    bytes_accessed = param_bytes + io_bytes

    # explicit VMEM budget (don't rely on the 16/32 MiB scoped defaults)
    vmem_limit = int(min(48 << 20, max(16 << 20, 2 * bytes_accessed + (8 << 20))))

    out_shape = (
        jax.ShapeDtypeStruct((N, 4 * C), jnp.float32),  # packed [HI|HT|H|B]
        jax.ShapeDtypeStruct((N, FI), jnp.float32),     # DeI_feat
        jax.ShapeDtypeStruct((N, FT), jnp.float32),     # DeT_feat
    )
    packed, dei, det = pl.pallas_call(
        _cirh_kernel,
        out_shape=out_shape,
        cost_estimate=pl.CostEstimate(
            flops=int(flops),
            transcendentals=int(transcendentals),
            bytes_accessed=int(bytes_accessed),
        ),
        compiler_params=pltpu.CompilerParams(vmem_limit_bytes=vmem_limit),
    )(XI, XT, A, *(fp[k] for k in _PARAM_ORDER))

    HI = packed[:, :C]
    HT = packed[:, C:2 * C]
    H = packed[:, 2 * C:3 * C]
    B = packed[:, 3 * C:]
    return HI, HT, H, B, dei, det


# ------------------------- parameters (raw + folded) -------------------------

def init_raw_params(key, ori_featI, ori_featT, code_len, hidden=512):
    keys = iter(jax.random.split(key, 80))

    def linear(fan_in, fan_out):
        bound = float(fan_in) ** -0.5
        w = jax.random.uniform(next(keys), (fan_in, fan_out), jnp.float32, -bound, bound)
        b = jax.random.uniform(next(keys), (fan_out,), jnp.float32, -bound, bound)
        return w, b

    def bn(dim):  # (gamma, beta, running_mean, running_var) with non-trivial stats
        g = jax.random.uniform(next(keys), (dim,), jnp.float32, 0.5, 1.5)
        beta = 0.1 * jax.random.normal(next(keys), (dim,), jnp.float32)
        mean = 0.1 * jax.random.normal(next(keys), (dim,), jnp.float32)
        var = jax.random.uniform(next(keys), (dim,), jnp.float32, 0.5, 1.5)
        return g, beta, mean, var

    H, C = hidden, code_len
    return dict(
        encI=linear(ori_featI, H), bn_encI=bn(H),
        gcnI1=linear(H, H), bnI1=bn(H),
        encT=linear(ori_featT, H), bn_encT=bn(H),
        gcnT1=linear(H, H), bnT1=bn(H),
        gcnJ1=linear(H, H), bnJ1=bn(H),
        HJ=linear(H, C), HJBN=bn(C),
        img_fc=linear(2 * H, C), HIBN=bn(C),
        txt_fc=linear(2 * H, C), HTBN=bn(C),
        HC=linear(3 * C, C), HBN=bn(C),
        decI1=linear(C, H), bn_decI1=bn(H),
        decI2=linear(H, ori_featI), bn_decI2=bn(ori_featI),
        decT1=linear(C, H), bn_decT1=bn(H),
        decT2=linear(H, ori_featT), bn_decT2=bn(ori_featT),
    )


def fold_params(p, hidden=512):
    """Fold eval-mode BN into adjacent Linears, fuse head weights, cast to bf16."""
    def bn_ss(bn, eps=1e-5):
        g, beta, mean, var = bn
        s = g / jnp.sqrt(var + eps)
        return s, beta - mean * s

    def lin_bn(lin, bn):           # BN(x @ W + b)        -> x @ Wf + bf
        w, b = lin
        s, sh = bn_ss(bn)
        return w * s[None, :], (b * s + sh)[None, :]

    def gcn_bn(lin, bn):           # BN(A @ (x @ W + b))  -> A @ (x @ Wf + bf) + sh
        w, b = lin
        s, sh = bn_ss(bn)
        return w * s[None, :], (b * s)[None, :], sh[None, :]

    H = hidden
    bf16 = lambda w: w.astype(jnp.bfloat16)

    ei_w, ei_b = lin_bn(p["encI"], p["bn_encI"])
    et_w, et_b = lin_bn(p["encT"], p["bn_encT"])
    gi_w, gi_b, gi_sh = gcn_bn(p["gcnI1"], p["bnI1"])
    gt_w, gt_b, gt_sh = gcn_bn(p["gcnT1"], p["bnT1"])
    gj_w, gj_b, gj_sh = gcn_bn(p["gcnJ1"], p["bnJ1"])
    gj_b2 = 2.0 * gj_b          # pre-double CMA terms (exact: VJ1[:N] + VJ1[N:])
    gj_sh2 = 2.0 * gj_sh

    hj_w, hj_b = lin_bn(p["HJ"], p["HJBN"])
    ifc_wf, ifc_b = lin_bn(p["img_fc"], p["HIBN"])
    tfc_wf, tfc_b = lin_bn(p["txt_fc"], p["HTBN"])
    ifca_w, ifcb_w = ifc_wf[:H], ifc_wf[H:]
    tfca_w, tfcb_w = tfc_wf[:H], tfc_wf[H:]
    # fuse the three matmuls that consume VJ along the output dim: (H, 3C)
    vjh_w = jnp.concatenate([hj_w, ifcb_w, tfca_w], axis=1)
    vjh_b = jnp.concatenate([hj_b, ifc_b, tfc_b], axis=1)
    hc_w, hc_b = lin_bn(p["HC"], p["HBN"])      # (3C, C), acts on [HI|HJ|HT]

    di1_w, di1_b = lin_bn(p["decI1"], p["bn_decI1"])
    di2_w, di2_b = lin_bn(p["decI2"], p["bn_decI2"])
    dt1_w, dt1_b = lin_bn(p["decT1"], p["bn_decT1"])
    dt2_w, dt2_b = lin_bn(p["decT2"], p["bn_decT2"])

    return dict(
        ei_w=bf16(ei_w), ei_b=ei_b,
        gi_w=bf16(gi_w), gi_b=gi_b, gi_sh=gi_sh,
        et_w=bf16(et_w), et_b=et_b,
        gt_w=bf16(gt_w), gt_b=gt_b, gt_sh=gt_sh,
        gj_w=bf16(gj_w), gj_b=gj_b2, gj_sh=gj_sh2,
        vjh_w=bf16(vjh_w), vjh_b=vjh_b,
        ifca_w=bf16(ifca_w), tfcb_w=bf16(tfcb_w),
        hc_w=bf16(hc_w), hc_b=hc_b,
        di1_w=bf16(di1_w), di1_b=di1_b, di2_w=bf16(di2_w), di2_b=di2_b,
        dt1_w=bf16(dt1_w), dt1_b=dt1_b, dt2_w=bf16(dt2_w), dt2_b=dt2_b,
    )


# ------------------------- pure-JAX reference (raw f32 params) -------------------------

def cirh_reference(XI, XT, A, p):
    def bn(x, bnp, eps=1e-5):
        g, beta, mean, var = bnp
        return (x - mean) / jnp.sqrt(var + eps) * g + beta

    def l2n(x, eps=1e-12):
        n = jnp.sqrt(jnp.sum(x * x, axis=1, keepdims=True))
        return x / jnp.maximum(n, eps)

    relu = lambda v: jnp.maximum(v, 0.0)
    N = XI.shape[0]

    W, b = p["encI"]; vi = l2n(relu(bn(XI @ W + b, p["bn_encI"])))
    W, b = p["gcnI1"]; vgcni = relu(bn(A @ (vi @ W + b), p["bnI1"]))
    W, b = p["encT"]; vt = l2n(relu(bn(XT @ W + b, p["bn_encT"])))
    W, b = p["gcnT1"]; vgcnt = relu(bn(A @ (vt @ W + b), p["bnT1"]))

    vc = jnp.concatenate([vi, vt], axis=0)
    ii = jnp.eye(N, dtype=A.dtype)
    s_cma = jnp.concatenate(
        [jnp.concatenate([A, ii], 1), jnp.concatenate([ii, A], 1)], 0)
    W, b = p["gcnJ1"]; vj1 = bn(s_cma @ (vc @ W + b), p["bnJ1"])
    vj = relu(vj1[:N] + vj1[N:])

    W, b = p["HJ"]; hj = bn(vj @ W + b, p["HJBN"])
    W, b = p["img_fc"]; hi = bn(jnp.concatenate([vgcni, vj], 1) @ W + b, p["HIBN"])
    W, b = p["txt_fc"]; ht = bn(jnp.concatenate([vj, vgcnt], 1) @ W + b, p["HTBN"])
    W, b = p["HC"]; h = jnp.tanh(bn(jnp.concatenate([hi, hj, ht], 1) @ W + b, p["HBN"]))
    bsign = jnp.sign(h)

    def dec(z, l1, bn1, l2, bn2):
        W1, b1 = l1; W2, b2 = l2
        y = relu(bn(z @ W1 + b1, bn1))
        return bn(y @ W2 + b2, bn2)

    dei = dec(h + jnp.tanh(hi), p["decI1"], p["bn_decI1"], p["decI2"], p["bn_decI2"])
    det = dec(h + jnp.tanh(ht), p["decT1"], p["bn_decT1"], p["decT2"], p["bn_decT2"])
    return hi, ht, h, bsign, dei, det


if __name__ == "__main__":
    key = jax.random.PRNGKey(0)
    kxi, kxt, ka, kp = jax.random.split(key, 4)

    N, FI, FT, C = 8, 256, 128, 32
    XI = jax.random.normal(kxi, (N, FI), jnp.float32)
    XT = jax.random.normal(kxt, (N, FT), jnp.float32)
    A0 = jax.random.uniform(ka, (N, N), jnp.float32)
    A = 0.5 * (A0 + A0.T) / N + 0.5 * jnp.eye(N, dtype=jnp.float32)  # affinity matrix

    raw = init_raw_params(kp, FI, FT, C)
    folded = fold_params(raw)

    outs = cirh_forward(XI, XT, A, folded)
    outs = jax.block_until_ready(outs)

    refs = cirh_reference(XI, XT, A, raw)
    names = ["HI", "HT", "H", "B", "DeI_feat", "DeT_feat"]
    # bf16 weight streaming -> slightly looser tolerances vs the f32 reference
    for name, o, r in zip(names, outs, refs):
        assert o.shape == r.shape, f"{name} shape {o.shape} vs {r.shape}"
        if name == "B":
            stable = jnp.abs(refs[2]) > 3e-2  # ignore sign ties where H ~ 0
            assert bool(jnp.all(jnp.where(stable, o == r, True))), "B mismatch"
        else:
            assert bool(jnp.allclose(o, r, atol=2e-2, rtol=2e-2)), f"{name} mismatch"

    print("KERNEL_OK")
</pallas_src>

<mosaic_0001>
module attributes {stable_mosaic.version = 11 : i64} {
  func.func @_cirh_kernel(%arg0: memref<8x256xf32, #tpu.memory_space<vmem>>, %arg1: memref<8x128xf32, #tpu.memory_space<vmem>>, %arg2: memref<8x8xf32, #tpu.memory_space<vmem>>, %arg3: memref<256x512xbf16, #tpu.memory_space<vmem>>, %arg4: memref<1x512xf32, #tpu.memory_space<vmem>>, %arg5: memref<512x512xbf16, #tpu.memory_space<vmem>>, %arg6: memref<1x512xf32, #tpu.memory_space<vmem>>, %arg7: memref<1x512xf32, #tpu.memory_space<vmem>>, %arg8: memref<128x512xbf16, #tpu.memory_space<vmem>>, %arg9: memref<1x512xf32, #tpu.memory_space<vmem>>, %arg10: memref<512x512xbf16, #tpu.memory_space<vmem>>, %arg11: memref<1x512xf32, #tpu.memory_space<vmem>>, %arg12: memref<1x512xf32, #tpu.memory_space<vmem>>, %arg13: memref<512x512xbf16, #tpu.memory_space<vmem>>, %arg14: memref<1x512xf32, #tpu.memory_space<vmem>>, %arg15: memref<1x512xf32, #tpu.memory_space<vmem>>, %arg16: memref<512x96xbf16, #tpu.memory_space<vmem>>, %arg17: memref<1x96xf32, #tpu.memory_space<vmem>>, %arg18: memref<512x32xbf16, #tpu.memory_space<vmem>>, %arg19: memref<512x32xbf16, #tpu.memory_space<vmem>>, %arg20: memref<96x32xbf16, #tpu.memory_space<vmem>>, %arg21: memref<1x32xf32, #tpu.memory_space<vmem>>, %arg22: memref<32x512xbf16, #tpu.memory_space<vmem>>, %arg23: memref<1x512xf32, #tpu.memory_space<vmem>>, %arg24: memref<512x256xbf16, #tpu.memory_space<vmem>>, %arg25: memref<1x256xf32, #tpu.memory_space<vmem>>, %arg26: memref<32x512xbf16, #tpu.memory_space<vmem>>, %arg27: memref<1x512xf32, #tpu.memory_space<vmem>>, %arg28: memref<512x128xbf16, #tpu.memory_space<vmem>>, %arg29: memref<1x128xf32, #tpu.memory_space<vmem>>, %arg30: memref<8x128xf32, #tpu.memory_space<vmem>>, %arg31: memref<8x256xf32, #tpu.memory_space<vmem>>, %arg32: memref<8x128xf32, #tpu.memory_space<vmem>>) attributes {dimension_semantics = [], scalar_prefetch = 0 : i64, scratch_operands = 0 : i64, tpu.core_type = #tpu.core_type<tc>} {
    %c0 = arith.constant 0 : index
    %c0_0 = arith.constant 0 : index
    %0 = vector.load %arg0[%c0, %c0_0] : memref<8x256xf32, #tpu.memory_space<vmem>>, vector<8x256xf32>
    %c0_1 = arith.constant 0 : index
    %c0_2 = arith.constant 0 : index
    %1 = vector.load %arg1[%c0_1, %c0_2] : memref<8x128xf32, #tpu.memory_space<vmem>>, vector<8x128xf32>
    %c0_3 = arith.constant 0 : index
    %c0_4 = arith.constant 0 : index
    %2 = vector.load %arg2[%c0_3, %c0_4] : memref<8x8xf32, #tpu.memory_space<vmem>>, vector<8x8xf32>
    %c0_5 = arith.constant 0 : index
    %c0_6 = arith.constant 0 : index
    %3 = vector.load %arg3[%c0_5, %c0_6] : memref<256x512xbf16, #tpu.memory_space<vmem>>, vector<256x512xbf16>
    %4 = arith.extf %3 : vector<256x512xbf16> to vector<256x512xf32>
    %cst = arith.constant dense<0.000000e+00> : vector<8x512xf32>
    %5 = tpu.matmul %0, %4, %cst {dimension_numbers = #tpu.dot_dimension_numbers<[1], [0], [0], [1], [0, 0, 1, 1], [], []>} : vector<8x256xf32>, vector<256x512xf32>, vector<8x512xf32> -> vector<8x512xf32>
    %c0_7 = arith.constant 0 : index
    %c0_8 = arith.constant 0 : index
    %6 = vector.load %arg4[%c0_7, %c0_8] : memref<1x512xf32, #tpu.memory_space<vmem>>, vector<1x512xf32>
    %7 = vector.broadcast %6 : vector<1x512xf32> to vector<8x512xf32>
    %8 = arith.addf %5, %7 : vector<8x512xf32>
    %cst_9 = arith.constant 0.000000e+00 : f32
    %9 = vector.broadcast %cst_9 : f32 to vector<8x512xf32>
    %10 = arith.maximumf %8, %9 : vector<8x512xf32>
    %11 = arith.mulf %10, %10 : vector<8x512xf32>
    %cst_10 = arith.constant dense<0.000000e+00> : vector<8xf32>
    %12 = vector.multi_reduction <add>, %11, %cst_10 [1] : vector<8x512xf32> to vector<8xf32>
    %13 = vector.shape_cast %12 : vector<8xf32> to vector<8x1xf32>
    %cst_11 = arith.constant 1.000000e-24 : f32
    %14 = vector.broadcast %cst_11 : f32 to vector<8x1xf32>
    %15 = arith.maximumf %13, %14 : vector<8x1xf32>
    %16 = math.rsqrt %15 : vector<8x1xf32>
    %17 = vector.broadcast %16 : vector<8x1xf32> to vector<8x512xf32>
    %18 = arith.mulf %10, %17 : vector<8x512xf32>
    %c0_12 = arith.constant 0 : index
    %c0_13 = arith.constant 0 : index
    %19 = vector.load %arg8[%c0_12, %c0_13] : memref<128x512xbf16, #tpu.memory_space<vmem>>, vector<128x512xbf16>
    %20 = arith.extf %19 : vector<128x512xbf16> to vector<128x512xf32>
    %cst_14 = arith.constant dense<0.000000e+00> : vector<8x512xf32>
    %21 = tpu.matmul %1, %20, %cst_14 {dimension_numbers = #tpu.dot_dimension_numbers<[1], [0], [0], [1], [0, 0, 1, 1], [], []>} : vector<8x128xf32>, vector<128x512xf32>, vector<8x512xf32> -> vector<8x512xf32>
    %c0_15 = arith.constant 0 : index
    %c0_16 = arith.constant 0 : index
    %22 = vector.load %arg9[%c0_15, %c0_16] : memref<1x512xf32, #tpu.memory_space<vmem>>, vector<1x512xf32>
    %23 = vector.broadcast %22 : vector<1x512xf32> to vector<8x512xf32>
    %24 = arith.addf %21, %23 : vector<8x512xf32>
    %cst_17 = arith.constant 0.000000e+00 : f32
    %25 = vector.broadcast %cst_17 : f32 to vector<8x512xf32>
    %26 = arith.maximumf %24, %25 : vector<8x512xf32>
    %27 = arith.mulf %26, %26 : vector<8x512xf32>
    %cst_18 = arith.constant dense<0.000000e+00> : vector<8xf32>
    %28 = vector.multi_reduction <add>, %27, %cst_18 [1] : vector<8x512xf32> to vector<8xf32>
    %29 = vector.shape_cast %28 : vector<8xf32> to vector<8x1xf32>
    %cst_19 = arith.constant 1.000000e-24 : f32
    %30 = vector.broadcast %cst_19 : f32 to vector<8x1xf32>
    %31 = arith.maximumf %29, %30 : vector<8x1xf32>
    %32 = math.rsqrt %31 : vector<8x1xf32>
    %33 = vector.broadcast %32 : vector<8x1xf32> to vector<8x512xf32>
    %34 = arith.mulf %26, %33 : vector<8x512xf32>
    %c0_20 = arith.constant 0 : index
    %c0_21 = arith.constant 0 : index
    %35 = vector.load %arg5[%c0_20, %c0_21] : memref<512x512xbf16, #tpu.memory_space<vmem>>, vector<512x512xbf16>
    %36 = arith.extf %35 : vector<512x512xbf16> to vector<512x512xf32>
    %cst_22 = arith.constant dense<0.000000e+00> : vector<8x512xf32>
    %37 = tpu.matmul %18, %36, %cst_22 {dimension_numbers = #tpu.dot_dimension_numbers<[1], [0], [0], [1], [0, 0, 1, 1], [], []>} : vector<8x512xf32>, vector<512x512xf32>, vector<8x512xf32> -> vector<8x512xf32>
    %c0_23 = arith.constant 0 : index
    %c0_24 = arith.constant 0 : index
    %38 = vector.load %arg6[%c0_23, %c0_24] : memref<1x512xf32, #tpu.memory_space<vmem>>, vector<1x512xf32>
    %39 = vector.broadcast %38 : vector<1x512xf32> to vector<8x512xf32>
    %40 = arith.addf %37, %39 : vector<8x512xf32>
    %c0_25 = arith.constant 0 : index
    %c0_26 = arith.constant 0 : index
    %41 = vector.load %arg10[%c0_25, %c0_26] : memref<512x512xbf16, #tpu.memory_space<vmem>>, vector<512x512xbf16>
    %42 = arith.extf %41 : vector<512x512xbf16> to vector<512x512xf32>
    %cst_27 = arith.constant dense<0.000000e+00> : vector<8x512xf32>
    %43 = tpu.matmul %34, %42, %cst_27 {dimension_numbers = #tpu.dot_dimension_numbers<[1], [0], [0], [1], [0, 0, 1, 1], [], []>} : vector<8x512xf32>, vector<512x512xf32>, vector<8x512xf32> -> vector<8x512xf32>
    %c0_28 = arith.constant 0 : index
    %c0_29 = arith.constant 0 : index
    %44 = vector.load %arg11[%c0_28, %c0_29] : memref<1x512xf32, #tpu.memory_space<vmem>>, vector<1x512xf32>
    %45 = vector.broadcast %44 : vector<1x512xf32> to vector<8x512xf32>
    %46 = arith.addf %43, %45 : vector<8x512xf32>
    %47 = arith.addf %18, %34 : vector<8x512xf32>
    %c0_30 = arith.constant 0 : index
    %c0_31 = arith.constant 0 : index
    %48 = vector.load %arg13[%c0_30, %c0_31] : memref<512x512xbf16, #tpu.memory_space<vmem>>, vector<512x512xbf16>
    %49 = arith.extf %48 : vector<512x512xbf16> to vector<512x512xf32>
    %cst_32 = arith.constant dense<0.000000e+00> : vector<8x512xf32>
    %50 = tpu.matmul %47, %49, %cst_32 {dimension_numbers = #tpu.dot_dimension_numbers<[1], [0], [0], [1], [0, 0, 1, 1], [], []>} : vector<8x512xf32>, vector<512x512xf32>, vector<8x512xf32> -> vector<8x512xf32>
    %c0_33 = arith.constant 0 : index
    %c0_34 = arith.constant 0 : index
    %51 = vector.load %arg14[%c0_33, %c0_34] : memref<1x512xf32, #tpu.memory_space<vmem>>, vector<1x512xf32>
    %52 = vector.broadcast %51 : vector<1x512xf32> to vector<8x512xf32>
    %53 = arith.addf %50, %52 : vector<8x512xf32>
    %54 = tpu.concatenate %40, %46, %53 in 1 : vector<8x512xf32>, vector<8x512xf32>, vector<8x512xf32> -> vector<8x1536xf32>
    %cst_35 = arith.constant dense<0.000000e+00> : vector<8x1536xf32>
    %55 = tpu.matmul %2, %54, %cst_35 {dimension_numbers = #tpu.dot_dimension_numbers<[1], [0], [0], [1], [0, 0, 1, 1], [], []>} : vector<8x8xf32>, vector<8x1536xf32>, vector<8x1536xf32> -> vector<8x1536xf32>
    %56 = vector.extract_strided_slice %55 {offsets = [0, 0], sizes = [8, 512], strides = [1, 1]} : vector<8x1536xf32> to vector<8x512xf32>
    %c0_36 = arith.constant 0 : index
    %c0_37 = arith.constant 0 : index
    %57 = vector.load %arg7[%c0_36, %c0_37] : memref<1x512xf32, #tpu.memory_space<vmem>>, vector<1x512xf32>
    %58 = vector.broadcast %57 : vector<1x512xf32> to vector<8x512xf32>
    %59 = arith.addf %56, %58 : vector<8x512xf32>
    %cst_38 = arith.constant 0.000000e+00 : f32
    %60 = vector.broadcast %cst_38 : f32 to vector<8x512xf32>
    %61 = arith.maximumf %59, %60 : vector<8x512xf32>
    %62 = vector.extract_strided_slice %55 {offsets = [0, 512], sizes = [8, 512], strides = [1, 1]} : vector<8x1536xf32> to vector<8x512xf32>
    %c0_39 = arith.constant 0 : index
    %c0_40 = arith.constant 0 : index
    %63 = vector.load %arg12[%c0_39, %c0_40] : memref<1x512xf32, #tpu.memory_space<vmem>>, vector<1x512xf32>
    %64 = vector.broadcast %63 : vector<1x512xf32> to vector<8x512xf32>
    %65 = arith.addf %62, %64 : vector<8x512xf32>
    %cst_41 = arith.constant 0.000000e+00 : f32
    %66 = vector.broadcast %cst_41 : f32 to vector<8x512xf32>
    %67 = arith.maximumf %65, %66 : vector<8x512xf32>
    %68 = vector.extract_strided_slice %55 {offsets = [0, 1024], sizes = [8, 512], strides = [1, 1]} : vector<8x1536xf32> to vector<8x512xf32>
    %69 = arith.addf %68, %53 : vector<8x512xf32>
    %c0_42 = arith.constant 0 : index
    %c0_43 = arith.constant 0 : index
    %70 = vector.load %arg15[%c0_42, %c0_43] : memref<1x512xf32, #tpu.memory_space<vmem>>, vector<1x512xf32>
    %71 = vector.broadcast %70 : vector<1x512xf32> to vector<8x512xf32>
    %72 = arith.addf %69, %71 : vector<8x512xf32>
    %cst_44 = arith.constant 0.000000e+00 : f32
    %73 = vector.broadcast %cst_44 : f32 to vector<8x512xf32>
    %74 = arith.maximumf %72, %73 : vector<8x512xf32>
    %c0_45 = arith.constant 0 : index
    %c0_46 = arith.constant 0 : index
    %75 = vector.load %arg16[%c0_45, %c0_46] : memref<512x96xbf16, #tpu.memory_space<vmem>>, vector<512x96xbf16>
    %76 = arith.extf %75 : vector<512x96xbf16> to vector<512x96xf32>
    %cst_47 = arith.constant dense<0.000000e+00> : vector<8x96xf32>
    %77 = tpu.matmul %74, %76, %cst_47 {dimension_numbers = #tpu.dot_dimension_numbers<[1], [0], [0], [1], [0, 0, 1, 1], [], []>} : vector<8x512xf32>, vector<512x96xf32>, vector<8x96xf32> -> vector<8x96xf32>
    %c0_48 = arith.constant 0 : index
    %c0_49 = arith.constant 0 : index
    %78 = vector.load %arg17[%c0_48, %c0_49] : memref<1x96xf32, #tpu.memory_space<vmem>>, vector<1x96xf32>
    %79 = vector.broadcast %78 : vector<1x96xf32> to vector<8x96xf32>
    %80 = arith.addf %77, %79 : vector<8x96xf32>
    %81 = vector.extract_strided_slice %80 {offsets = [0, 0], sizes = [8, 32], strides = [1, 1]} : vector<8x96xf32> to vector<8x32xf32>
    %82 = vector.extract_strided_slice %80 {offsets = [0, 32], sizes = [8, 32], strides = [1, 1]} : vector<8x96xf32> to vector<8x32xf32>
    %c0_50 = arith.constant 0 : index
    %c0_51 = arith.constant 0 : index
    %83 = vector.load %arg18[%c0_50, %c0_51] : memref<512x32xbf16, #tpu.memory_space<vmem>>, vector<512x32xbf16>
    %84 = arith.extf %83 : vector<512x32xbf16> to vector<512x32xf32>
    %cst_52 = arith.constant dense<0.000000e+00> : vector<8x32xf32>
    %85 = tpu.matmul %61, %84, %cst_52 {dimension_numbers = #tpu.dot_dimension_numbers<[1], [0], [0], [1], [0, 0, 1, 1], [], []>} : vector<8x512xf32>, vector<512x32xf32>, vector<8x32xf32> -> vector<8x32xf32>
    %86 = arith.addf %82, %85 : vector<8x32xf32>
    %87 = vector.extract_strided_slice %80 {offsets = [0, 64], sizes = [8, 32], strides = [1, 1]} : vector<8x96xf32> to vector<8x32xf32>
    %c0_53 = arith.constant 0 : index
    %c0_54 = arith.constant 0 : index
    %88 = vector.load %arg19[%c0_53, %c0_54] : memref<512x32xbf16, #tpu.memory_space<vmem>>, vector<512x32xbf16>
    %89 = arith.extf %88 : vector<512x32xbf16> to vector<512x32xf32>
    %cst_55 = arith.constant dense<0.000000e+00> : vector<8x32xf32>
    %90 = tpu.matmul %67, %89, %cst_55 {dimension_numbers = #tpu.dot_dimension_numbers<[1], [0], [0], [1], [0, 0, 1, 1], [], []>} : vector<8x512xf32>, vector<512x32xf32>, vector<8x32xf32> -> vector<8x32xf32>
    %91 = arith.addf %87, %90 : vector<8x32xf32>
    %92 = tpu.concatenate %86, %81, %91 in 1 : vector<8x32xf32>, vector<8x32xf32>, vector<8x32xf32> -> vector<8x96xf32>
    %c0_56 = arith.constant 0 : index
    %c0_57 = arith.constant 0 : index
    %93 = vector.load %arg20[%c0_56, %c0_57] : memref<96x32xbf16, #tpu.memory_space<vmem>>, vector<96x32xbf16>
    %94 = arith.extf %93 : vector<96x32xbf16> to vector<96x32xf32>
    %cst_58 = arith.constant dense<0.000000e+00> : vector<8x32xf32>
    %95 = tpu.matmul %92, %94, %cst_58 {dimension_numbers = #tpu.dot_dimension_numbers<[1], [0], [0], [1], [0, 0, 1, 1], [], []>} : vector<8x96xf32>, vector<96x32xf32>, vector<8x32xf32> -> vector<8x32xf32>
    %c0_59 = arith.constant 0 : index
    %c0_60 = arith.constant 0 : index
    %96 = vector.load %arg21[%c0_59, %c0_60] : memref<1x32xf32, #tpu.memory_space<vmem>>, vector<1x32xf32>
    %97 = vector.broadcast %96 : vector<1x32xf32> to vector<8x32xf32>
    %98 = arith.addf %95, %97 : vector<8x32xf32>
    %99 = math.tanh %98 : vector<8x32xf32>
    %cst_61 = arith.constant 0.000000e+00 : f32
    %100 = vector.broadcast %cst_61 : f32 to vector<8x32xf32>
    %101 = arith.cmpf ogt, %99, %100 : vector<8x32xf32>
    %cst_62 = arith.constant 0.000000e+00 : f32
    %102 = vector.broadcast %cst_62 : f32 to vector<8x32xf32>
    %103 = arith.cmpf olt, %99, %102 : vector<8x32xf32>
    %cst_63 = arith.constant -1.000000e+00 : f32
    %cst_64 = arith.constant 0.000000e+00 : f32
    %104 = vector.broadcast %cst_63 : f32 to vector<8x32xf32>
    %105 = vector.broadcast %cst_64 : f32 to vector<8x32xf32>
    %106 = arith.select %103, %104, %105 : vector<8x32xi1>, vector<8x32xf32>
    %cst_65 = arith.constant 1.000000e+00 : f32
    %107 = vector.broadcast %cst_65 : f32 to vector<8x32xf32>
    %108 = arith.select %101, %107, %106 : vector<8x32xi1>, vector<8x32xf32>
    %109 = math.tanh %86 : vector<8x32xf32>
    %110 = arith.addf %99, %109 : vector<8x32xf32>
    %111 = math.tanh %91 : vector<8x32xf32>
    %112 = arith.addf %99, %111 : vector<8x32xf32>
    %c0_66 = arith.constant 0 : index
    %c0_67 = arith.constant 0 : index
    %113 = vector.load %arg22[%c0_66, %c0_67] : memref<32x512xbf16, #tpu.memory_space<vmem>>, vector<32x512xbf16>
    %114 = arith.extf %113 : vector<32x512xbf16> to vector<32x512xf32>
    %cst_68 = arith.constant dense<0.000000e+00> : vector<8x512xf32>
    %115 = tpu.matmul %110, %114, %cst_68 {dimension_numbers = #tpu.dot_dimension_numbers<[1], [0], [0], [1], [0, 0, 1, 1], [], []>} : vector<8x32xf32>, vector<32x512xf32>, vector<8x512xf32> -> vector<8x512xf32>
    %c0_69 = arith.constant 0 : index
    %c0_70 = arith.constant 0 : index
    %116 = vector.load %arg23[%c0_69, %c0_70] : memref<1x512xf32, #tpu.memory_space<vmem>>, vector<1x512xf32>
    %117 = vector.broadcast %116 : vector<1x512xf32> to vector<8x512xf32>
    %118 = arith.addf %115, %117 : vector<8x512xf32>
    %cst_71 = arith.constant 0.000000e+00 : f32
    %119 = vector.broadcast %cst_71 : f32 to vector<8x512xf32>
    %120 = arith.maximumf %118, %119 : vector<8x512xf32>
    %c0_72 = arith.constant 0 : index
    %c0_73 = arith.constant 0 : index
    %121 = vector.load %arg24[%c0_72, %c0_73] : memref<512x256xbf16, #tpu.memory_space<vmem>>, vector<512x256xbf16>
    %122 = arith.extf %121 : vector<512x256xbf16> to vector<512x256xf32>
    %cst_74 = arith.constant dense<0.000000e+00> : vector<8x256xf32>
    %123 = tpu.matmul %120, %122, %cst_74 {dimension_numbers = #tpu.dot_dimension_numbers<[1], [0], [0], [1], [0, 0, 1, 1], [], []>} : vector<8x512xf32>, vector<512x256xf32>, vector<8x256xf32> -> vector<8x256xf32>
    %c0_75 = arith.constant 0 : index
    %c0_76 = arith.constant 0 : index
    %124 = vector.load %arg25[%c0_75, %c0_76] : memref<1x256xf32, #tpu.memory_space<vmem>>, vector<1x256xf32>
    %125 = vector.broadcast %124 : vector<1x256xf32> to vector<8x256xf32>
    %126 = arith.addf %123, %125 : vector<8x256xf32>
    %c0_77 = arith.constant 0 : index
    %c0_78 = arith.constant 0 : index
    %127 = vector.load %arg31[%c0_77, %c0_78] : memref<8x256xf32, #tpu.memory_space<vmem>>, vector<8x256xf32>
    tpu.vector_store %arg31[%c0_77, %c0_78], %126 {strides = array<i32>} : memref<8x256xf32, #tpu.memory_space<vmem>>, vector<8x256xf32>,
    %c0_79 = arith.constant 0 : index
    %c0_80 = arith.constant 0 : index
    %128 = vector.load %arg26[%c0_79, %c0_80] : memref<32x512xbf16, #tpu.memory_space<vmem>>, vector<32x512xbf16>
    %129 = arith.extf %128 : vector<32x512xbf16> to vector<32x512xf32>
    %cst_81 = arith.constant dense<0.000000e+00> : vector<8x512xf32>
    %130 = tpu.matmul %112, %129, %cst_81 {dimension_numbers = #tpu.dot_dimension_numbers<[1], [0], [0], [1], [0, 0, 1, 1], [], []>} : vector<8x32xf32>, vector<32x512xf32>, vector<8x512xf32> -> vector<8x512xf32>
    %c0_82 = arith.constant 0 : index
    %c0_83 = arith.constant 0 : index
    %131 = vector.load %arg27[%c0_82, %c0_83] : memref<1x512xf32, #tpu.memory_space<vmem>>, vector<1x512xf32>
    %132 = vector.broadcast %131 : vector<1x512xf32> to vector<8x512xf32>
    %133 = arith.addf %130, %132 : vector<8x512xf32>
    %cst_84 = arith.constant 0.000000e+00 : f32
    %134 = vector.broadcast %cst_84 : f32 to vector<8x512xf32>
    %135 = arith.maximumf %133, %134 : vector<8x512xf32>
    %c0_85 = arith.constant 0 : index
    %c0_86 = arith.constant 0 : index
    %136 = vector.load %arg28[%c0_85, %c0_86] : memref<512x128xbf16, #tpu.memory_space<vmem>>, vector<512x128xbf16>
    %137 = arith.extf %136 : vector<512x128xbf16> to vector<512x128xf32>
    %cst_87 = arith.constant dense<0.000000e+00> : vector<8x128xf32>
    %138 = tpu.matmul %135, %137, %cst_87 {dimension_numbers = #tpu.dot_dimension_numbers<[1], [0], [0], [1], [0, 0, 1, 1], [], []>} : vector<8x512xf32>, vector<512x128xf32>, vector<8x128xf32> -> vector<8x128xf32>
    %c0_88 = arith.constant 0 : index
    %c0_89 = arith.constant 0 : index
    %139 = vector.load %arg29[%c0_88, %c0_89] : memref<1x128xf32, #tpu.memory_space<vmem>>, vector<1x128xf32>
    %140 = vector.broadcast %139 : vector<1x128xf32> to vector<8x128xf32>
    %141 = arith.addf %138, %140 : vector<8x128xf32>
    %c0_90 = arith.constant 0 : index
    %c0_91 = arith.constant 0 : index
    %142 = vector.load %arg32[%c0_90, %c0_91] : memref<8x128xf32, #tpu.memory_space<vmem>>, vector<8x128xf32>
    tpu.vector_store %arg32[%c0_90, %c0_91], %141 {strides = array<i32>} : memref<8x128xf32, #tpu.memory_space<vmem>>, vector<8x128xf32>,
    %143 = tpu.concatenate %86, %91, %99, %108 in 1 : vector<8x32xf32>, vector<8x32xf32>, vector<8x32xf32>, vector<8x32xf32> -> vector<8x128xf32>
    %c0_92 = arith.constant 0 : index
    %c0_93 = arith.constant 0 : index
    %144 = vector.load %arg30[%c0_92, %c0_93] : memref<8x128xf32, #tpu.memory_space<vmem>>, vector<8x128xf32>
    tpu.vector_store %arg30[%c0_92, %c0_93], %143 {strides = array<i32>} : memref<8x128xf32, #tpu.memory_space<vmem>>, vector<8x128xf32>,
    return
  }
}

</mosaic_0001>

<llo_original>
// kernel: cirh_forward.1
$region0: #{cirh_forward.1}
  #allocation0 [shape = 'u32[]', space=smem, size = 0x4, offset = 0x4, fixed_abs, tag = 'smem constant byte address 0x4 - core index']
  #allocation1 [shape = 'u32[72,128]{1,0:T(1,128)}', space=vmem, size = 0x9000, scoped, tag = 'internal scratch']
  %s0 = inlined_call_operand.smem [shape: u32[33], index: -1, kind: input, shape index: {}]
  %s1 = sld [smem:[%s0]]
  %s2 = scalar_lea.smem %s0, 1
  %s3 = sld [smem:[%s2]]
  %s4 = scalar_lea.smem %s0, 2
  %s5 = sld [smem:[%s4]]
  %s6 = scalar_lea.smem %s0, 3
  %s7 = sld [smem:[%s6]]
  %s8 = scalar_lea.smem %s0, 4
  %s9 = sld [smem:[%s8]]
  %s10 = scalar_lea.smem %s0, 5
  %s11 = sld [smem:[%s10]]
  %s12 = scalar_lea.smem %s0, 6
  %s13 = sld [smem:[%s12]]
  %s14 = scalar_lea.smem %s0, 7
  %s15 = sld [smem:[%s14]]
  %s16 = scalar_lea.smem %s0, 8
  %s17 = sld [smem:[%s16]]
  %s18 = scalar_lea.smem %s0, 9
  %s19 = sld [smem:[%s18]]
  %s20 = scalar_lea.smem %s0, 10
  %s21 = sld [smem:[%s20]]
  %s22 = scalar_lea.smem %s0, 11
  %s23 = sld [smem:[%s22]]
  %s24 = scalar_lea.smem %s0, 12
  %s25 = sld [smem:[%s24]]
  %s26 = scalar_lea.smem %s0, 13
  %s27 = sld [smem:[%s26]]
  %s28 = scalar_lea.smem %s0, 14
  %s29 = sld [smem:[%s28]]
  %s30 = scalar_lea.smem %s0, 15
  %s31 = sld [smem:[%s30]]
  %s32 = scalar_lea.smem %s0, 16
  %s33 = sld [smem:[%s32]]
  %s34 = scalar_lea.smem %s0, 17
  %s35 = sld [smem:[%s34]]
  %s36 = scalar_lea.smem %s0, 18
  %s37 = sld [smem:[%s36]]
  %s38 = scalar_lea.smem %s0, 19
  %s39 = sld [smem:[%s38]]
  %s40 = scalar_lea.smem %s0, 20
  %s41 = sld [smem:[%s40]]
  %s42 = scalar_lea.smem %s0, 21
  %s43 = sld [smem:[%s42]]
  %s44 = scalar_lea.smem %s0, 22
  %s45 = sld [smem:[%s44]]
  %s46 = scalar_lea.smem %s0, 23
  %s47 = sld [smem:[%s46]]
  %s48 = scalar_lea.smem %s0, 24
  %s49 = sld [smem:[%s48]]
  %s50 = scalar_lea.smem %s0, 25
  %s51 = sld [smem:[%s50]]
  %s52 = scalar_lea.smem %s0, 26
  %s53 = sld [smem:[%s52]]
  %s54 = scalar_lea.smem %s0, 27
  %s55 = sld [smem:[%s54]]
  %s56 = scalar_lea.smem %s0, 28
  %s57 = sld [smem:[%s56]]
  %s58 = scalar_lea.smem %s0, 29
  %s59 = sld [smem:[%s58]]
  %s60 = scalar_lea.smem %s0, 30
  %s61 = sld [smem:[%s60]]
  %s62 = scalar_lea.smem %s0, 31
  %s63 = sld [smem:[%s62]]
  %s64 = scalar_lea.smem %s0, 32
  %s65 = sld [smem:[%s64]]
  %66 = xla_tuple %s61, %s63, %s65
  %s67 = sld [smem:[#allocation0]]
  $region234: #{cirh_forward.1} parent=0
    _
  %s69 = ssub.s32 1, %s67
  %s70 = scalar_select 0, %s69, %s67
  $region1: #{cirh_forward.1} parent=0
    #allocation2 [shape = 'u8[8192]{0}', space=vmem, size = 0x2000, scoped, tag = 'input window, operand 0, single buffered']
    #allocation3 [shape = 's32[1]{0}', space=sflag, size = 0x4, scoped, tag = 'scoped memory for cirh_forward.1']
    #allocation4 [shape = 's32[1]{0}', space=sflag, size = 0x4, scoped, tag = 'scoped memory for cirh_forward.1']
    #allocation5 [shape = 'u8[4096]{0}', space=vmem, size = 0x1000, scoped, tag = 'input window, operand 2, single buffered']
    #allocation6 [shape = 's32[1]{0}', space=sflag, size = 0x4, scoped, tag = 'scoped memory for cirh_forward.1']
    #allocation7 [shape = 'u8[262144]{0}', space=vmem, size = 0x40000, scoped, tag = 'input window, operand 3, single buffered']
    #allocation8 [shape = 'u8[2048]{0}', space=vmem, size = 0x800, scoped, tag = 'input window, operand 4, single buffered']
    #allocation9 [shape = 's32[1]{0}', space=sflag, size = 0x4, scoped, tag = 'scoped memory for cirh_forward.1']
    #allocation10 [shape = 'u8[2048]{0}', space=vmem, size = 0x800, scoped, tag = 'input window, operand 6, single buffered']
    #allocation11 [shape = 'u8[2048]{0}', space=vmem, size = 0x800, scoped, tag = 'input window, operand 7, single buffered']
    #allocation12 [shape = 's32[1]{0}', space=sflag, size = 0x4, scoped, tag = 'scoped memory for cirh_forward.1']
    #allocation13 [shape = 'u8[131072]{0}', space=vmem, size = 0x20000, scoped, tag = 'input window, operand 8, single buffered']
    #allocation14 [shape = 'u8[2048]{0}', space=vmem, size = 0x800, scoped, tag = 'input window, operand 9, single buffered']
    #allocation15 [shape = 's32[1]{0}', space=sflag, size = 0x4, scoped, tag = 'scoped memory for cirh_forward.1']
    #allocation16 [shape = 'u8[524288]{0}', space=vmem, size = 0x80000, scoped, tag = 'input window, operand 10, single buffered']
    #allocation17 [shape = 'u8[2048]{0}', space=vmem, size = 0x800, scoped, tag = 'input window, operand 11, single buffered']
    #allocation18 [shape = 's32[1]{0}', space=sflag, size = 0x4, scoped, tag = 'scoped memory for cirh_forward.1']
    #allocation19 [shape = 'u8[2048]{0}', space=vmem, size = 0x800, scoped, tag = 'input window, operand 12, single buffered']
    #allocation20 [shape = 'u8[524288]{0}', space=vmem, size = 0x80000, scoped, tag = 'input window, operand 13, single buffered']
    #allocation21 [shape = 's32[1]{0}', space=sflag, size = 0x4, scoped, tag = 'scoped memory for cirh_forward.1']
    #allocation22 [shape = 'u8[2048]{0}', space=vmem, size = 0x800, scoped, tag = 'input window, operand 14, single buffered']
    #allocation23 [shape = 'u8[2048]{0}', space=vmem, size = 0x800, scoped, tag = 'input window, operand 15, single buffered']
    #allocation24 [shape = 's32[1]{0}', space=sflag, size = 0x4, scoped, tag = 'scoped memory for cirh_forward.1']
    #allocation25 [shape = 'u8[512]{0}', space=vmem, size = 0x400, scoped, tag = 'input window, operand 17, single buffered']
    #allocation26 [shape = 'u8[512]{0}', space=vmem, size = 0x400, scoped, tag = 'input window, operand 21, single buffered']
    #allocation27 [shape = 's32[1]{0}', space=sflag, size = 0x4, scoped, tag = 'scoped memory for cirh_forward.1']
    #allocation28 [shape = 'u8[2048]{0}', space=vmem, size = 0x800, scoped, tag = 'input window, operand 23, single buffered']
    #allocation29 [shape = 'u8[262144]{0}', space=vmem, size = 0x40000, scoped, tag = 'input window, operand 24, single buffered']
    #allocation30 [shape = 's32[1]{0}', space=sflag, size = 0x4, scoped, tag = 'scoped memory for cirh_forward.1']
    #allocation31 [shape = 'u8[1024]{0}', space=vmem, size = 0x400, scoped, tag = 'input window, operand 25, single buffered']
    #allocation32 [shape = 'u8[2048]{0}', space=vmem, size = 0x800, scoped, tag = 'input window, operand 27, single buffered']
    #allocation33 [shape = 's32[1]{0}', space=sflag, size = 0x4, scoped, tag = 'scoped memory for cirh_forward.1']
    #allocation34 [shape = 'u8[131072]{0}', space=vmem, size = 0x20000, scoped, tag = 'input window, operand 28, single buffered']
    #allocation35 [shape = 'u8[512]{0}', space=vmem, size = 0x400, scoped, tag = 'input window, operand 29, single buffered']
    #allocation36 [shape = 's32[1]{0}', space=sflag, size = 0x4, scoped, tag = 'scoped memory for cirh_forward.1']
    #allocation37 [shape = 'u8[8192]{0}', space=vmem, size = 0x2000, scoped, tag = 'output window, operand 1, single buffered']
    #allocation38 [shape = 'u8[4096]{0}', space=vmem, size = 0x1000, scoped, tag = 'output window, operand 2, single buffered']
    #allocation39 [shape = 's32[1]{0}', space=sflag, size = 0x4, scoped, tag = 'scoped memory for cirh_forward.1']
    %71 = vsyncpa [#allocation3], 0
    %72 = vsyncpa [#allocation6], 0
    %73 = vsyncpa [#allocation9], 0
    %74 = vsyncpa [#allocation12], 0
    %75 = vsyncpa [#allocation15], 0
    %76 = vsyncpa [#allocation18], 0
    %77 = vsyncpa [#allocation21], 0
    %78 = vsyncpa [#allocation24], 0
    %79 = vsyncpa [#allocation27], 0
    %80 = vsyncpa [#allocation30], 0
    %81 = vsyncpa [#allocation33], 0
    %82 = vsyncpa [#allocation36], 0
    %83 = vsyncpa [#allocation4], 0
    %84 = vsyncpa [#allocation39], 0
    // Predicated region
    $region2: #{cirh_forward.1} parent=1 // pred_check
      _
    $region3: #{cirh_forward.1} parent=1 // pred_check_branch
      %86 = sbr.rel (0) target = $region5
    $region4: #{cirh_forward.1} parent=1 // pred_region
      %88 = vsyncadd [#allocation3], 0
      %s90 = sshll.u32 %s1, 4
      %s91 = int_to_ptr.hbm [resolvable:$true] %s90
      %s92 = sshll.u32 [#allocation2], 4
      %s93 = int_to_ptr.vmem [resolvable:$true] %s92
      %95 = dma.hbm_to_vmem [thread:$0]  %s91, 256, %s93, [#allocation3]
    $region5: #{cirh_forward.1} parent=1 // pred_fallthru
      _
    // Predicated region
    $region6: #{cirh_forward.1} parent=1 // pred_check
      _
    $region7: #{cirh_forward.1} parent=1 // pred_check_branch
      %97 = sbr.rel (0) target = $region9
    $region8: #{cirh_forward.1} parent=1 // pred_region
      _
    $region9: #{cirh_forward.1} parent=1 // pred_fallthru
      _
    // Predicated region
    $region10: #{cirh_forward.1} parent=1 // pred_check
      _
    $region11: #{cirh_forward.1} parent=1 // pred_check_branch
      %99 = sbr.rel (0) target = $region13
    $region12: #{cirh_forward.1} parent=1 // pred_region
      %101 = vsyncadd [#allocation6], 0
      %s103 = sshll.u32 %s5, 4
      %s104 = int_to_ptr.hbm [resolvable:$true] %s103
      %s105 = sshll.u32 [#allocation5], 4
      %s106 = int_to_ptr.vmem [resolvable:$true] %s105
      %108 = dma.hbm_to_vmem [thread:$0]  %s104, 128, %s106, [#allocation6]
    $region13: #{cirh_forward.1} parent=1 // pred_fallthru
      _
    // Predicated region
    $region14: #{cirh_forward.1} parent=1 // pred_check
      _
    $region15: #{cirh_forward.1} parent=1 // pred_check_branch
      %110 = sbr.rel (0) target = $region17
    $region16: #{cirh_forward.1} parent=1 // pred_region
      %112 = vsyncadd [#allocation6], 0
      %s113 = sshll.u32 %s7, 4
      %s114 = int_to_ptr.hbm [resolvable:$true] %s113
      %s115 = sshll.u32 [#allocation7], 4
      %s116 = int_to_ptr.vmem [resolvable:$true] %s115
      %121 = dma.hbm_to_vmem [thread:$0]  %s114, 8192, %s116, [#allocation6], 256, 256, 16
    $region17: #{cirh_forward.1} parent=1 // pred_fallthru
      _
    // Predicated region
    $region18: #{cirh_forward.1} parent=1 // pred_check
      _
    $region19: #{cirh_forward.1} parent=1 // pred_check_branch
      %123 = sbr.rel (0) target = $region21
    $region20: #{cirh_forward.1} parent=1 // pred_region
      %125 = vsyncadd [#allocation9], 0
      %s127 = sshll.u32 %s9, 4
      %s128 = int_to_ptr.hbm [resolvable:$true] %s127
      %s129 = sshll.u32 [#allocation8], 4
      %s130 = int_to_ptr.vmem [resolvable:$true] %s129
      %132 = dma.hbm_to_vmem [thread:$0]  %s128, 64, %s130, [#allocation9]
    $region21: #{cirh_forward.1} parent=1 // pred_fallthru
      _
    // Predicated region
    $region22: #{cirh_forward.1} parent=1 // pred_check
      _
    $region23: #{cirh_forward.1} parent=1 // pred_check_branch
      %134 = sbr.rel (0) target = $region25
    $region24: #{cirh_forward.1} parent=1 // pred_region
      _
    $region25: #{cirh_forward.1} parent=1 // pred_fallthru
      _
    // Predicated region
    $region26: #{cirh_forward.1} parent=1 // pred_check
      _
    $region27: #{cirh_forward.1} parent=1 // pred_check_branch
      %136 = sbr.rel (0) target = $region29
    $region28: #{cirh_forward.1} parent=1 // pred_region
      %138 = vsyncadd [#allocation9], 0
      %s140 = sshll.u32 %s13, 4
      %s141 = int_to_ptr.hbm [resolvable:$true] %s140
      %s142 = sshll.u32 [#allocation10], 4
      %s143 = int_to_ptr.vmem [resolvable:$true] %s142
      %145 = dma.hbm_to_vmem [thread:$0]  %s141, 64, %s143, [#allocation9]
    $region29: #{cirh_forward.1} parent=1 // pred_fallthru
      _
    // Predicated region
    $region30: #{cirh_forward.1} parent=1 // pred_check
      _
    $region31: #{cirh_forward.1} parent=1 // pred_check_branch
      %147 = sbr.rel (0) target = $region33
    $region32: #{cirh_forward.1} parent=1 // pred_region
      %149 = vsyncadd [#allocation12], 0
      %s151 = sshll.u32 %s15, 4
      %s152 = int_to_ptr.hbm [resolvable:$true] %s151
      %s153 = sshll.u32 [#allocation11], 4
      %s154 = int_to_ptr.vmem [resolvable:$true] %s153
      %156 = dma.hbm_to_vmem [thread:$0]  %s152, 64, %s154, [#allocation12]
    $region33: #{cirh_forward.1} parent=1 // pred_fallthru
      _
    // Predicated region
    $region34: #{cirh_forward.1} parent=1 // pred_check
      _
    $region35: #{cirh_forward.1} parent=1 // pred_check_branch
      %158 = sbr.rel (0) target = $region37
    $region36: #{cirh_forward.1} parent=1 // pred_region
      %160 = vsyncadd [#allocation12], 0
      %s161 = sshll.u32 %s17, 4
      %s162 = int_to_ptr.hbm [resolvable:$true] %s161
      %s163 = sshll.u32 [#allocation13], 4
      %s164 = int_to_ptr.vmem [resolvable:$true] %s163
      %169 = dma.hbm_to_vmem [thread:$0]  %s162, 4096, %s164, [#allocation12], 256, 256, 16
    $region37: #{cirh_forward.1} parent=1 // pred_fallthru
      _
    // Predicated region
    $region38: #{cirh_forward.1} parent=1 // pred_check
      _
    $region39: #{cirh_forward.1} parent=1 // pred_check_branch
      %171 = sbr.rel (0) target = $region41
    $region40: #{cirh_forward.1} parent=1 // pred_region
      %173 = vsyncadd [#allocation15], 0
      %s175 = sshll.u32 %s19, 4
      %s176 = int_to_ptr.hbm [resolvable:$true] %s175
      %s177 = sshll.u32 [#allocation14], 4
      %s178 = int_to_ptr.vmem [resolvable:$true] %s177
      %180 = dma.hbm_to_vmem [thread:$0]  %s176, 64, %s178, [#allocation15]
    $region41: #{cirh_forward.1} parent=1 // pred_fallthru
      _
    // Predicated region
    $region42: #{cirh_forward.1} parent=1 // pred_check
      _
    $region43: #{cirh_forward.1} parent=1 // pred_check_branch
      %182 = sbr.rel (0) target = $region45
    $region44: #{cirh_forward.1} parent=1 // pred_region
      %184 = vsyncadd [#allocation15], 0
      %s185 = sshll.u32 %s21, 4
      %s186 = int_to_ptr.hbm [resolvable:$true] %s185
      %s187 = sshll.u32 [#allocation16], 4
      %s188 = int_to_ptr.vmem [resolvable:$true] %s187
      %193 = dma.hbm_to_vmem [thread:$0]  %s186, 16384, %s188, [#allocation15], 256, 256, 16
    $region45: #{cirh_forward.1} parent=1 // pred_fallthru
      _
    // Predicated region
    $region46: #{cirh_forward.1} parent=1 // pred_check
      _
    $region47: #{cirh_forward.1} parent=1 // pred_check_branch
      %195 = sbr.rel (0) target = $region49
    $region48: #{cirh_forward.1} parent=1 // pred_region
      %197 = vsyncadd [#allocation18], 0
      %s199 = sshll.u32 %s23, 4
      %s200 = int_to_ptr.hbm [resolvable:$true] %s199
      %s201 = sshll.u32 [#allocation17], 4
      %s202 = int_to_ptr.vmem [resolvable:$true] %s201
      %204 = dma.hbm_to_vmem [thread:$0]  %s200, 64, %s202, [#allocation18]
    $region49: #{cirh_forward.1} parent=1 // pred_fallthru
      _
    // Predicated region
    $region50: #{cirh_forward.1} parent=1 // pred_check
      _
    $region51: #{cirh_forward.1} parent=1 // pred_check_branch
      %206 = sbr.rel (0) target = $region53
    $region52: #{cirh_forward.1} parent=1 // pred_region
      %208 = vsyncadd [#allocation18], 0
      %s210 = sshll.u32 %s25, 4
      %s211 = int_to_ptr.hbm [resolvable:$true] %s210
      %s212 = sshll.u32 [#allocation19], 4
      %s213 = int_to_ptr.vmem [resolvable:$true] %s212
      %215 = dma.hbm_to_vmem [thread:$0]  %s211, 64, %s213, [#allocation18]
    $region53: #{cirh_forward.1} parent=1 // pred_fallthru
      _
    // Predicated region
    $region54: #{cirh_forward.1} parent=1 // pred_check
      _
    $region55: #{cirh_forward.1} parent=1 // pred_check_branch
      %217 = sbr.rel (0) target = $region57
    $region56: #{cirh_forward.1} parent=1 // pred_region
      %219 = vsyncadd [#allocation21], 0
      %s220 = sshll.u32 %s27, 4
      %s221 = int_to_ptr.hbm [resolvable:$true] %s220
      %s222 = sshll.u32 [#allocation20], 4
      %s223 = int_to_ptr.vmem [resolvable:$true] %s222
      %228 = dma.hbm_to_vmem [thread:$0]  %s221, 16384, %s223, [#allocation21], 256, 256, 16
    $region57: #{cirh_forward.1} parent=1 // pred_fallthru
      _
    // Predicated region
    $region58: #{cirh_forward.1} parent=1 // pred_check
      _
    $region59: #{cirh_forward.1} parent=1 // pred_check_branch
      %230 = sbr.rel (0) target = $region61
    $region60: #{cirh_forward.1} parent=1 // pred_region
      %232 = vsyncadd [#allocation21], 0
      %s234 = sshll.u32 %s29, 4
      %s235 = int_to_ptr.hbm [resolvable:$true] %s234
      %s236 = sshll.u32 [#allocation22], 4
      %s237 = int_to_ptr.vmem [resolvable:$true] %s236
      %239 = dma.hbm_to_vmem [thread:$0]  %s235, 64, %s237, [#allocation21]
    $region61: #{cirh_forward.1} parent=1 // pred_fallthru
      _
    // Predicated region
    $region62: #{cirh_forward.1} parent=1 // pred_check
      _
    $region63: #{cirh_forward.1} parent=1 // pred_check_branch
      %241 = sbr.rel (0) target = $region65
    $region64: #{cirh_forward.1} parent=1 // pred_region
      %243 = vsyncadd [#allocation24], 0
      %s245 = sshll.u32 %s31, 4
      %s246 = int_to_ptr.hbm [resolvable:$true] %s245
      %s247 = sshll.u32 [#allocation23], 4
      %s248 = int_to_ptr.vmem [resolvable:$true] %s247
      %250 = dma.hbm_to_vmem [thread:$0]  %s246, 64, %s248, [#allocation24]
    $region65: #{cirh_forward.1} parent=1 // pred_fallthru
      _
    // Predicated region
    $region66: #{cirh_forward.1} parent=1 // pred_check
      _
    $region67: #{cirh_forward.1} parent=1 // pred_check_branch
      %252 = sbr.rel (0) target = $region69
    $region68: #{cirh_forward.1} parent=1 // pred_region
      _
    $region69: #{cirh_forward.1} parent=1 // pred_fallthru
      _
    // Predicated region
    $region70: #{cirh_forward.1} parent=1 // pred_check
      _
    $region71: #{cirh_forward.1} parent=1 // pred_check_branch
      %254 = sbr.rel (0) target = $region73
    $region72: #{cirh_forward.1} parent=1 // pred_region
      %256 = vsyncadd [#allocation24], 0
      %s258 = sshll.u32 %s35, 4
      %s259 = int_to_ptr.hbm [resolvable:$true] %s258
      %s260 = sshll.u32 [#allocation25], 4
      %s261 = int_to_ptr.vmem [resolvable:$true] %s260
      %263 = dma.hbm_to_vmem [thread:$0]  %s259, 16, %s261, [#allocation24]
    $region73: #{cirh_forward.1} parent=1 // pred_fallthru
      _
    // Predicated region
    $region74: #{cirh_forward.1} parent=1 // pred_check
      _
    $region75: #{cirh_forward.1} parent=1 // pred_check_branch
      %265 = sbr.rel (0) target = $region77
    $region76: #{cirh_forward.1} parent=1 // pred_region
      _
    $region77: #{cirh_forward.1} parent=1 // pred_fallthru
      _
    // Predicated region
    $region78: #{cirh_forward.1} parent=1 // pred_check
      _
    $region79: #{cirh_forward.1} parent=1 // pred_check_branch
      %267 = sbr.rel (0) target = $region81
    $region80: #{cirh_forward.1} parent=1 // pred_region
      _
    $region81: #{cirh_forward.1} parent=1 // pred_fallthru
      _
    // Predicated region
    $region82: #{cirh_forward.1} parent=1 // pred_check
      _
    $region83: #{cirh_forward.1} parent=1 // pred_check_branch
      %269 = sbr.rel (0) target = $region85
    $region84: #{cirh_forward.1} parent=1 // pred_region
      _
    $region85: #{cirh_forward.1} parent=1 // pred_fallthru
      _
    // Predicated region
    $region86: #{cirh_forward.1} parent=1 // pred_check
      _
    $region87: #{cirh_forward.1} parent=1 // pred_check_branch
      %271 = sbr.rel (0) target = $region89
    $region88: #{cirh_forward.1} parent=1 // pred_region
      %273 = vsyncadd [#allocation27], 0
      %s275 = sshll.u32 %s43, 4
      %s276 = int_to_ptr.hbm [resolvable:$true] %s275
      %s277 = sshll.u32 [#allocation26], 4
      %s278 = int_to_ptr.vmem [resolvable:$true] %s277
      %280 = dma.hbm_to_vmem [thread:$0]  %s276, 16, %s278, [#allocation27]
    $region89: #{cirh_forward.1} parent=1 // pred_fallthru
      _
    // Predicated region
    $region90: #{cirh_forward.1} parent=1 // pred_check
      _
    $region91: #{cirh_forward.1} parent=1 // pred_check_branch
      %282 = sbr.rel (0) target = $region93
    $region92: #{cirh_forward.1} parent=1 // pred_region
      _
    $region93: #{cirh_forward.1} parent=1 // pred_fallthru
      _
    // Predicated region
    $region94: #{cirh_forward.1} parent=1 // pred_check
      _
    $region95: #{cirh_forward.1} parent=1 // pred_check_branch
      %284 = sbr.rel (0) target = $region97
    $region96: #{cirh_forward.1} parent=1 // pred_region
      %286 = vsyncadd [#allocation27], 0
      %s288 = sshll.u32 %s47, 4
      %s289 = int_to_ptr.hbm [resolvable:$true] %s288
      %s290 = sshll.u32 [#allocation28], 4
      %s291 = int_to_ptr.vmem [resolvable:$true] %s290
      %293 = dma.hbm_to_vmem [thread:$0]  %s289, 64, %s291, [#allocation27]
    $region97: #{cirh_forward.1} parent=1 // pred_fallthru
      _
    // Predicated region
    $region98: #{cirh_forward.1} parent=1 // pred_check
      _
    $region99: #{cirh_forward.1} parent=1 // pred_check_branch
      %295 = sbr.rel (0) target = $region101
    $region100: #{cirh_forward.1} parent=1 // pred_region
      %297 = vsyncadd [#allocation30], 0
      %s298 = sshll.u32 %s49, 4
      %s299 = int_to_ptr.hbm [resolvable:$true] %s298
      %s300 = sshll.u32 [#allocation29], 4
      %s301 = int_to_ptr.vmem [resolvable:$true] %s300
      %306 = dma.hbm_to_vmem [thread:$0]  %s299, 8192, %s301, [#allocation30], 128, 128, 8
    $region101: #{cirh_forward.1} parent=1 // pred_fallthru
      _
    // Predicated region
    $region102: #{cirh_forward.1} parent=1 // pred_check
      _
    $region103: #{cirh_forward.1} parent=1 // pred_check_branch
      %308 = sbr.rel (0) target = $region105
    $region104: #{cirh_forward.1} parent=1 // pred_region
      %310 = vsyncadd [#allocation30], 0
      %s312 = sshll.u32 %s51, 4
      %s313 = int_to_ptr.hbm [resolvable:$true] %s312
      %s314 = sshll.u32 [#allocation31], 4
      %s315 = int_to_ptr.vmem [resolvable:$true] %s314
      %317 = dma.hbm_to_vmem [thread:$0]  %s313, 32, %s315, [#allocation30]
    $region105: #{cirh_forward.1} parent=1 // pred_fallthru
      _
    // Predicated region
    $region106: #{cirh_forward.1} parent=1 // pred_check
      _
    $region107: #{cirh_forward.1} parent=1 // pred_check_branch
      %319 = sbr.rel (0) target = $region109
    $region108: #{cirh_forward.1} parent=1 // pred_region
      _
    $region109: #{cirh_forward.1} parent=1 // pred_fallthru
      _
    // Predicated region
    $region110: #{cirh_forward.1} parent=1 // pred_check
      _
    $region111: #{cirh_forward.1} parent=1 // pred_check_branch
      %321 = sbr.rel (0) target = $region113
    $region112: #{cirh_forward.1} parent=1 // pred_region
      %323 = vsyncadd [#allocation33], 0
      %s325 = sshll.u32 %s55, 4
      %s326 = int_to_ptr.hbm [resolvable:$true] %s325
      %s327 = sshll.u32 [#allocation32], 4
      %s328 = int_to_ptr.vmem [resolvable:$true] %s327
      %330 = dma.hbm_to_vmem [thread:$0]  %s326, 64, %s328, [#allocation33]
    $region113: #{cirh_forward.1} parent=1 // pred_fallthru
      _
    // Predicated region
    $region114: #{cirh_forward.1} parent=1 // pred_check
      _
    $region115: #{cirh_forward.1} parent=1 // pred_check_branch
      %332 = sbr.rel (0) target = $region117
    $region116: #{cirh_forward.1} parent=1 // pred_region
      %334 = vsyncadd [#allocation33], 0
      %s335 = sshll.u32 %s57, 4
      %s336 = int_to_ptr.hbm [resolvable:$true] %s335
      %s337 = sshll.u32 [#allocation34], 4
      %s338 = int_to_ptr.vmem [resolvable:$true] %s337
      %343 = dma.hbm_to_vmem [thread:$0]  %s336, 4096, %s338, [#allocation33], 64, 64, 4
    $region117: #{cirh_forward.1} parent=1 // pred_fallthru
      _
    // Predicated region
    $region118: #{cirh_forward.1} parent=1 // pred_check
      _
    $region119: #{cirh_forward.1} parent=1 // pred_check_branch
      %345 = sbr.rel (0) target = $region121
    $region120: #{cirh_forward.1} parent=1 // pred_region
      %347 = vsyncadd [#allocation36], 0
      %s349 = sshll.u32 %s59, 4
      %s350 = int_to_ptr.hbm [resolvable:$true] %s349
      %s351 = sshll.u32 [#allocation35], 4
      %s352 = int_to_ptr.vmem [resolvable:$true] %s351
      %354 = dma.hbm_to_vmem [thread:$0]  %s350, 16, %s352, [#allocation36]
    $region121: #{cirh_forward.1} parent=1 // pred_fallthru
      _
    // Predicated region
    $region122: #{cirh_forward.1} parent=1 // pred_check
      _
    $region123: #{cirh_forward.1} parent=1 // pred_check_branch
      %356 = sbr.rel (0) target = $region125
    $region124: #{cirh_forward.1} parent=1 // pred_region
      %358 = dma.done [#allocation3], 256
    $region125: #{cirh_forward.1} parent=1 // pred_fallthru
      _
    // Predicated region
    $region126: #{cirh_forward.1} parent=1 // pred_check
      _
    $region127: #{cirh_forward.1} parent=1 // pred_check_branch
      %360 = sbr.rel (0) target = $region129
    $region128: #{cirh_forward.1} parent=1 // pred_region
      %362 = dma.done [#allocation6], 128
    $region129: #{cirh_forward.1} parent=1 // pred_fallthru
      _
    // Predicated region
    $region130: #{cirh_forward.1} parent=1 // pred_check
      _
    $region131: #{cirh_forward.1} parent=1 // pred_check_branch
      %364 = sbr.rel (0) target = $region133
    $region132: #{cirh_forward.1} parent=1 // pred_region
      %366 = dma.done [#allocation6], 8192
    $region133: #{cirh_forward.1} parent=1 // pred_fallthru
      _
    // Predicated region
    $region134: #{cirh_forward.1} parent=1 // pred_check
      _
    $region135: #{cirh_forward.1} parent=1 // pred_check_branch
      %368 = sbr.rel (0) target = $region137
    $region136: #{cirh_forward.1} parent=1 // pred_region
      %370 = dma.done [#allocation9], 64
    $region137: #{cirh_forward.1} parent=1 // pred_fallthru
      _
    // Predicated region
    $region138: #{cirh_forward.1} parent=1 // pred_check
      _
    $region139: #{cirh_forward.1} parent=1 // pred_check_branch
      %372 = sbr.rel (0) target = $region141
    $region140: #{cirh_forward.1} parent=1 // pred_region
      %374 = dma.done [#allocation9], 64
    $region141: #{cirh_forward.1} parent=1 // pred_fallthru
      _
    // Predicated region
    $region142: #{cirh_forward.1} parent=1 // pred_check
      _
    $region143: #{cirh_forward.1} parent=1 // pred_check_branch
      %376 = sbr.rel (0) target = $region145
    $region144: #{cirh_forward.1} parent=1 // pred_region
      %378 = dma.done [#allocation12], 64
    $region145: #{cirh_forward.1} parent=1 // pred_fallthru
      _
    // Predicated region
    $region146: #{cirh_forward.1} parent=1 // pred_check
      _
    $region147: #{cirh_forward.1} parent=1 // pred_check_branch
      %380 = sbr.rel (0) target = $region149
    $region148: #{cirh_forward.1} parent=1 // pred_region
      %382 = dma.done [#allocation12], 4096
    $region149: #{cirh_forward.1} parent=1 // pred_fallthru
      _
    // Predicated region
    $region150: #{cirh_forward.1} parent=1 // pred_check
      _
    $region151: #{cirh_forward.1} parent=1 // pred_check_branch
      %384 = sbr.rel (0) target = $region153
    $region152: #{cirh_forward.1} parent=1 // pred_region
      %386 = dma.done [#allocation15], 64
    $region153: #{cirh_forward.1} parent=1 // pred_fallthru
      _
    // Predicated region
    $region154: #{cirh_forward.1} parent=1 // pred_check
      _
    $region155: #{cirh_forward.1} parent=1 // pred_check_branch
      %388 = sbr.rel (0) target = $region157
    $region156: #{cirh_forward.1} parent=1 // pred_region
      %390 = dma.done [#allocation15], 16384
    $region157: #{cirh_forward.1} parent=1 // pred_fallthru
      _
    // Predicated region
    $region158: #{cirh_forward.1} parent=1 // pred_check
      _
    $region159: #{cirh_forward.1} parent=1 // pred_check_branch
      %392 = sbr.rel (0) target = $region161
    $region160: #{cirh_forward.1} parent=1 // pred_region
      %394 = dma.done [#allocation18], 64
    $region161: #{cirh_forward.1} parent=1 // pred_fallthru
      _
    // Predicated region
    $region162: #{cirh_forward.1} parent=1 // pred_check
      _
    $region163: #{cirh_forward.1} parent=1 // pred_check_branch
      %396 = sbr.rel (0) target = $region165
    $region164: #{cirh_forward.1} parent=1 // pred_region
      %398 = dma.done [#allocation18], 64
    $region165: #{cirh_forward.1} parent=1 // pred_fallthru
      _
    // Predicated region
    $region166: #{cirh_forward.1} parent=1 // pred_check
      _
    $region167: #{cirh_forward.1} parent=1 // pred_check_branch
      %400 = sbr.rel (0) target = $region169
    $region168: #{cirh_forward.1} parent=1 // pred_region
      %402 = dma.done [#allocation21], 16384
    $region169: #{cirh_forward.1} parent=1 // pred_fallthru
      _
    // Predicated region
    $region170: #{cirh_forward.1} parent=1 // pred_check
      _
    $region171: #{cirh_forward.1} parent=1 // pred_check_branch
      %404 = sbr.rel (0) target = $region173
    $region172: #{cirh_forward.1} parent=1 // pred_region
      %406 = dma.done [#allocation21], 64
    $region173: #{cirh_forward.1} parent=1 // pred_fallthru
      _
    // Predicated region
    $region174: #{cirh_forward.1} parent=1 // pred_check
      _
    $region175: #{cirh_forward.1} parent=1 // pred_check_branch
      %408 = sbr.rel (0) target = $region177
    $region176: #{cirh_forward.1} parent=1 // pred_region
      %410 = dma.done [#allocation24], 64
    $region177: #{cirh_forward.1} parent=1 // pred_fallthru
      _
    // Predicated region
    $region178: #{cirh_forward.1} parent=1 // pred_check
      _
    $region179: #{cirh_forward.1} parent=1 // pred_check_branch
      %412 = sbr.rel (0) target = $region181
    $region180: #{cirh_forward.1} parent=1 // pred_region
      %414 = dma.done [#allocation24], 16
    $region181: #{cirh_forward.1} parent=1 // pred_fallthru
      _
    // Predicated region
    $region182: #{cirh_forward.1} parent=1 // pred_check
      _
    $region183: #{cirh_forward.1} parent=1 // pred_check_branch
      %416 = sbr.rel (0) target = $region185
    $region184: #{cirh_forward.1} parent=1 // pred_region
      %418 = dma.done [#allocation27], 16
    $region185: #{cirh_forward.1} parent=1 // pred_fallthru
      _
    // Predicated region
    $region186: #{cirh_forward.1} parent=1 // pred_check
      _
    $region187: #{cirh_forward.1} parent=1 // pred_check_branch
      %420 = sbr.rel (0) target = $region189
    $region188: #{cirh_forward.1} parent=1 // pred_region
      %422 = dma.done [#allocation27], 64
    $region189: #{cirh_forward.1} parent=1 // pred_fallthru
      _
    // Predicated region
    $region190: #{cirh_forward.1} parent=1 // pred_check
      _
    $region191: #{cirh_forward.1} parent=1 // pred_check_branch
      %424 = sbr.rel (0) target = $region193
    $region192: #{cirh_forward.1} parent=1 // pred_region
      %426 = dma.done [#allocation30], 8192
    $region193: #{cirh_forward.1} parent=1 // pred_fallthru
      _
    // Predicated region
    $region194: #{cirh_forward.1} parent=1 // pred_check
      _
    $region195: #{cirh_forward.1} parent=1 // pred_check_branch
      %428 = sbr.rel (0) target = $region197
    $region196: #{cirh_forward.1} parent=1 // pred_region
      %430 = dma.done [#allocation30], 32
    $region197: #{cirh_forward.1} parent=1 // pred_fallthru
      _
    // Predicated region
    $region198: #{cirh_forward.1} parent=1 // pred_check
      _
    $region199: #{cirh_forward.1} parent=1 // pred_check_branch
      %432 = sbr.rel (0) target = $region201
    $region200: #{cirh_forward.1} parent=1 // pred_region
      %434 = dma.done [#allocation33], 64
    $region201: #{cirh_forward.1} parent=1 // pred_fallthru
      _
    // Predicated region
    $region202: #{cirh_forward.1} parent=1 // pred_check
      _
    $region203: #{cirh_forward.1} parent=1 // pred_check_branch
      %436 = sbr.rel (0) target = $region205
    $region204: #{cirh_forward.1} parent=1 // pred_region
      %438 = dma.done [#allocation33], 4096
    $region205: #{cirh_forward.1} parent=1 // pred_fallthru
      _
    // Predicated region
    $region206: #{cirh_forward.1} parent=1 // pred_check
      _
    $region207: #{cirh_forward.1} parent=1 // pred_check_branch
      %440 = sbr.rel (0) target = $region209
    $region208: #{cirh_forward.1} parent=1 // pred_region
      %442 = dma.done [#allocation36], 16
    $region209: #{cirh_forward.1} parent=1 // pred_fallthru
      _
    %v443 = vld [vmem:[#allocation2] sm:$0xff]
    %v444 = vld [vmem:[#allocation2 + $0x8] sm:$0xff]
    %v445 = vld [vmem:[%s3] sm:$0xff]
    %v446 = vld [vmem:[#allocation5] sm:$0xff]
    %v447 = vld [vmem:[#allocation7] sm:$0xff]
    %v448 = vld [vmem:[#allocation7 + $0x8] sm:$0xff]
    %v449 = vld [vmem:[#allocation7 + $0x10] sm:$0xff]
    %v450 = vld [vmem:[#allocation7 + $0x18] sm:$0xff]
    %v451 = vld [vmem:[#allocation7 + $0x20] sm:$0xff]
    %v452 = vld [vmem:[#allocation7 + $0x28] sm:$0xff]
    %v453 = vld [vmem:[#allocation7 + $0x30] sm:$0xff]
    %v454 = vld [vmem:[#allocation7 + $0x38] sm:$0xff]
    %v455 = vld [vmem:[#allocation7 + $0x40] sm:$0xff]
    %v456 = vld [vmem:[#allocation7 + $0x48] sm:$0xff]
    %v457 = vld [vmem:[#allocation7 + $0x50] sm:$0xff]
    %v458 = vld [vmem:[#allocation7 + $0x58] sm:$0xff]
    %v459 = vld [vmem:[#allocation7 + $0x60] sm:$0xff]
    %v460 = vld [vmem:[#allocation7 + $0x68] sm:$0xff]
    %v461 = vld [vmem:[#allocation7 + $0x70] sm:$0xff]
    %v462 = vld [vmem:[#allocation7 + $0x78] sm:$0xff]
    %v463 = vld [vmem:[#allocation7 + $0x80] sm:$0xff]
    %v464 = vld [vmem:[#allocation7 + $0x88] sm:$0xff]
    %v465 = vld [vmem:[#allocation7 + $0x90] sm:$0xff]
    %v466 = vld [vmem:[#allocation7 + $0x98] sm:$0xff]
    %v467 = vld [vmem:[#allocation7 + $0xa0] sm:$0xff]
    %v468 = vld [vmem:[#allocation7 + $0xa8] sm:$0xff]
    %v469 = vld [vmem:[#allocation7 + $0xb0] sm:$0xff]
    %v470 = vld [vmem:[#allocation7 + $0xb8] sm:$0xff]
    %v471 = vld [vmem:[#allocation7 + $0xc0] sm:$0xff]
    %v472 = vld [vmem:[#allocation7 + $0xc8] sm:$0xff]
    %v473 = vld [vmem:[#allocation7 + $0xd0] sm:$0xff]
    %v474 = vld [vmem:[#allocation7 + $0xd8] sm:$0xff]
    %v475 = vld [vmem:[#allocation7 + $0xe0] sm:$0xff]
    %v476 = vld [vmem:[#allocation7 + $0xe8] sm:$0xff]
    %v477 = vld [vmem:[#allocation7 + $0xf0] sm:$0xff]
    %v478 = vld [vmem:[#allocation7 + $0xf8] sm:$0xff]
    %v479 = vld [vmem:[#allocation7 + $0x100] sm:$0xff]
    %v480 = vld [vmem:[#allocation7 + $0x108] sm:$0xff]
    %v481 = vld [vmem:[#allocation7 + $0x110] sm:$0xff]
    %v482 = vld [vmem:[#allocation7 + $0x118] sm:$0xff]
    %v483 = vld [vmem:[#allocation7 + $0x120] sm:$0xff]
    %v484 = vld [vmem:[#allocation7 + $0x128] sm:$0xff]
    %v485 = vld [vmem:[#allocation7 + $0x130] sm:$0xff]
    %v486 = vld [vmem:[#allocation7 + $0x138] sm:$0xff]
    %v487 = vld [vmem:[#allocation7 + $0x140] sm:$0xff]
    %v488 = vld [vmem:[#allocation7 + $0x148] sm:$0xff]
    %v489 = vld [vmem:[#allocation7 + $0x150] sm:$0xff]
    %v490 = vld [vmem:[#allocation7 + $0x158] sm:$0xff]
    %v491 = vld [vmem:[#allocation7 + $0x160] sm:$0xff]
    %v492 = vld [vmem:[#allocation7 + $0x168] sm:$0xff]
    %v493 = vld [vmem:[#allocation7 + $0x170] sm:$0xff]
    %v494 = vld [vmem:[#allocation7 + $0x178] sm:$0xff]
    %v495 = vld [vmem:[#allocation7 + $0x180] sm:$0xff]
    %v496 = vld [vmem:[#allocation7 + $0x188] sm:$0xff]
    %v497 = vld [vmem:[#allocation7 + $0x190] sm:$0xff]
    %v498 = vld [vmem:[#allocation7 + $0x198] sm:$0xff]
    %v499 = vld [vmem:[#allocation7 + $0x1a0] sm:$0xff]
    %v500 = vld [vmem:[#allocation7 + $0x1a8] sm:$0xff]
    %v501 = vld [vmem:[#allocation7 + $0x1b0] sm:$0xff]
    %v502 = vld [vmem:[#allocation7 + $0x1b8] sm:$0xff]
    %v503 = vld [vmem:[#allocation7 + $0x1c0] sm:$0xff]
    %v504 = vld [vmem:[#allocation7 + $0x1c8] sm:$0xff]
    %v505 = vld [vmem:[#allocation7 + $0x1d0] sm:$0xff]
    %v506 = vld [vmem:[#allocation7 + $0x1d8] sm:$0xff]
    %v507 = vld [vmem:[#allocation7 + $0x1e0] sm:$0xff]
    %v508 = vld [vmem:[#allocation7 + $0x1e8] sm:$0xff]
    %v509 = vld [vmem:[#allocation7 + $0x1f0] sm:$0xff]
    %v510 = vld [vmem:[#allocation7 + $0x1f8] sm:$0xff]
    %v511 = vunpack.c.l.bf16 %v447
    %v512 = vunpack.c.h.bf16 %v447
    %v513 = vunpack.c.l.bf16 %v448
    %v514 = vunpack.c.h.bf16 %v448
    %v515 = vunpack.c.l.bf16 %v449
    %v516 = vunpack.c.h.bf16 %v449
    %v517 = vunpack.c.l.bf16 %v450
    %v518 = vunpack.c.h.bf16 %v450
    %v519 = vunpack.c.l.bf16 %v451
    %v520 = vunpack.c.h.bf16 %v451
    %v521 = vunpack.c.l.bf16 %v452
    %v522 = vunpack.c.h.bf16 %v452
    %v523 = vunpack.c.l.bf16 %v453
    %v524 = vunpack.c.h.bf16 %v453
    %v525 = vunpack.c.l.bf16 %v454
    %v526 = vunpack.c.h.bf16 %v454
    %v527 = vunpack.c.l.bf16 %v455
    %v528 = vunpack.c.h.bf16 %v455
    %v529 = vunpack.c.l.bf16 %v456
    %v530 = vunpack.c.h.bf16 %v456
    %v531 = vunpack.c.l.bf16 %v457
    %v532 = vunpack.c.h.bf16 %v457
    %v533 = vunpack.c.l.bf16 %v458
    %v534 = vunpack.c.h.bf16 %v458
    %v535 = vunpack.c.l.bf16 %v459
    %v536 = vunpack.c.h.bf16 %v459
    %v537 = vunpack.c.l.bf16 %v460
    %v538 = vunpack.c.h.bf16 %v460
    %v539 = vunpack.c.l.bf16 %v461
    %v540 = vunpack.c.h.bf16 %v461
    %v541 = vunpack.c.l.bf16 %v462
    %v542 = vunpack.c.h.bf16 %v462
    %v543 = vunpack.c.l.bf16 %v463
    %v544 = vunpack.c.h.bf16 %v463
    %v545 = vunpack.c.l.bf16 %v464
    %v546 = vunpack.c.h.bf16 %v464
    %v547 = vunpack.c.l.bf16 %v465
    %v548 = vunpack.c.h.bf16 %v465
    %v549 = vunpack.c.l.bf16 %v466
    %v550 = vunpack.c.h.bf16 %v466
    %v551 = vunpack.c.l.bf16 %v467
    %v552 = vunpack.c.h.bf16 %v467
    %v553 = vunpack.c.l.bf16 %v468
    %v554 = vunpack.c.h.bf16 %v468
    %v555 = vunpack.c.l.bf16 %v469
    %v556 = vunpack.c.h.bf16 %v469
    %v557 = vunpack.c.l.bf16 %v470
    %v558 = vunpack.c.h.bf16 %v470
    %v559 = vunpack.c.l.bf16 %v471
    %v560 = vunpack.c.h.bf16 %v471
    %v561 = vunpack.c.l.bf16 %v472
    %v562 = vunpack.c.h.bf16 %v472
    %v563 = vunpack.c.l.bf16 %v473
    %v564 = vunpack.c.h.bf16 %v473
    %v565 = vunpack.c.l.bf16 %v474
    %v566 = vunpack.c.h.bf16 %v474
    %v567 = vunpack.c.l.bf16 %v475
    %v568 = vunpack.c.h.bf16 %v475
    %v569 = vunpack.c.l.bf16 %v476
    %v570 = vunpack.c.h.bf16 %v476
    %v571 = vunpack.c.l.bf16 %v477
    %v572 = vunpack.c.h.bf16 %v477
    %v573 = vunpack.c.l.bf16 %v478
    %v574 = vunpack.c.h.bf16 %v478
    %v575 = vunpack.c.l.bf16 %v479
    %v576 = vunpack.c.h.bf16 %v479
    %v577 = vunpack.c.l.bf16 %v480
    %v578 = vunpack.c.h.bf16 %v480
    %v579 = vunpack.c.l.bf16 %v481
    %v580 = vunpack.c.h.bf16 %v481
    %v581 = vunpack.c.l.bf16 %v482
    %v582 = vunpack.c.h.bf16 %v482
    %v583 = vunpack.c.l.bf16 %v483
    %v584 = vunpack.c.h.bf16 %v483
    %v585 = vunpack.c.l.bf16 %v484
    %v586 = vunpack.c.h.bf16 %v484
    %v587 = vunpack.c.l.bf16 %v485
    %v588 = vunpack.c.h.bf16 %v485
    %v589 = vunpack.c.l.bf16 %v486
    %v590 = vunpack.c.h.bf16 %v486
    %v591 = vunpack.c.l.bf16 %v487
    %v592 = vunpack.c.h.bf16 %v487
    %v593 = vunpack.c.l.bf16 %v488
    %v594 = vunpack.c.h.bf16 %v488
    %v595 = vunpack.c.l.bf16 %v489
    %v596 = vunpack.c.h.bf16 %v489
    %v597 = vunpack.c.l.bf16 %v490
    %v598 = vunpack.c.h.bf16 %v490
    %v599 = vunpack.c.l.bf16 %v491
    %v600 = vunpack.c.h.bf16 %v491
    %v601 = vunpack.c.l.bf16 %v492
    %v602 = vunpack.c.h.bf16 %v492
    %v603 = vunpack.c.l.bf16 %v493
    %v604 = vunpack.c.h.bf16 %v493
    %v605 = vunpack.c.l.bf16 %v494
    %v606 = vunpack.c.h.bf16 %v494
    %v607 = vunpack.c.l.bf16 %v495
    %v608 = vunpack.c.h.bf16 %v495
    %v609 = vunpack.c.l.bf16 %v496
    %v610 = vunpack.c.h.bf16 %v496
    %v611 = vunpack.c.l.bf16 %v497
    %v612 = vunpack.c.h.bf16 %v497
    %v613 = vunpack.c.l.bf16 %v498
    %v614 = vunpack.c.h.bf16 %v498
    %v615 = vunpack.c.l.bf16 %v499
    %v616 = vunpack.c.h.bf16 %v499
    %v617 = vunpack.c.l.bf16 %v500
    %v618 = vunpack.c.h.bf16 %v500
    %v619 = vunpack.c.l.bf16 %v501
    %v620 = vunpack.c.h.bf16 %v501
    %v621 = vunpack.c.l.bf16 %v502
    %v622 = vunpack.c.h.bf16 %v502
    %v623 = vunpack.c.l.bf16 %v503
    %v624 = vunpack.c.h.bf16 %v503
    %v625 = vunpack.c.l.bf16 %v504
    %v626 = vunpack.c.h.bf16 %v504
    %v627 = vunpack.c.l.bf16 %v505
    %v628 = vunpack.c.h.bf16 %v505
    %v629 = vunpack.c.l.bf16 %v506
    %v630 = vunpack.c.h.bf16 %v506
    %v631 = vunpack.c.l.bf16 %v507
    %v632 = vunpack.c.h.bf16 %v507
    %v633 = vunpack.c.l.bf16 %v508
    %v634 = vunpack.c.h.bf16 %v508
    %v635 = vunpack.c.l.bf16 %v509
    %v636 = vunpack.c.h.bf16 %v509
    %v637 = vunpack.c.l.bf16 %v510
    %v638 = vunpack.c.h.bf16 %v510
    %v639 = vld [vmem:[#allocation8] sm:$0xf]
    %v641 = vperm.slane %v639, 0
    %v642 = vperm.slane %v639, 1
    %v643 = vperm.slane %v639, 2
    %v644 = vperm.slane %v639, 3
    %649 = vmatpush.msra.mxu0 %v571
    %650 = vmatpush.msra.mxu0 %v567
    %651 = vmatpush.msra.mxu0 %v563
    %652 = vmatpush.msra.mxu0 %v559
    %653 = vmatpush.msra.mxu0 %v555
    %654 = vmatpush.msra.mxu0 %v551
    %655 = vmatpush.msra.mxu0 %v547
    %656 = vmatpush.msra.mxu0 %v543
    %657 = vmatpush.msra.mxu0 %v539
    %658 = vmatpush.msra.mxu0 %v535
    %659 = vmatpush.msra.mxu0 %v531
    %660 = vmatpush.msra.mxu0 %v527
    %661 = vmatpush.msra.mxu0 %v523
    %662 = vmatpush.msra.mxu0 %v519
    %663 = vmatpush.msra.mxu0 %v515
    %664 = vmatpush.msra.mxu0 %v511
    %665 = vmatmul.f32.gmra.mxu0 %v443
    %v666 = vpop.f32.mrf.mxu0
    %v667 = vadd.f32 %v641, %v666
    %668 = vdwg.mxu0
    %669 = vmatpush.msra.mxu0 %v635
    %670 = vmatpush.msra.mxu0 %v631
    %671 = vmatpush.msra.mxu0 %v627
    %672 = vmatpush.msra.mxu0 %v623
    %673 = vmatpush.msra.mxu0 %v619
    %674 = vmatpush.msra.mxu0 %v615
    %675 = vmatpush.msra.mxu0 %v611
    %676 = vmatpush.msra.mxu0 %v607
    %677 = vmatpush.msra.mxu0 %v603
    %678 = vmatpush.msra.mxu0 %v599
    %679 = vmatpush.msra.mxu0 %v595
    %680 = vmatpush.msra.mxu0 %v591
    %681 = vmatpush.msra.mxu0 %v587
    %682 = vmatpush.msra.mxu0 %v583
    %683 = vmatpush.msra.mxu0 %v579
    %684 = vmatpush.msra.mxu0 %v575
    %685 = vmatmul.f32.gmra.mxu0 %v444
    %v686 = vpop.f32.mrf.mxu0
    %v687 = vadd.f32 %v667, %v686
    %688 = vdwg.mxu0
    %689 = vmatpush.msra.mxu0 %v572
    %690 = vmatpush.msra.mxu0 %v568
    %691 = vmatpush.msra.mxu0 %v564
    %692 = vmatpush.msra.mxu0 %v560
    %693 = vmatpush.msra.mxu0 %v556
    %694 = vmatpush.msra.mxu0 %v552
    %695 = vmatpush.msra.mxu0 %v548
    %696 = vmatpush.msra.mxu0 %v544
    %697 = vmatpush.msra.mxu0 %v540
    %698 = vmatpush.msra.mxu0 %v536
    %699 = vmatpush.msra.mxu0 %v532
    %700 = vmatpush.msra.mxu0 %v528
    %701 = vmatpush.msra.mxu0 %v524
    %702 = vmatpush.msra.mxu0 %v520
    %703 = vmatpush.msra.mxu0 %v516
    %704 = vmatpush.msra.mxu0 %v512
    %705 = vmatmul.f32.gmra.mxu0 %v443
    %v706 = vpop.f32.mrf.mxu0
    %v707 = vadd.f32 %v642, %v706
    %708 = vdwg.mxu0
    %709 = vmatpush.msra.mxu0 %v636
    %710 = vmatpush.msra.mxu0 %v632
    %711 = vmatpush.msra.mxu0 %v628
    %712 = vmatpush.msra.mxu0 %v624
    %713 = vmatpush.msra.mxu0 %v620
    %714 = vmatpush.msra.mxu0 %v616
    %715 = vmatpush.msra.mxu0 %v612
    %716 = vmatpush.msra.mxu0 %v608
    %717 = vmatpush.msra.mxu0 %v604
    %718 = vmatpush.msra.mxu0 %v600
    %719 = vmatpush.msra.mxu0 %v596
    %720 = vmatpush.msra.mxu0 %v592
    %721 = vmatpush.msra.mxu0 %v588
    %722 = vmatpush.msra.mxu0 %v584
    %723 = vmatpush.msra.mxu0 %v580
    %724 = vmatpush.msra.mxu0 %v576
    %725 = vmatmul.f32.gmra.mxu0 %v444
    %v726 = vpop.f32.mrf.mxu0
    %v727 = vadd.f32 %v707, %v726
    %728 = vdwg.mxu0
    %729 = vmatpush.msra.mxu0 %v573
    %730 = vmatpush.msra.mxu0 %v569
    %731 = vmatpush.msra.mxu0 %v565
    %732 = vmatpush.msra.mxu0 %v561
    %733 = vmatpush.msra.mxu0 %v557
    %734 = vmatpush.msra.mxu0 %v553
    %735 = vmatpush.msra.mxu0 %v549
    %736 = vmatpush.msra.mxu0 %v545
    %737 = vmatpush.msra.mxu0 %v541
    %738 = vmatpush.msra.mxu0 %v537
    %739 = vmatpush.msra.mxu0 %v533
    %740 = vmatpush.msra.mxu0 %v529
    %741 = vmatpush.msra.mxu0 %v525
    %742 = vmatpush.msra.mxu0 %v521
    %743 = vmatpush.msra.mxu0 %v517
    %744 = vmatpush.msra.mxu0 %v513
    %745 = vmatmul.f32.gmra.mxu0 %v443
    %v746 = vpop.f32.mrf.mxu0
    %v747 = vadd.f32 %v643, %v746
    %748 = vdwg.mxu0
    %749 = vmatpush.msra.mxu0 %v637
    %750 = vmatpush.msra.mxu0 %v633
    %751 = vmatpush.msra.mxu0 %v629
    %752 = vmatpush.msra.mxu0 %v625
    %753 = vmatpush.msra.mxu0 %v621
    %754 = vmatpush.msra.mxu0 %v617
    %755 = vmatpush.msra.mxu0 %v613
    %756 = vmatpush.msra.mxu0 %v609
    %757 = vmatpush.msra.mxu0 %v605
    %758 = vmatpush.msra.mxu0 %v601
    %759 = vmatpush.msra.mxu0 %v597
    %760 = vmatpush.msra.mxu0 %v593
    %761 = vmatpush.msra.mxu0 %v589
    %762 = vmatpush.msra.mxu0 %v585
    %763 = vmatpush.msra.mxu0 %v581
    %764 = vmatpush.msra.mxu0 %v577
    %765 = vmatmul.f32.gmra.mxu0 %v444
    %v766 = vpop.f32.mrf.mxu0
    %v767 = vadd.f32 %v747, %v766
    %768 = vdwg.mxu0
    %769 = vmatpush.msra.mxu0 %v574
    %770 = vmatpush.msra.mxu0 %v570
    %771 = vmatpush.msra.mxu0 %v566
    %772 = vmatpush.msra.mxu0 %v562
    %773 = vmatpush.msra.mxu0 %v558
    %774 = vmatpush.msra.mxu0 %v554
    %775 = vmatpush.msra.mxu0 %v550
    %776 = vmatpush.msra.mxu0 %v546
    %777 = vmatpush.msra.mxu0 %v542
    %778 = vmatpush.msra.mxu0 %v538
    %779 = vmatpush.msra.mxu0 %v534
    %780 = vmatpush.msra.mxu0 %v530
    %781 = vmatpush.msra.mxu0 %v526
    %782 = vmatpush.msra.mxu0 %v522
    %783 = vmatpush.msra.mxu0 %v518
    %784 = vmatpush.msra.mxu0 %v514
    %785 = vmatmul.f32.gmra.mxu0 %v443
    %v786 = vpop.f32.mrf.mxu0
    %v787 = vadd.f32 %v644, %v786
    %788 = vdwg.mxu0
    %789 = vmatpush.msra.mxu0 %v638
    %790 = vmatpush.msra.mxu0 %v634
    %791 = vmatpush.msra.mxu0 %v630
    %792 = vmatpush.msra.mxu0 %v626
    %793 = vmatpush.msra.mxu0 %v622
    %794 = vmatpush.msra.mxu0 %v618
    %795 = vmatpush.msra.mxu0 %v614
    %796 = vmatpush.msra.mxu0 %v610
    %797 = vmatpush.msra.mxu0 %v606
    %798 = vmatpush.msra.mxu0 %v602
    %799 = vmatpush.msra.mxu0 %v598
    %800 = vmatpush.msra.mxu0 %v594
    %801 = vmatpush.msra.mxu0 %v590
    %802 = vmatpush.msra.mxu0 %v586
    %803 = vmatpush.msra.mxu0 %v582
    %804 = vmatpush.msra.mxu0 %v578
    %805 = vmatmul.f32.gmra.mxu0 %v444
    %v806 = vpop.f32.mrf.mxu0
    %v807 = vadd.f32 %v787, %v806
    %808 = vdwg.mxu0
    %v809 = vmax.f32 %v687, 0.0
    %v810 = vmax.f32 %v727, 0.0
    %v811 = vmax.f32 %v767, 0.0
    %v812 = vmax.f32 %v807, 0.0
    %v813 = vmul.f32 %v809, %v809
    %v814 = vmul.f32 %v810, %v810
    %v815 = vmul.f32 %v811, %v811
    %v816 = vmul.f32 %v812, %v812
    %v817 = vadd.f32 %v813, %v814
    %v818 = vadd.f32 %v817, %v815
    %v819 = vadd.f32 %v818, %v816
    %820 = vadd.xlane.f32.xlu0 %v819
    %v821 = vpop.xlane.xlu0 %820
    %v822 = vmax.f32 %v821, 1e-24
    %v823 = vrsqrt.pop %v822
    %v824 = vmul.f32 %v823, %v822
    %v825 = vmul.f32 %v824, %v823
    %v826 = vmul.f32 0.5, %v825
    %v827 = vsub.f32 1.5, %v826
    %v828 = vmul.f32 %v823, %v827
    %vm829 = vweird.f32 %v822
    %vm830 = vweird.f32 %v823
    %vm831 = vmor %vm829, %vm830
    %v832 = vsel %vm831, %v823, %v828
    %v833 = vmul.f32 %v809, %v832
    %v834 = vmul.f32 %v810, %v832
    %v835 = vmul.f32 %v811, %v832
    %v836 = vmul.f32 %v812, %v832
    %v837 = vld [vmem:[#allocation13] sm:$0xff]
    %v838 = vld [vmem:[#allocation13 + $0x8] sm:$0xff]
    %v839 = vld [vmem:[#allocation13 + $0x10] sm:$0xff]
    %v840 = vld [vmem:[#allocation13 + $0x18] sm:$0xff]
    %v841 = vld [vmem:[#allocation13 + $0x20] sm:$0xff]
    %v842 = vld [vmem:[#allocation13 + $0x28] sm:$0xff]
    %v843 = vld [vmem:[#allocation13 + $0x30] sm:$0xff]
    %v844 = vld [vmem:[#allocation13 + $0x38] sm:$0xff]
    %v845 = vld [vmem:[#allocation13 + $0x40] sm:$0xff]
    %v846 = vld [vmem:[#allocation13 + $0x48] sm:$0xff]
    %v847 = vld [vmem:[#allocation13 + $0x50] sm:$0xff]
    %v848 = vld [vmem:[#allocation13 + $0x58] sm:$0xff]
    %v849 = vld [vmem:[#allocation13 + $0x60] sm:$0xff]
    %v850 = vld [vmem:[#allocation13 + $0x68] sm:$0xff]
    %v851 = vld [vmem:[#allocation13 + $0x70] sm:$0xff]
    %v852 = vld [vmem:[#allocation13 + $0x78] sm:$0xff]
    %v853 = vld [vmem:[#allocation13 + $0x80] sm:$0xff]
    %v854 = vld [vmem:[#allocation13 + $0x88] sm:$0xff]
    %v855 = vld [vmem:[#allocation13 + $0x90] sm:$0xff]
    %v856 = vld [vmem:[#allocation13 + $0x98] sm:$0xff]
    %v857 = vld [vmem:[#allocation13 + $0xa0] sm:$0xff]
    %v858 = vld [vmem:[#allocation13 + $0xa8] sm:$0xff]
    %v859 = vld [vmem:[#allocation13 + $0xb0] sm:$0xff]
    %v860 = vld [vmem:[#allocation13 + $0xb8] sm:$0xff]
    %v861 = vld [vmem:[#allocation13 + $0xc0] sm:$0xff]
    %v862 = vld [vmem:[#allocation13 + $0xc8] sm:$0xff]
    %v863 = vld [vmem:[#allocation13 + $0xd0] sm:$0xff]
    %v864 = vld [vmem:[#allocation13 + $0xd8] sm:$0xff]
    %v865 = vld [vmem:[#allocation13 + $0xe0] sm:$0xff]
    %v866 = vld [vmem:[#allocation13 + $0xe8] sm:$0xff]
    %v867 = vld [vmem:[#allocation13 + $0xf0] sm:$0xff]
    %v868 = vld [vmem:[#allocation13 + $0xf8] sm:$0xff]
    %v869 = vunpack.c.l.bf16 %v837
    %v870 = vunpack.c.h.bf16 %v837
    %v871 = vunpack.c.l.bf16 %v838
    %v872 = vunpack.c.h.bf16 %v838
    %v873 = vunpack.c.l.bf16 %v839
    %v874 = vunpack.c.h.bf16 %v839
    %v875 = vunpack.c.l.bf16 %v840
    %v876 = vunpack.c.h.bf16 %v840
    %v877 = vunpack.c.l.bf16 %v841
    %v878 = vunpack.c.h.bf16 %v841
    %v879 = vunpack.c.l.bf16 %v842
    %v880 = vunpack.c.h.bf16 %v842
    %v881 = vunpack.c.l.bf16 %v843
    %v882 = vunpack.c.h.bf16 %v843
    %v883 = vunpack.c.l.bf16 %v844
    %v884 = vunpack.c.h.bf16 %v844
    %v885 = vunpack.c.l.bf16 %v845
    %v886 = vunpack.c.h.bf16 %v845
    %v887 = vunpack.c.l.bf16 %v846
    %v888 = vunpack.c.h.bf16 %v846
    %v889 = vunpack.c.l.bf16 %v847
    %v890 = vunpack.c.h.bf16 %v847
    %v891 = vunpack.c.l.bf16 %v848
    %v892 = vunpack.c.h.bf16 %v848
    %v893 = vunpack.c.l.bf16 %v849
    %v894 = vunpack.c.h.bf16 %v849
    %v895 = vunpack.c.l.bf16 %v850
    %v896 = vunpack.c.h.bf16 %v850
    %v897 = vunpack.c.l.bf16 %v851
    %v898 = vunpack.c.h.bf16 %v851
    %v899 = vunpack.c.l.bf16 %v852
    %v900 = vunpack.c.h.bf16 %v852
    %v901 = vunpack.c.l.bf16 %v853
    %v902 = vunpack.c.h.bf16 %v853
    %v903 = vunpack.c.l.bf16 %v854
    %v904 = vunpack.c.h.bf16 %v854
    %v905 = vunpack.c.l.bf16 %v855
    %v906 = vunpack.c.h.bf16 %v855
    %v907 = vunpack.c.l.bf16 %v856
    %v908 = vunpack.c.h.bf16 %v856
    %v909 = vunpack.c.l.bf16 %v857
    %v910 = vunpack.c.h.bf16 %v857
    %v911 = vunpack.c.l.bf16 %v858
    %v912 = vunpack.c.h.bf16 %v858
    %v913 = vunpack.c.l.bf16 %v859
    %v914 = vunpack.c.h.bf16 %v859
    %v915 = vunpack.c.l.bf16 %v860
    %v916 = vunpack.c.h.bf16 %v860
    %v917 = vunpack.c.l.bf16 %v861
    %v918 = vunpack.c.h.bf16 %v861
    %v919 = vunpack.c.l.bf16 %v862
    %v920 = vunpack.c.h.bf16 %v862
    %v921 = vunpack.c.l.bf16 %v863
    %v922 = vunpack.c.h.bf16 %v863
    %v923 = vunpack.c.l.bf16 %v864
    %v924 = vunpack.c.h.bf16 %v864
    %v925 = vunpack.c.l.bf16 %v865
    %v926 = vunpack.c.h.bf16 %v865
    %v927 = vunpack.c.l.bf16 %v866
    %v928 = vunpack.c.h.bf16 %v866
    %v929 = vunpack.c.l.bf16 %v867
    %v930 = vunpack.c.h.bf16 %v867
    %v931 = vunpack.c.l.bf16 %v868
    %v932 = vunpack.c.h.bf16 %v868
    %v933 = vld [vmem:[#allocation14] sm:$0xf]
    %v935 = vperm.slane %v933, 0
    %v936 = vperm.slane %v933, 1
    %v937 = vperm.slane %v933, 2
    %v938 = vperm.slane %v933, 3
    %943 = vmatpush.msra.mxu0 %v929
    %944 = vmatpush.msra.mxu0 %v925
    %945 = vmatpush.msra.mxu0 %v921
    %946 = vmatpush.msra.mxu0 %v917
    %947 = vmatpush.msra.mxu0 %v913
    %948 = vmatpush.msra.mxu0 %v909
    %949 = vmatpush.msra.mxu0 %v905
    %950 = vmatpush.msra.mxu0 %v901
    %951 = vmatpush.msra.mxu0 %v897
    %952 = vmatpush.msra.mxu0 %v893
    %953 = vmatpush.msra.mxu0 %v889
    %954 = vmatpush.msra.mxu0 %v885
    %955 = vmatpush.msra.mxu0 %v881
    %956 = vmatpush.msra.mxu0 %v877
    %957 = vmatpush.msra.mxu0 %v873
    %958 = vmatpush.msra.mxu0 %v869
    %959 = vmatmul.f32.gmra.mxu0 %v445
    %v960 = vpop.f32.mrf.mxu0
    %v961 = vadd.f32 %v935, %v960
    %962 = vdwg.mxu0
    %963 = vmatpush.msra.mxu0 %v930
    %964 = vmatpush.msra.mxu0 %v926
    %965 = vmatpush.msra.mxu0 %v922
    %966 = vmatpush.msra.mxu0 %v918
    %967 = vmatpush.msra.mxu0 %v914
    %968 = vmatpush.msra.mxu0 %v910
    %969 = vmatpush.msra.mxu0 %v906
    %970 = vmatpush.msra.mxu0 %v902
    %971 = vmatpush.msra.mxu0 %v898
    %972 = vmatpush.msra.mxu0 %v894
    %973 = vmatpush.msra.mxu0 %v890
    %974 = vmatpush.msra.mxu0 %v886
    %975 = vmatpush.msra.mxu0 %v882
    %976 = vmatpush.msra.mxu0 %v878
    %977 = vmatpush.msra.mxu0 %v874
    %978 = vmatpush.msra.mxu0 %v870
    %979 = vmatmul.f32.gmra.mxu0 %v445
    %v980 = vpop.f32.mrf.mxu0
    %v981 = vadd.f32 %v936, %v980
    %982 = vdwg.mxu0
    %983 = vmatpush.msra.mxu0 %v931
    %984 = vmatpush.msra.mxu0 %v927
    %985 = vmatpush.msra.mxu0 %v923
    %986 = vmatpush.msra.mxu0 %v919
    %987 = vmatpush.msra.mxu0 %v915
    %988 = vmatpush.msra.mxu0 %v911
    %989 = vmatpush.msra.mxu0 %v907
    %990 = vmatpush.msra.mxu0 %v903
    %991 = vmatpush.msra.mxu0 %v899
    %992 = vmatpush.msra.mxu0 %v895
    %993 = vmatpush.msra.mxu0 %v891
    %994 = vmatpush.msra.mxu0 %v887
    %995 = vmatpush.msra.mxu0 %v883
    %996 = vmatpush.msra.mxu0 %v879
    %997 = vmatpush.msra.mxu0 %v875
    %998 = vmatpush.msra.mxu0 %v871
    %999 = vmatmul.f32.gmra.mxu0 %v445
    %v1000 = vpop.f32.mrf.mxu0
    %v1001 = vadd.f32 %v937, %v1000
    %1002 = vdwg.mxu0
    %1003 = vmatpush.msra.mxu0 %v932
    %1004 = vmatpush.msra.mxu0 %v928
    %1005 = vmatpush.msra.mxu0 %v924
    %1006 = vmatpush.msra.mxu0 %v920
    %1007 = vmatpush.msra.mxu0 %v916
    %1008 = vmatpush.msra.mxu0 %v912
    %1009 = vmatpush.msra.mxu0 %v908
    %1010 = vmatpush.msra.mxu0 %v904
    %1011 = vmatpush.msra.mxu0 %v900
    %1012 = vmatpush.msra.mxu0 %v896
    %1013 = vmatpush.msra.mxu0 %v892
    %1014 = vmatpush.msra.mxu0 %v888
    %1015 = vmatpush.msra.mxu0 %v884
    %1016 = vmatpush.msra.mxu0 %v880
    %1017 = vmatpush.msra.mxu0 %v876
    %1018 = vmatpush.msra.mxu0 %v872
    %1019 = vmatmul.f32.gmra.mxu0 %v445
    %v1020 = vpop.f32.mrf.mxu0
    %v1021 = vadd.f32 %v938, %v1020
    %1022 = vdwg.mxu0
    %v1023 = vmax.f32 %v961, 0.0
    %v1024 = vmax.f32 %v981, 0.0
    %v1025 = vmax.f32 %v1001, 0.0
    %v1026 = vmax.f32 %v1021, 0.0
    %v1027 = vmul.f32 %v1023, %v1023
    %v1028 = vmul.f32 %v1024, %v1024
    %v1029 = vmul.f32 %v1025, %v1025
    %v1030 = vmul.f32 %v1026, %v1026
    %v1031 = vadd.f32 %v1027, %v1028
    %v1032 = vadd.f32 %v1031, %v1029
    %v1033 = vadd.f32 %v1032, %v1030
    %1034 = vadd.xlane.f32.xlu0 %v1033
    %v1035 = vpop.xlane.xlu0 %1034
    %v1036 = vmax.f32 %v1035, 1e-24
    %v1037 = vrsqrt.pop %v1036
    %v1038 = vmul.f32 %v1037, %v1036
    %v1039 = vmul.f32 %v1038, %v1037
    %v1040 = vmul.f32 0.5, %v1039
    %v1041 = vsub.f32 1.5, %v1040
    %v1042 = vmul.f32 %v1037, %v1041
    %vm1043 = vweird.f32 %v1036
    %vm1044 = vweird.f32 %v1037
    %vm1045 = vmor %vm1043, %vm1044
    %v1046 = vsel %vm1045, %v1037, %v1042
    %v1047 = vmul.f32 %v1023, %v1046
    %v1048 = vmul.f32 %v1024, %v1046
    %v1049 = vmul.f32 %v1025, %v1046
    %v1050 = vmul.f32 %v1026, %v1046
    %v1051 = vld [vmem:[%s11] sm:$0xff]
    %v1052 = vld [vmem:[%s11 + $0x8] sm:$0xff]
    %v1053 = vld [vmem:[%s11 + $0x10] sm:$0xff]
    %v1054 = vld [vmem:[%s11 + $0x18] sm:$0xff]
    %v1055 = vld [vmem:[%s11 + $0x20] sm:$0xff]
    %v1056 = vld [vmem:[%s11 + $0x28] sm:$0xff]
    %v1057 = vld [vmem:[%s11 + $0x30] sm:$0xff]
    %v1058 = vld [vmem:[%s11 + $0x38] sm:$0xff]
    %v1059 = vld [vmem:[%s11 + $0x40] sm:$0xff]
    %v1060 = vld [vmem:[%s11 + $0x48] sm:$0xff]
    %v1061 = vld [vmem:[%s11 + $0x50] sm:$0xff]
    %v1062 = vld [vmem:[%s11 + $0x58] sm:$0xff]
    %v1063 = vld [vmem:[%s11 + $0x60] sm:$0xff]
    %v1064 = vld [vmem:[%s11 + $0x68] sm:$0xff]
    %v1065 = vld [vmem:[%s11 + $0x70] sm:$0xff]
    %v1066 = vld [vmem:[%s11 + $0x78] sm:$0xff]
    %v1067 = vld [vmem:[%s11 + $0x80] sm:$0xff]
    %v1068 = vld [vmem:[%s11 + $0x88] sm:$0xff]
    %v1069 = vld [vmem:[%s11 + $0x90] sm:$0xff]
    %v1070 = vld [vmem:[%s11 + $0x98] sm:$0xff]
    %v1071 = vld [vmem:[%s11 + $0xa0] sm:$0xff]
    %v1072 = vld [vmem:[%s11 + $0xa8] sm:$0xff]
    %v1073 = vld [vmem:[%s11 + $0xb0] sm:$0xff]
    %v1074 = vld [vmem:[%s11 + $0xb8] sm:$0xff]
    %v1075 = vld [vmem:[%s11 + $0xc0] sm:$0xff]
    %v1076 = vld [vmem:[%s11 + $0xc8] sm:$0xff]
    %v1077 = vld [vmem:[%s11 + $0xd0] sm:$0xff]
    %v1078 = vld [vmem:[%s11 + $0xd8] sm:$0xff]
    %v1079 = vld [vmem:[%s11 + $0xe0] sm:$0xff]
    %v1080 = vld [vmem:[%s11 + $0xe8] sm:$0xff]
    %v1081 = vld [vmem:[%s11 + $0xf0] sm:$0xff]
    %v1082 = vld [vmem:[%s11 + $0xf8] sm:$0xff]
    %v1083 = vld [vmem:[%s11 + $0x100] sm:$0xff]
    %v1084 = vld [vmem:[%s11 + $0x108] sm:$0xff]
    %v1085 = vld [vmem:[%s11 + $0x110] sm:$0xff]
    %v1086 = vld [vmem:[%s11 + $0x118] sm:$0xff]
    %v1087 = vld [vmem:[%s11 + $0x120] sm:$0xff]
    %v1088 = vld [vmem:[%s11 + $0x128] sm:$0xff]
    %v1089 = vld [vmem:[%s11 + $0x130] sm:$0xff]
    %v1090 = vld [vmem:[%s11 + $0x138] sm:$0xff]
    %v1091 = vld [vmem:[%s11 + $0x140] sm:$0xff]
    %v1092 = vld [vmem:[%s11 + $0x148] sm:$0xff]
    %v1093 = vld [vmem:[%s11 + $0x150] sm:$0xff]
    %v1094 = vld [vmem:[%s11 + $0x158] sm:$0xff]
    %v1095 = vld [vmem:[%s11 + $0x160] sm:$0xff]
    %v1096 = vld [vmem:[%s11 + $0x168] sm:$0xff]
    %v1097 = vld [vmem:[%s11 + $0x170] sm:$0xff]
    %v1098 = vld [vmem:[%s11 + $0x178] sm:$0xff]
    %v1099 = vld [vmem:[%s11 + $0x180] sm:$0xff]
    %v1100 = vld [vmem:[%s11 + $0x188] sm:$0xff]
    %v1101 = vld [vmem:[%s11 + $0x190] sm:$0xff]
    %v1102 = vld [vmem:[%s11 + $0x198] sm:$0xff]
    %v1103 = vld [vmem:[%s11 + $0x1a0] sm:$0xff]
    %v1104 = vld [vmem:[%s11 + $0x1a8] sm:$0xff]
    %v1105 = vld [vmem:[%s11 + $0x1b0] sm:$0xff]
    %v1106 = vld [vmem:[%s11 + $0x1b8] sm:$0xff]
    %v1107 = vld [vmem:[%s11 + $0x1c0] sm:$0xff]
    %v1108 = vld [vmem:[%s11 + $0x1c8] sm:$0xff]
    %v1109 = vld [vmem:[%s11 + $0x1d0] sm:$0xff]
    %v1110 = vld [vmem:[%s11 + $0x1d8] sm:$0xff]
    %v1111 = vld [vmem:[%s11 + $0x1e0] sm:$0xff]
    %v1112 = vld [vmem:[%s11 + $0x1e8] sm:$0xff]
    %v1113 = vld [vmem:[%s11 + $0x1f0] sm:$0xff]
    %v1114 = vld [vmem:[%s11 + $0x1f8] sm:$0xff]
    %v1115 = vld [vmem:[%s11 + $0x200] sm:$0xff]
    %v1116 = vld [vmem:[%s11 + $0x208] sm:$0xff]
    %v1117 = vld [vmem:[%s11 + $0x210] sm:$0xff]
    %v1118 = vld [vmem:[%s11 + $0x218] sm:$0xff]
    %v1119 = vld [vmem:[%s11 + $0x220] sm:$0xff]
    %v1120 = vld [vmem:[%s11 + $0x228] sm:$0xff]
    %v1121 = vld [vmem:[%s11 + $0x230] sm:$0xff]
    %v1122 = vld [vmem:[%s11 + $0x238] sm:$0xff]
    %v1123 = vld [vmem:[%s11 + $0x240] sm:$0xff]
    %v1124 = vld [vmem:[%s11 + $0x248] sm:$0xff]
    %v1125 = vld [vmem:[%s11 + $0x250] sm:$0xff]
    %v1126 = vld [vmem:[%s11 + $0x258] sm:$0xff]
    %v1127 = vld [vmem:[%s11 + $0x260] sm:$0xff]
    %v1128 = vld [vmem:[%s11 + $0x268] sm:$0xff]
    %v1129 = vld [vmem:[%s11 + $0x270] sm:$0xff]
    %v1130 = vld [vmem:[%s11 + $0x278] sm:$0xff]
    %v1131 = vld [vmem:[%s11 + $0x280] sm:$0xff]
    %v1132 = vld [vmem:[%s11 + $0x288] sm:$0xff]
    %v1133 = vld [vmem:[%s11 + $0x290] sm:$0xff]
    %v1134 = vld [vmem:[%s11 + $0x298] sm:$0xff]
    %v1135 = vld [vmem:[%s11 + $0x2a0] sm:$0xff]
    %v1136 = vld [vmem:[%s11 + $0x2a8] sm:$0xff]
    %v1137 = vld [vmem:[%s11 + $0x2b0] sm:$0xff]
    %v1138 = vld [vmem:[%s11 + $0x2b8] sm:$0xff]
    %v1139 = vld [vmem:[%s11 + $0x2c0] sm:$0xff]
    %v1140 = vld [vmem:[%s11 + $0x2c8] sm:$0xff]
    %v1141 = vld [vmem:[%s11 + $0x2d0] sm:$0xff]
    %v1142 = vld [vmem:[%s11 + $0x2d8] sm:$0xff]
    %v1143 = vld [vmem:[%s11 + $0x2e0] sm:$0xff]
    %v1144 = vld [vmem:[%s11 + $0x2e8] sm:$0xff]
    %v1145 = vld [vmem:[%s11 + $0x2f0] sm:$0xff]
    %v1146 = vld [vmem:[%s11 + $0x2f8] sm:$0xff]
    %v1147 = vld [vmem:[%s11 + $0x300] sm:$0xff]
    %v1148 = vld [vmem:[%s11 + $0x308] sm:$0xff]
    %v1149 = vld [vmem:[%s11 + $0x310] sm:$0xff]
    %v1150 = vld [vmem:[%s11 + $0x318] sm:$0xff]
    %v1151 = vld [vmem:[%s11 + $0x320] sm:$0xff]
    %v1152 = vld [vmem:[%s11 + $0x328] sm:$0xff]
    %v1153 = vld [vmem:[%s11 + $0x330] sm:$0xff]
    %v1154 = vld [vmem:[%s11 + $0x338] sm:$0xff]
    %v1155 = vld [vmem:[%s11 + $0x340] sm:$0xff]
    %v1156 = vld [vmem:[%s11 + $0x348] sm:$0xff]
    %v1157 = vld [vmem:[%s11 + $0x350] sm:$0xff]
    %v1158 = vld [vmem:[%s11 + $0x358] sm:$0xff]
    %v1159 = vld [vmem:[%s11 + $0x360] sm:$0xff]
    %v1160 = vld [vmem:[%s11 + $0x368] sm:$0xff]
    %v1161 = vld [vmem:[%s11 + $0x370] sm:$0xff]
    %v1162 = vld [vmem:[%s11 + $0x378] sm:$0xff]
    %v1163 = vld [vmem:[%s11 + $0x380] sm:$0xff]
    %v1164 = vld [vmem:[%s11 + $0x388] sm:$0xff]
    %v1165 = vld [vmem:[%s11 + $0x390] sm:$0xff]
    %v1166 = vld [vmem:[%s11 + $0x398] sm:$0xff]
    %v1167 = vld [vmem:[%s11 + $0x3a0] sm:$0xff]
    %v1168 = vld [vmem:[%s11 + $0x3a8] sm:$0xff]
    %v1169 = vld [vmem:[%s11 + $0x3b0] sm:$0xff]
    %v1170 = vld [vmem:[%s11 + $0x3b8] sm:$0xff]
    %v1171 = vld [vmem:[%s11 + $0x3c0] sm:$0xff]
    %v1172 = vld [vmem:[%s11 + $0x3c8] sm:$0xff]
    %v1173 = vld [vmem:[%s11 + $0x3d0] sm:$0xff]
    %v1174 = vld [vmem:[%s11 + $0x3d8] sm:$0xff]
    %v1175 = vld [vmem:[%s11 + $0x3e0] sm:$0xff]
    %v1176 = vld [vmem:[%s11 + $0x3e8] sm:$0xff]
    %v1177 = vld [vmem:[%s11 + $0x3f0] sm:$0xff]
    %v1178 = vld [vmem:[%s11 + $0x3f8] sm:$0xff]
    %v1179 = vunpack.c.l.bf16 %v1051
    %v1180 = vunpack.c.h.bf16 %v1051
    %v1181 = vunpack.c.l.bf16 %v1052
    %v1182 = vunpack.c.h.bf16 %v1052
    %v1183 = vunpack.c.l.bf16 %v1053
    %v1184 = vunpack.c.h.bf16 %v1053
    %v1185 = vunpack.c.l.bf16 %v1054
    %v1186 = vunpack.c.h.bf16 %v1054
    %v1187 = vunpack.c.l.bf16 %v1055
    %v1188 = vunpack.c.h.bf16 %v1055
    %v1189 = vunpack.c.l.bf16 %v1056
    %v1190 = vunpack.c.h.bf16 %v1056
    %v1191 = vunpack.c.l.bf16 %v1057
    %v1192 = vunpack.c.h.bf16 %v1057
    %v1193 = vunpack.c.l.bf16 %v1058
    %v1194 = vunpack.c.h.bf16 %v1058
    %v1195 = vunpack.c.l.bf16 %v1059
    %v1196 = vunpack.c.h.bf16 %v1059
    %v1197 = vunpack.c.l.bf16 %v1060
    %v1198 = vunpack.c.h.bf16 %v1060
    %v1199 = vunpack.c.l.bf16 %v1061
    %v1200 = vunpack.c.h.bf16 %v1061
    %v1201 = vunpack.c.l.bf16 %v1062
    %v1202 = vunpack.c.h.bf16 %v1062
    %v1203 = vunpack.c.l.bf16 %v1063
    %v1204 = vunpack.c.h.bf16 %v1063
    %v1205 = vunpack.c.l.bf16 %v1064
    %v1206 = vunpack.c.h.bf16 %v1064
    %v1207 = vunpack.c.l.bf16 %v1065
    %v1208 = vunpack.c.h.bf16 %v1065
    %v1209 = vunpack.c.l.bf16 %v1066
    %v1210 = vunpack.c.h.bf16 %v1066
    %v1211 = vunpack.c.l.bf16 %v1067
    %v1212 = vunpack.c.h.bf16 %v1067
    %v1213 = vunpack.c.l.bf16 %v1068
    %v1214 = vunpack.c.h.bf16 %v1068
    %v1215 = vunpack.c.l.bf16 %v1069
    %v1216 = vunpack.c.h.bf16 %v1069
    %v1217 = vunpack.c.l.bf16 %v1070
    %v1218 = vunpack.c.h.bf16 %v1070
    %v1219 = vunpack.c.l.bf16 %v1071
    %v1220 = vunpack.c.h.bf16 %v1071
    %v1221 = vunpack.c.l.bf16 %v1072
    %v1222 = vunpack.c.h.bf16 %v1072
    %v1223 = vunpack.c.l.bf16 %v1073
    %v1224 = vunpack.c.h.bf16 %v1073
    %v1225 = vunpack.c.l.bf16 %v1074
    %v1226 = vunpack.c.h.bf16 %v1074
    %v1227 = vunpack.c.l.bf16 %v1075
    %v1228 = vunpack.c.h.bf16 %v1075
    %v1229 = vunpack.c.l.bf16 %v1076
    %v1230 = vunpack.c.h.bf16 %v1076
    %v1231 = vunpack.c.l.bf16 %v1077
    %v1232 = vunpack.c.h.bf16 %v1077
    %v1233 = vunpack.c.l.bf16 %v1078
    %v1234 = vunpack.c.h.bf16 %v1078
    %v1235 = vunpack.c.l.bf16 %v1079
    %v1236 = vunpack.c.h.bf16 %v1079
    %v1237 = vunpack.c.l.bf16 %v1080
    %v1238 = vunpack.c.h.bf16 %v1080
    %v1239 = vunpack.c.l.bf16 %v1081
    %v1240 = vunpack.c.h.bf16 %v1081
    %v1241 = vunpack.c.l.bf16 %v1082
    %v1242 = vunpack.c.h.bf16 %v1082
    %v1243 = vunpack.c.l.bf16 %v1083
    %v1244 = vunpack.c.h.bf16 %v1083
    %v1245 = vunpack.c.l.bf16 %v1084
    %v1246 = vunpack.c.h.bf16 %v1084
    %v1247 = vunpack.c.l.bf16 %v1085
    %v1248 = vunpack.c.h.bf16 %v1085
    %v1249 = vunpack.c.l.bf16 %v1086
    %v1250 = vunpack.c.h.bf16 %v1086
    %v1251 = vunpack.c.l.bf16 %v1087
    %v1252 = vunpack.c.h.bf16 %v1087
    %v1253 = vunpack.c.l.bf16 %v1088
    %v1254 = vunpack.c.h.bf16 %v1088
    %v1255 = vunpack.c.l.bf16 %v1089
    %v1256 = vunpack.c.h.bf16 %v1089
    %v1257 = vunpack.c.l.bf16 %v1090
    %v1258 = vunpack.c.h.bf16 %v1090
    %v1259 = vunpack.c.l.bf16 %v1091
    %v1260 = vunpack.c.h.bf16 %v1091
    %v1261 = vunpack.c.l.bf16 %v1092
    %v1262 = vunpack.c.h.bf16 %v1092
    %v1263 = vunpack.c.l.bf16 %v1093
    %v1264 = vunpack.c.h.bf16 %v1093
    %v1265 = vunpack.c.l.bf16 %v1094
    %v1266 = vunpack.c.h.bf16 %v1094
    %v1267 = vunpack.c.l.bf16 %v1095
    %v1268 = vunpack.c.h.bf16 %v1095
    %v1269 = vunpack.c.l.bf16 %v1096
    %v1270 = vunpack.c.h.bf16 %v1096
    %v1271 = vunpack.c.l.bf16 %v1097
    %v1272 = vunpack.c.h.bf16 %v1097
    %v1273 = vunpack.c.l.bf16 %v1098
    %v1274 = vunpack.c.h.bf16 %v1098
    %v1275 = vunpack.c.l.bf16 %v1099
    %v1276 = vunpack.c.h.bf16 %v1099
    %v1277 = vunpack.c.l.bf16 %v1100
    %v1278 = vunpack.c.h.bf16 %v1100
    %v1279 = vunpack.c.l.bf16 %v1101
    %v1280 = vunpack.c.h.bf16 %v1101
    %v1281 = vunpack.c.l.bf16 %v1102
    %v1282 = vunpack.c.h.bf16 %v1102
    %v1283 = vunpack.c.l.bf16 %v1103
    %v1284 = vunpack.c.h.bf16 %v1103
    %v1285 = vunpack.c.l.bf16 %v1104
    %v1286 = vunpack.c.h.bf16 %v1104
    %v1287 = vunpack.c.l.bf16 %v1105
    %v1288 = vunpack.c.h.bf16 %v1105
    %v1289 = vunpack.c.l.bf16 %v1106
    %v1290 = vunpack.c.h.bf16 %v1106
    %v1291 = vunpack.c.l.bf16 %v1107
    %v1292 = vunpack.c.h.bf16 %v1107
    %v1293 = vunpack.c.l.bf16 %v1108
    %v1294 = vunpack.c.h.bf16 %v1108
    %v1295 = vunpack.c.l.bf16 %v1109
    %v1296 = vunpack.c.h.bf16 %v1109
    %v1297 = vunpack.c.l.bf16 %v1110
    %v1298 = vunpack.c.h.bf16 %v1110
    %v1299 = vunpack.c.l.bf16 %v1111
    %v1300 = vunpack.c.h.bf16 %v1111
    %v1301 = vunpack.c.l.bf16 %v1112
    %v1302 = vunpack.c.h.bf16 %v1112
    %v1303 = vunpack.c.l.bf16 %v1113
    %v1304 = vunpack.c.h.bf16 %v1113
    %v1305 = vunpack.c.l.bf16 %v1114
    %v1306 = vunpack.c.h.bf16 %v1114
    %v1307 = vunpack.c.l.bf16 %v1115
    %v1308 = vunpack.c.h.bf16 %v1115
    %v1309 = vunpack.c.l.bf16 %v1116
    %v1310 = vunpack.c.h.bf16 %v1116
    %v1311 = vunpack.c.l.bf16 %v1117
    %v1312 = vunpack.c.h.bf16 %v1117
    %v1313 = vunpack.c.l.bf16 %v1118
    %v1314 = vunpack.c.h.bf16 %v1118
    %v1315 = vunpack.c.l.bf16 %v1119
    %v1316 = vunpack.c.h.bf16 %v1119
    %v1317 = vunpack.c.l.bf16 %v1120
    %v1318 = vunpack.c.h.bf16 %v1120
    %v1319 = vunpack.c.l.bf16 %v1121
    %v1320 = vunpack.c.h.bf16 %v1121
    %v1321 = vunpack.c.l.bf16 %v1122
    %v1322 = vunpack.c.h.bf16 %v1122
    %v1323 = vunpack.c.l.bf16 %v1123
    %v1324 = vunpack.c.h.bf16 %v1123
    %v1325 = vunpack.c.l.bf16 %v1124
    %v1326 = vunpack.c.h.bf16 %v1124
    %v1327 = vunpack.c.l.bf16 %v1125
    %v1328 = vunpack.c.h.bf16 %v1125
    %v1329 = vunpack.c.l.bf16 %v1126
    %v1330 = vunpack.c.h.bf16 %v1126
    %v1331 = vunpack.c.l.bf16 %v1127
    %v1332 = vunpack.c.h.bf16 %v1127
    %v1333 = vunpack.c.l.bf16 %v1128
    %v1334 = vunpack.c.h.bf16 %v1128
    %v1335 = vunpack.c.l.bf16 %v1129
    %v1336 = vunpack.c.h.bf16 %v1129
    %v1337 = vunpack.c.l.bf16 %v1130
    %v1338 = vunpack.c.h.bf16 %v1130
    %v1339 = vunpack.c.l.bf16 %v1131
    %v1340 = vunpack.c.h.bf16 %v1131
    %v1341 = vunpack.c.l.bf16 %v1132
    %v1342 = vunpack.c.h.bf16 %v1132
    %v1343 = vunpack.c.l.bf16 %v1133
    %v1344 = vunpack.c.h.bf16 %v1133
    %v1345 = vunpack.c.l.bf16 %v1134
    %v1346 = vunpack.c.h.bf16 %v1134
    %v1347 = vunpack.c.l.bf16 %v1135
    %v1348 = vunpack.c.h.bf16 %v1135
    %v1349 = vunpack.c.l.bf16 %v1136
    %v1350 = vunpack.c.h.bf16 %v1136
    %v1351 = vunpack.c.l.bf16 %v1137
    %v1352 = vunpack.c.h.bf16 %v1137
    %v1353 = vunpack.c.l.bf16 %v1138
    %v1354 = vunpack.c.h.bf16 %v1138
    %v1355 = vunpack.c.l.bf16 %v1139
    %v1356 = vunpack.c.h.bf16 %v1139
    %v1357 = vunpack.c.l.bf16 %v1140
    %v1358 = vunpack.c.h.bf16 %v1140
    %v1359 = vunpack.c.l.bf16 %v1141
    %v1360 = vunpack.c.h.bf16 %v1141
    %v1361 = vunpack.c.l.bf16 %v1142
    %v1362 = vunpack.c.h.bf16 %v1142
    %v1363 = vunpack.c.l.bf16 %v1143
    %v1364 = vunpack.c.h.bf16 %v1143
    %v1365 = vunpack.c.l.bf16 %v1144
    %v1366 = vunpack.c.h.bf16 %v1144
    %v1367 = vunpack.c.l.bf16 %v1145
    %v1368 = vunpack.c.h.bf16 %v1145
    %v1369 = vunpack.c.l.bf16 %v1146
    %v1370 = vunpack.c.h.bf16 %v1146
    %v1371 = vunpack.c.l.bf16 %v1147
    %v1372 = vunpack.c.h.bf16 %v1147
    %v1373 = vunpack.c.l.bf16 %v1148
    %v1374 = vunpack.c.h.bf16 %v1148
    %v1375 = vunpack.c.l.bf16 %v1149
    %v1376 = vunpack.c.h.bf16 %v1149
    %v1377 = vunpack.c.l.bf16 %v1150
    %v1378 = vunpack.c.h.bf16 %v1150
    %v1379 = vunpack.c.l.bf16 %v1151
    %v1380 = vunpack.c.h.bf16 %v1151
    %v1381 = vunpack.c.l.bf16 %v1152
    %v1382 = vunpack.c.h.bf16 %v1152
    %v1383 = vunpack.c.l.bf16 %v1153
    %v1384 = vunpack.c.h.bf16 %v1153
    %v1385 = vunpack.c.l.bf16 %v1154
    %v1386 = vunpack.c.h.bf16 %v1154
    %v1387 = vunpack.c.l.bf16 %v1155
    %v1388 = vunpack.c.h.bf16 %v1155
    %v1389 = vunpack.c.l.bf16 %v1156
    %v1390 = vunpack.c.h.bf16 %v1156
    %v1391 = vunpack.c.l.bf16 %v1157
    %v1392 = vunpack.c.h.bf16 %v1157
    %v1393 = vunpack.c.l.bf16 %v1158
    %v1394 = vunpack.c.h.bf16 %v1158
    %v1395 = vunpack.c.l.bf16 %v1159
    %v1396 = vunpack.c.h.bf16 %v1159
    %v1397 = vunpack.c.l.bf16 %v1160
    %v1398 = vunpack.c.h.bf16 %v1160
    %v1399 = vunpack.c.l.bf16 %v1161
    %v1400 = vunpack.c.h.bf16 %v1161
    %v1401 = vunpack.c.l.bf16 %v1162
    %v1402 = vunpack.c.h.bf16 %v1162
    %v1403 = vunpack.c.l.bf16 %v1163
    %v1404 = vunpack.c.h.bf16 %v1163
    %v1405 = vunpack.c.l.bf16 %v1164
    %v1406 = vunpack.c.h.bf16 %v1164
    %v1407 = vunpack.c.l.bf16 %v1165
    %v1408 = vunpack.c.h.bf16 %v1165
    %v1409 = vunpack.c.l.bf16 %v1166
    %v1410 = vunpack.c.h.bf16 %v1166
    %v1411 = vunpack.c.l.bf16 %v1167
    %v1412 = vunpack.c.h.bf16 %v1167
    %v1413 = vunpack.c.l.bf16 %v1168
    %v1414 = vunpack.c.h.bf16 %v1168
    %v1415 = vunpack.c.l.bf16 %v1169
    %v1416 = vunpack.c.h.bf16 %v1169
    %v1417 = vunpack.c.l.bf16 %v1170
    %v1418 = vunpack.c.h.bf16 %v1170
    %v1419 = vunpack.c.l.bf16 %v1171
    %v1420 = vunpack.c.h.bf16 %v1171
    %v1421 = vunpack.c.l.bf16 %v1172
    %v1422 = vunpack.c.h.bf16 %v1172
    %v1423 = vunpack.c.l.bf16 %v1173
    %v1424 = vunpack.c.h.bf16 %v1173
    %v1425 = vunpack.c.l.bf16 %v1174
    %v1426 = vunpack.c.h.bf16 %v1174
    %v1427 = vunpack.c.l.bf16 %v1175
    %v1428 = vunpack.c.h.bf16 %v1175
    %v1429 = vunpack.c.l.bf16 %v1176
    %v1430 = vunpack.c.h.bf16 %v1176
    %v1431 = vunpack.c.l.bf16 %v1177
    %v1432 = vunpack.c.h.bf16 %v1177
    %v1433 = vunpack.c.l.bf16 %v1178
    %v1434 = vunpack.c.h.bf16 %v1178
    %v1435 = vld [vmem:[#allocation10] sm:$0xf]
    %v1437 = vperm.slane %v1435, 0
    %v1438 = vperm.slane %v1435, 1
    %v1439 = vperm.slane %v1435, 2
    %v1440 = vperm.slane %v1435, 3
    %1445 = vmatpush.msra.mxu0 %v1239
    %1446 = vmatpush.msra.mxu0 %v1235
    %1447 = vmatpush.msra.mxu0 %v1231
    %1448 = vmatpush.msra.mxu0 %v1227
    %1449 = vmatpush.msra.mxu0 %v1223
    %1450 = vmatpush.msra.mxu0 %v1219
    %1451 = vmatpush.msra.mxu0 %v1215
    %1452 = vmatpush.msra.mxu0 %v1211
    %1453 = vmatpush.msra.mxu0 %v1207
    %1454 = vmatpush.msra.mxu0 %v1203
    %1455 = vmatpush.msra.mxu0 %v1199
    %1456 = vmatpush.msra.mxu0 %v1195
    %1457 = vmatpush.msra.mxu0 %v1191
    %1458 = vmatpush.msra.mxu0 %v1187
    %1459 = vmatpush.msra.mxu0 %v1183
    %1460 = vmatpush.msra.mxu0 %v1179
    %1461 = vmatmul.f32.gmra.mxu0 %v833
    %v1462 = vpop.f32.mrf.mxu0
    %v1463 = vadd.f32 %v1437, %v1462
    %1464 = vdwg.mxu0
    %1465 = vmatpush.msra.mxu0 %v1303
    %1466 = vmatpush.msra.mxu0 %v1299
    %1467 = vmatpush.msra.mxu0 %v1295
    %1468 = vmatpush.msra.mxu0 %v1291
    %1469 = vmatpush.msra.mxu0 %v1287
    %1470 = vmatpush.msra.mxu0 %v1283
    %1471 = vmatpush.msra.mxu0 %v1279
    %1472 = vmatpush.msra.mxu0 %v1275
    %1473 = vmatpush.msra.mxu0 %v1271
    %1474 = vmatpush.msra.mxu0 %v1267
    %1475 = vmatpush.msra.mxu0 %v1263
    %1476 = vmatpush.msra.mxu0 %v1259
    %1477 = vmatpush.msra.mxu0 %v1255
    %1478 = vmatpush.msra.mxu0 %v1251
    %1479 = vmatpush.msra.mxu0 %v1247
    %1480 = vmatpush.msra.mxu0 %v1243
    %1481 = vmatmul.f32.gmra.mxu0 %v834
    %v1482 = vpop.f32.mrf.mxu0
    %v1483 = vadd.f32 %v1463, %v1482
    %1484 = vdwg.mxu0
    %1485 = vmatpush.msra.mxu0 %v1367
    %1486 = vmatpush.msra.mxu0 %v1363
    %1487 = vmatpush.msra.mxu0 %v1359
    %1488 = vmatpush.msra.mxu0 %v1355
    %1489 = vmatpush.msra.mxu0 %v1351
    %1490 = vmatpush.msra.mxu0 %v1347
    %1491 = vmatpush.msra.mxu0 %v1343
    %1492 = vmatpush.msra.mxu0 %v1339
    %1493 = vmatpush.msra.mxu0 %v1335
    %1494 = vmatpush.msra.mxu0 %v1331
    %1495 = vmatpush.msra.mxu0 %v1327
    %1496 = vmatpush.msra.mxu0 %v1323
    %1497 = vmatpush.msra.mxu0 %v1319
    %1498 = vmatpush.msra.mxu0 %v1315
    %1499 = vmatpush.msra.mxu0 %v1311
    %1500 = vmatpush.msra.mxu0 %v1307
    %1501 = vmatmul.f32.gmra.mxu0 %v835
    %v1502 = vpop.f32.mrf.mxu0
    %v1503 = vadd.f32 %v1483, %v1502
    %1504 = vdwg.mxu0
    %1505 = vmatpush.msra.mxu0 %v1431
    %1506 = vmatpush.msra.mxu0 %v1427
    %1507 = vmatpush.msra.mxu0 %v1423
    %1508 = vmatpush.msra.mxu0 %v1419
    %1509 = vmatpush.msra.mxu0 %v1415
    %1510 = vmatpush.msra.mxu0 %v1411
    %1511 = vmatpush.msra.mxu0 %v1407
    %1512 = vmatpush.msra.mxu0 %v1403
    %1513 = vmatpush.msra.mxu0 %v1399
    %1514 = vmatpush.msra.mxu0 %v1395
    %1515 = vmatpush.msra.mxu0 %v1391
    %1516 = vmatpush.msra.mxu0 %v1387
    %1517 = vmatpush.msra.mxu0 %v1383
    %1518 = vmatpush.msra.mxu0 %v1379
    %1519 = vmatpush.msra.mxu0 %v1375
    %1520 = vmatpush.msra.mxu0 %v1371
    %1521 = vmatmul.f32.gmra.mxu0 %v836
    %v1522 = vpop.f32.mrf.mxu0
    %v1523 = vadd.f32 %v1503, %v1522
    %1524 = vdwg.mxu0
    %1525 = vmatpush.msra.mxu0 %v1240
    %1526 = vmatpush.msra.mxu0 %v1236
    %1527 = vmatpush.msra.mxu0 %v1232
    %1528 = vmatpush.msra.mxu0 %v1228
    %1529 = vmatpush.msra.mxu0 %v1224
    %1530 = vmatpush.msra.mxu0 %v1220
    %1531 = vmatpush.msra.mxu0 %v1216
    %1532 = vmatpush.msra.mxu0 %v1212
    %1533 = vmatpush.msra.mxu0 %v1208
    %1534 = vmatpush.msra.mxu0 %v1204
    %1535 = vmatpush.msra.mxu0 %v1200
    %1536 = vmatpush.msra.mxu0 %v1196
    %1537 = vmatpush.msra.mxu0 %v1192
    %1538 = vmatpush.msra.mxu0 %v1188
    %1539 = vmatpush.msra.mxu0 %v1184
    %1540 = vmatpush.msra.mxu0 %v1180
    %1541 = vmatmul.f32.gmra.mxu0 %v833
    %v1542 = vpop.f32.mrf.mxu0
    %v1543 = vadd.f32 %v1438, %v1542
    %1544 = vdwg.mxu0
    %1545 = vmatpush.msra.mxu0 %v1304
    %1546 = vmatpush.msra.mxu0 %v1300
    %1547 = vmatpush.msra.mxu0 %v1296
    %1548 = vmatpush.msra.mxu0 %v1292
    %1549 = vmatpush.msra.mxu0 %v1288
    %1550 = vmatpush.msra.mxu0 %v1284
    %1551 = vmatpush.msra.mxu0 %v1280
    %1552 = vmatpush.msra.mxu0 %v1276
    %1553 = vmatpush.msra.mxu0 %v1272
    %1554 = vmatpush.msra.mxu0 %v1268
    %1555 = vmatpush.msra.mxu0 %v1264
    %1556 = vmatpush.msra.mxu0 %v1260
    %1557 = vmatpush.msra.mxu0 %v1256
    %1558 = vmatpush.msra.mxu0 %v1252
    %1559 = vmatpush.msra.mxu0 %v1248
    %1560 = vmatpush.msra.mxu0 %v1244
    %1561 = vmatmul.f32.gmra.mxu0 %v834
    %v1562 = vpop.f32.mrf.mxu0
    %v1563 = vadd.f32 %v1543, %v1562
    %1564 = vdwg.mxu0
    %1565 = vmatpush.msra.mxu0 %v1368
    %1566 = vmatpush.msra.mxu0 %v1364
    %1567 = vmatpush.msra.mxu0 %v1360
    %1568 = vmatpush.msra.mxu0 %v1356
    %1569 = vmatpush.msra.mxu0 %v1352
    %1570 = vmatpush.msra.mxu0 %v1348
    %1571 = vmatpush.msra.mxu0 %v1344
    %1572 = vmatpush.msra.mxu0 %v1340
    %1573 = vmatpush.msra.mxu0 %v1336
    %1574 = vmatpush.msra.mxu0 %v1332
    %1575 = vmatpush.msra.mxu0 %v1328
    %1576 = vmatpush.msra.mxu0 %v1324
    %1577 = vmatpush.msra.mxu0 %v1320
    %1578 = vmatpush.msra.mxu0 %v1316
    %1579 = vmatpush.msra.mxu0 %v1312
    %1580 = vmatpush.msra.mxu0 %v1308
    %1581 = vmatmul.f32.gmra.mxu0 %v835
    %v1582 = vpop.f32.mrf.mxu0
    %v1583 = vadd.f32 %v1563, %v1582
    %1584 = vdwg.mxu0
    %1585 = vmatpush.msra.mxu0 %v1432
    %1586 = vmatpush.msra.mxu0 %v1428
    %1587 = vmatpush.msra.mxu0 %v1424
    %1588 = vmatpush.msra.mxu0 %v1420
    %1589 = vmatpush.msra.mxu0 %v1416
    %1590 = vmatpush.msra.mxu0 %v1412
    %1591 = vmatpush.msra.mxu0 %v1408
    %1592 = vmatpush.msra.mxu0 %v1404
    %1593 = vmatpush.msra.mxu0 %v1400
    %1594 = vmatpush.msra.mxu0 %v1396
    %1595 = vmatpush.msra.mxu0 %v1392
    %1596 = vmatpush.msra.mxu0 %v1388
    %1597 = vmatpush.msra.mxu0 %v1384
    %1598 = vmatpush.msra.mxu0 %v1380
    %1599 = vmatpush.msra.mxu0 %v1376
    %1600 = vmatpush.msra.mxu0 %v1372
    %1601 = vmatmul.f32.gmra.mxu0 %v836
    %v1602 = vpop.f32.mrf.mxu0
    %v1603 = vadd.f32 %v1583, %v1602
    %1604 = vdwg.mxu0
    %1605 = vmatpush.msra.mxu0 %v1241
    %1606 = vmatpush.msra.mxu0 %v1237
    %1607 = vmatpush.msra.mxu0 %v1233
    %1608 = vmatpush.msra.mxu0 %v1229
    %1609 = vmatpush.msra.mxu0 %v1225
    %1610 = vmatpush.msra.mxu0 %v1221
    %1611 = vmatpush.msra.mxu0 %v1217
    %1612 = vmatpush.msra.mxu0 %v1213
    %1613 = vmatpush.msra.mxu0 %v1209
    %1614 = vmatpush.msra.mxu0 %v1205
    %1615 = vmatpush.msra.mxu0 %v1201
    %1616 = vmatpush.msra.mxu0 %v1197
    %1617 = vmatpush.msra.mxu0 %v1193
    %1618 = vmatpush.msra.mxu0 %v1189
    %1619 = vmatpush.msra.mxu0 %v1185
    %1620 = vmatpush.msra.mxu0 %v1181
    %1621 = vmatmul.f32.gmra.mxu0 %v833
    %v1622 = vpop.f32.mrf.mxu0
    %v1623 = vadd.f32 %v1439, %v1622
    %1624 = vdwg.mxu0
    %1625 = vmatpush.msra.mxu0 %v1305
    %1626 = vmatpush.msra.mxu0 %v1301
    %1627 = vmatpush.msra.mxu0 %v1297
    %1628 = vmatpush.msra.mxu0 %v1293
    %1629 = vmatpush.msra.mxu0 %v1289
    %1630 = vmatpush.msra.mxu0 %v1285
    %1631 = vmatpush.msra.mxu0 %v1281
    %1632 = vmatpush.msra.mxu0 %v1277
    %1633 = vmatpush.msra.mxu0 %v1273
    %1634 = vmatpush.msra.mxu0 %v1269
    %1635 = vmatpush.msra.mxu0 %v1265
    %1636 = vmatpush.msra.mxu0 %v1261
    %1637 = vmatpush.msra.mxu0 %v1257
    %1638 = vmatpush.msra.mxu0 %v1253
    %1639 = vmatpush.msra.mxu0 %v1249
    %1640 = vmatpush.msra.mxu0 %v1245
    %1641 = vmatmul.f32.gmra.mxu0 %v834
    %v1642 = vpop.f32.mrf.mxu0
    %v1643 = vadd.f32 %v1623, %v1642
    %1644 = vdwg.mxu0
    %1645 = vmatpush.msra.mxu0 %v1369
    %1646 = vmatpush.msra.mxu0 %v1365
    %1647 = vmatpush.msra.mxu0 %v1361
    %1648 = vmatpush.msra.mxu0 %v1357
    %1649 = vmatpush.msra.mxu0 %v1353
    %1650 = vmatpush.msra.mxu0 %v1349
    %1651 = vmatpush.msra.mxu0 %v1345
    %1652 = vmatpush.msra.mxu0 %v1341
    %1653 = vmatpush.msra.mxu0 %v1337
    %1654 = vmatpush.msra.mxu0 %v1333
    %1655 = vmatpush.msra.mxu0 %v1329
    %1656 = vmatpush.msra.mxu0 %v1325
    %1657 = vmatpush.msra.mxu0 %v1321
    %1658 = vmatpush.msra.mxu0 %v1317
    %1659 = vmatpush.msra.mxu0 %v1313
    %1660 = vmatpush.msra.mxu0 %v1309
    %1661 = vmatmul.f32.gmra.mxu0 %v835
    %v1662 = vpop.f32.mrf.mxu0
    %v1663 = vadd.f32 %v1643, %v1662
    %1664 = vdwg.mxu0
    %1665 = vmatpush.msra.mxu0 %v1433
    %1666 = vmatpush.msra.mxu0 %v1429
    %1667 = vmatpush.msra.mxu0 %v1425
    %1668 = vmatpush.msra.mxu0 %v1421
    %1669 = vmatpush.msra.mxu0 %v1417
    %1670 = vmatpush.msra.mxu0 %v1413
    %1671 = vmatpush.msra.mxu0 %v1409
    %1672 = vmatpush.msra.mxu0 %v1405
    %1673 = vmatpush.msra.mxu0 %v1401
    %1674 = vmatpush.msra.mxu0 %v1397
    %1675 = vmatpush.msra.mxu0 %v1393
    %1676 = vmatpush.msra.mxu0 %v1389
    %1677 = vmatpush.msra.mxu0 %v1385
    %1678 = vmatpush.msra.mxu0 %v1381
    %1679 = vmatpush.msra.mxu0 %v1377
    %1680 = vmatpush.msra.mxu0 %v1373
    %1681 = vmatmul.f32.gmra.mxu0 %v836
    %v1682 = vpop.f32.mrf.mxu0
    %v1683 = vadd.f32 %v1663, %v1682
    %1684 = vdwg.mxu0
    %1685 = vmatpush.msra.mxu0 %v1242
    %1686 = vmatpush.msra.mxu0 %v1238
    %1687 = vmatpush.msra.mxu0 %v1234
    %1688 = vmatpush.msra.mxu0 %v1230
    %1689 = vmatpush.msra.mxu0 %v1226
    %1690 = vmatpush.msra.mxu0 %v1222
    %1691 = vmatpush.msra.mxu0 %v1218
    %1692 = vmatpush.msra.mxu0 %v1214
    %1693 = vmatpush.msra.mxu0 %v1210
    %1694 = vmatpush.msra.mxu0 %v1206
    %1695 = vmatpush.msra.mxu0 %v1202
    %1696 = vmatpush.msra.mxu0 %v1198
    %1697 = vmatpush.msra.mxu0 %v1194
    %1698 = vmatpush.msra.mxu0 %v1190
    %1699 = vmatpush.msra.mxu0 %v1186
    %1700 = vmatpush.msra.mxu0 %v1182
    %1701 = vmatmul.f32.gmra.mxu0 %v833
    %v1702 = vpop.f32.mrf.mxu0
    %v1703 = vadd.f32 %v1440, %v1702
    %1704 = vdwg.mxu0
    %1705 = vmatpush.msra.mxu0 %v1306
    %1706 = vmatpush.msra.mxu0 %v1302
    %1707 = vmatpush.msra.mxu0 %v1298
    %1708 = vmatpush.msra.mxu0 %v1294
    %1709 = vmatpush.msra.mxu0 %v1290
    %1710 = vmatpush.msra.mxu0 %v1286
    %1711 = vmatpush.msra.mxu0 %v1282
    %1712 = vmatpush.msra.mxu0 %v1278
    %1713 = vmatpush.msra.mxu0 %v1274
    %1714 = vmatpush.msra.mxu0 %v1270
    %1715 = vmatpush.msra.mxu0 %v1266
    %1716 = vmatpush.msra.mxu0 %v1262
    %1717 = vmatpush.msra.mxu0 %v1258
    %1718 = vmatpush.msra.mxu0 %v1254
    %1719 = vmatpush.msra.mxu0 %v1250
    %1720 = vmatpush.msra.mxu0 %v1246
    %1721 = vmatmul.f32.gmra.mxu0 %v834
    %v1722 = vpop.f32.mrf.mxu0
    %v1723 = vadd.f32 %v1703, %v1722
    %1724 = vdwg.mxu0
    %1725 = vmatpush.msra.mxu0 %v1370
    %1726 = vmatpush.msra.mxu0 %v1366
    %1727 = vmatpush.msra.mxu0 %v1362
    %1728 = vmatpush.msra.mxu0 %v1358
    %1729 = vmatpush.msra.mxu0 %v1354
    %1730 = vmatpush.msra.mxu0 %v1350
    %1731 = vmatpush.msra.mxu0 %v1346
    %1732 = vmatpush.msra.mxu0 %v1342
    %1733 = vmatpush.msra.mxu0 %v1338
    %1734 = vmatpush.msra.mxu0 %v1334
    %1735 = vmatpush.msra.mxu0 %v1330
    %1736 = vmatpush.msra.mxu0 %v1326
    %1737 = vmatpush.msra.mxu0 %v1322
    %1738 = vmatpush.msra.mxu0 %v1318
    %1739 = vmatpush.msra.mxu0 %v1314
    %1740 = vmatpush.msra.mxu0 %v1310
    %1741 = vmatmul.f32.gmra.mxu0 %v835
    %v1742 = vpop.f32.mrf.mxu0
    %v1743 = vadd.f32 %v1723, %v1742
    %1744 = vdwg.mxu0
    %1745 = vmatpush.msra.mxu0 %v1434
    %1746 = vmatpush.msra.mxu0 %v1430
    %1747 = vmatpush.msra.mxu0 %v1426
    %1748 = vmatpush.msra.mxu0 %v1422
    %1749 = vmatpush.msra.mxu0 %v1418
    %1750 = vmatpush.msra.mxu0 %v1414
    %1751 = vmatpush.msra.mxu0 %v1410
    %1752 = vmatpush.msra.mxu0 %v1406
    %1753 = vmatpush.msra.mxu0 %v1402
    %1754 = vmatpush.msra.mxu0 %v1398
    %1755 = vmatpush.msra.mxu0 %v1394
    %1756 = vmatpush.msra.mxu0 %v1390
    %1757 = vmatpush.msra.mxu0 %v1386
    %1758 = vmatpush.msra.mxu0 %v1382
    %1759 = vmatpush.msra.mxu0 %v1378
    %1760 = vmatpush.msra.mxu0 %v1374
    %1761 = vmatmul.f32.gmra.mxu0 %v836
    %v1762 = vpop.f32.mrf.mxu0
    %v1763 = vadd.f32 %v1743, %v1762
    %1764 = vdwg.mxu0
    %v1765 = vld [vmem:[#allocation16] sm:$0xff]
    %v1766 = vld [vmem:[#allocation16 + $0x8] sm:$0xff]
    %v1767 = vld [vmem:[#allocation16 + $0x10] sm:$0xff]
    %v1768 = vld [vmem:[#allocation16 + $0x18] sm:$0xff]
    %v1769 = vld [vmem:[#allocation16 + $0x20] sm:$0xff]
    %v1770 = vld [vmem:[#allocation16 + $0x28] sm:$0xff]
    %v1771 = vld [vmem:[#allocation16 + $0x30] sm:$0xff]
    %v1772 = vld [vmem:[#allocation16 + $0x38] sm:$0xff]
    %v1773 = vld [vmem:[#allocation16 + $0x40] sm:$0xff]
    %v1774 = vld [vmem:[#allocation16 + $0x48] sm:$0xff]
    %v1775 = vld [vmem:[#allocation16 + $0x50] sm:$0xff]
    %v1776 = vld [vmem:[#allocation16 + $0x58] sm:$0xff]
    %v1777 = vld [vmem:[#allocation16 + $0x60] sm:$0xff]
    %v1778 = vld [vmem:[#allocation16 + $0x68] sm:$0xff]
    %v1779 = vld [vmem:[#allocation16 + $0x70] sm:$0xff]
    %v1780 = vld [vmem:[#allocation16 + $0x78] sm:$0xff]
    %v1781 = vld [vmem:[#allocation16 + $0x80] sm:$0xff]
    %v1782 = vld [vmem:[#allocation16 + $0x88] sm:$0xff]
    %v1783 = vld [vmem:[#allocation16 + $0x90] sm:$0xff]
    %v1784 = vld [vmem:[#allocation16 + $0x98] sm:$0xff]
    %v1785 = vld [vmem:[#allocation16 + $0xa0] sm:$0xff]
    %v1786 = vld [vmem:[#allocation16 + $0xa8] sm:$0xff]
    %v1787 = vld [vmem:[#allocation16 + $0xb0] sm:$0xff]
    %v1788 = vld [vmem:[#allocation16 + $0xb8] sm:$0xff]
    %v1789 = vld [vmem:[#allocation16 + $0xc0] sm:$0xff]
    %v1790 = vld [vmem:[#allocation16 + $0xc8] sm:$0xff]
    %v1791 = vld [vmem:[#allocation16 + $0xd0] sm:$0xff]
    %v1792 = vld [vmem:[#allocation16 + $0xd8] sm:$0xff]
    %v1793 = vld [vmem:[#allocation16 + $0xe0] sm:$0xff]
    %v1794 = vld [vmem:[#allocation16 + $0xe8] sm:$0xff]
    %v1795 = vld [vmem:[#allocation16 + $0xf0] sm:$0xff]
    %v1796 = vld [vmem:[#allocation16 + $0xf8] sm:$0xff]
    %v1797 = vld [vmem:[#allocation16 + $0x100] sm:$0xff]
    %v1798 = vld [vmem:[#allocation16 + $0x108] sm:$0xff]
    %v1799 = vld [vmem:[#allocation16 + $0x110] sm:$0xff]
    %v1800 = vld [vmem:[#allocation16 + $0x118] sm:$0xff]
    %v1801 = vld [vmem:[#allocation16 + $0x120] sm:$0xff]
    %v1802 = vld [vmem:[#allocation16 + $0x128] sm:$0xff]
    %v1803 = vld [vmem:[#allocation16 + $0x130] sm:$0xff]
    %v1804 = vld [vmem:[#allocation16 + $0x138] sm:$0xff]
    %v1805 = vld [vmem:[#allocation16 + $0x140] sm:$0xff]
    %v1806 = vld [vmem:[#allocation16 + $0x148] sm:$0xff]
    %v1807 = vld [vmem:[#allocation16 + $0x150] sm:$0xff]
    %v1808 = vld [vmem:[#allocation16 + $0x158] sm:$0xff]
    %v1809 = vld [vmem:[#allocation16 + $0x160] sm:$0xff]
    %v1810 = vld [vmem:[#allocation16 + $0x168] sm:$0xff]
    %v1811 = vld [vmem:[#allocation16 + $0x170] sm:$0xff]
    %v1812 = vld [vmem:[#allocation16 + $0x178] sm:$0xff]
    %v1813 = vld [vmem:[#allocation16 + $0x180] sm:$0xff]
    %v1814 = vld [vmem:[#allocation16 + $0x188] sm:$0xff]
    %v1815 = vld [vmem:[#allocation16 + $0x190] sm:$0xff]
    %v1816 = vld [vmem:[#allocation16 + $0x198] sm:$0xff]
    %v1817 = vld [vmem:[#allocation16 + $0x1a0] sm:$0xff]
    %v1818 = vld [vmem:[#allocation16 + $0x1a8] sm:$0xff]
    %v1819 = vld [vmem:[#allocation16 + $0x1b0] sm:$0xff]
    %v1820 = vld [vmem:[#allocation16 + $0x1b8] sm:$0xff]
    %v1821 = vld [vmem:[#allocation16 + $0x1c0] sm:$0xff]
    %v1822 = vld [vmem:[#allocation16 + $0x1c8] sm:$0xff]
    %v1823 = vld [vmem:[#allocation16 + $0x1d0] sm:$0xff]
    %v1824 = vld [vmem:[#allocation16 + $0x1d8] sm:$0xff]
    %v1825 = vld [vmem:[#allocation16 + $0x1e0] sm:$0xff]
    %v1826 = vld [vmem:[#allocation16 + $0x1e8] sm:$0xff]
    %v1827 = vld [vmem:[#allocation16 + $0x1f0] sm:$0xff]
    %v1828 = vld [vmem:[#allocation16 + $0x1f8] sm:$0xff]
    %v1829 = vld [vmem:[#allocation16 + $0x200] sm:$0xff]
    %v1830 = vld [vmem:[#allocation16 + $0x208] sm:$0xff]
    %v1831 = vld [vmem:[#allocation16 + $0x210] sm:$0xff]
    %v1832 = vld [vmem:[#allocation16 + $0x218] sm:$0xff]
    %v1833 = vld [vmem:[#allocation16 + $0x220] sm:$0xff]
    %v1834 = vld [vmem:[#allocation16 + $0x228] sm:$0xff]
    %v1835 = vld [vmem:[#allocation16 + $0x230] sm:$0xff]
    %v1836 = vld [vmem:[#allocation16 + $0x238] sm:$0xff]
    %v1837 = vld [vmem:[#allocation16 + $0x240] sm:$0xff]
    %v1838 = vld [vmem:[#allocation16 + $0x248] sm:$0xff]
    %v1839 = vld [vmem:[#allocation16 + $0x250] sm:$0xff]
    %v1840 = vld [vmem:[#allocation16 + $0x258] sm:$0xff]
    %v1841 = vld [vmem:[#allocation16 + $0x260] sm:$0xff]
    %v1842 = vld [vmem:[#allocation16 + $0x268] sm:$0xff]
    %v1843 = vld [vmem:[#allocation16 + $0x270] sm:$0xff]
    %v1844 = vld [vmem:[#allocation16 + $0x278] sm:$0xff]
    %v1845 = vld [vmem:[#allocation16 + $0x280] sm:$0xff]
    %v1846 = vld [vmem:[#allocation16 + $0x288] sm:$0xff]
    %v1847 = vld [vmem:[#allocation16 + $0x290] sm:$0xff]
    %v1848 = vld [vmem:[#allocation16 + $0x298] sm:$0xff]
    %v1849 = vld [vmem:[#allocation16 + $0x2a0] sm:$0xff]
    %v1850 = vld [vmem:[#allocation16 + $0x2a8] sm:$0xff]
    %v1851 = vld [vmem:[#allocation16 + $0x2b0] sm:$0xff]
    %v1852 = vld [vmem:[#allocation16 + $0x2b8] sm:$0xff]
    %v1853 = vld [vmem:[#allocation16 + $0x2c0] sm:$0xff]
    %v1854 = vld [vmem:[#allocation16 + $0x2c8] sm:$0xff]
    %v1855 = vld [vmem:[#allocation16 + $0x2d0] sm:$0xff]
    %v1856 = vld [vmem:[#allocation16 + $0x2d8] sm:$0xff]
    %v1857 = vld [vmem:[#allocation16 + $0x2e0] sm:$0xff]
    %v1858 = vld [vmem:[#allocation16 + $0x2e8] sm:$0xff]
    %v1859 = vld [vmem:[#allocation16 + $0x2f0] sm:$0xff]
    %v1860 = vld [vmem:[#allocation16 + $0x2f8] sm:$0xff]
    %v1861 = vld [vmem:[#allocation16 + $0x300] sm:$0xff]
    %v1862 = vld [vmem:[#allocation16 + $0x308] sm:$0xff]
    %v1863 = vld [vmem:[#allocation16 + $0x310] sm:$0xff]
    %v1864 = vld [vmem:[#allocation16 + $0x318] sm:$0xff]
    %v1865 = vld [vmem:[#allocation16 + $0x320] sm:$0xff]
    %v1866 = vld [vmem:[#allocation16 + $0x328] sm:$0xff]
    %v1867 = vld [vmem:[#allocation16 + $0x330] sm:$0xff]
    %v1868 = vld [vmem:[#allocation16 + $0x338] sm:$0xff]
    %v1869 = vld [vmem:[#allocation16 + $0x340] sm:$0xff]
    %v1870 = vld [vmem:[#allocation16 + $0x348] sm:$0xff]
    %v1871 = vld [vmem:[#allocation16 + $0x350] sm:$0xff]
    %v1872 = vld [vmem:[#allocation16 + $0x358] sm:$0xff]
    %v1873 = vld [vmem:[#allocation16 + $0x360] sm:$0xff]
    %v1874 = vld [vmem:[#allocation16 + $0x368] sm:$0xff]
    %v1875 = vld [vmem:[#allocation16 + $0x370] sm:$0xff]
    %v1876 = vld [vmem:[#allocation16 + $0x378] sm:$0xff]
    %v1877 = vld [vmem:[#allocation16 + $0x380] sm:$0xff]
    %v1878 = vld [vmem:[#allocation16 + $0x388] sm:$0xff]
    %v1879 = vld [vmem:[#allocation16 + $0x390] sm:$0xff]
    %v1880 = vld [vmem:[#allocation16 + $0x398] sm:$0xff]
    %v1881 = vld [vmem:[#allocation16 + $0x3a0] sm:$0xff]
    %v1882 = vld [vmem:[#allocation16 + $0x3a8] sm:$0xff]
    %v1883 = vld [vmem:[#allocation16 + $0x3b0] sm:$0xff]
    %v1884 = vld [vmem:[#allocation16 + $0x3b8] sm:$0xff]
    %v1885 = vld [vmem:[#allocation16 + $0x3c0] sm:$0xff]
    %v1886 = vld [vmem:[#allocation16 + $0x3c8] sm:$0xff]
    %v1887 = vld [vmem:[#allocation16 + $0x3d0] sm:$0xff]
    %v1888 = vld [vmem:[#allocation16 + $0x3d8] sm:$0xff]
    %v1889 = vld [vmem:[#allocation16 + $0x3e0] sm:$0xff]
    %v1890 = vld [vmem:[#allocation16 + $0x3e8] sm:$0xff]
    %v1891 = vld [vmem:[#allocation16 + $0x3f0] sm:$0xff]
    %v1892 = vld [vmem:[#allocation16 + $0x3f8] sm:$0xff]
    %v1893 = vunpack.c.l.bf16 %v1765
    %v1894 = vunpack.c.h.bf16 %v1765
    %v1895 = vunpack.c.l.bf16 %v1766
    %v1896 = vunpack.c.h.bf16 %v1766
    %v1897 = vunpack.c.l.bf16 %v1767
    %v1898 = vunpack.c.h.bf16 %v1767
    %v1899 = vunpack.c.l.bf16 %v1768
    %v1900 = vunpack.c.h.bf16 %v1768
    %v1901 = vunpack.c.l.bf16 %v1769
    %v1902 = vunpack.c.h.bf16 %v1769
    %v1903 = vunpack.c.l.bf16 %v1770
    %v1904 = vunpack.c.h.bf16 %v1770
    %v1905 = vunpack.c.l.bf16 %v1771
    %v1906 = vunpack.c.h.bf16 %v1771
    %v1907 = vunpack.c.l.bf16 %v1772
    %v1908 = vunpack.c.h.bf16 %v1772
    %v1909 = vunpack.c.l.bf16 %v1773
    %v1910 = vunpack.c.h.bf16 %v1773
    %v1911 = vunpack.c.l.bf16 %v1774
    %v1912 = vunpack.c.h.bf16 %v1774
    %v1913 = vunpack.c.l.bf16 %v1775
    %v1914 = vunpack.c.h.bf16 %v1775
    %v1915 = vunpack.c.l.bf16 %v1776
    %v1916 = vunpack.c.h.bf16 %v1776
    %v1917 = vunpack.c.l.bf16 %v1777
    %v1918 = vunpack.c.h.bf16 %v1777
    %v1919 = vunpack.c.l.bf16 %v1778
    %v1920 = vunpack.c.h.bf16 %v1778
    %v1921 = vunpack.c.l.bf16 %v1779
    %v1922 = vunpack.c.h.bf16 %v1779
    %v1923 = vunpack.c.l.bf16 %v1780
    %v1924 = vunpack.c.h.bf16 %v1780
    %v1925 = vunpack.c.l.bf16 %v1781
    %v1926 = vunpack.c.h.bf16 %v1781
    %v1927 = vunpack.c.l.bf16 %v1782
    %v1928 = vunpack.c.h.bf16 %v1782
    %v1929 = vunpack.c.l.bf16 %v1783
    %v1930 = vunpack.c.h.bf16 %v1783
    %v1931 = vunpack.c.l.bf16 %v1784
    %v1932 = vunpack.c.h.bf16 %v1784
    %v1933 = vunpack.c.l.bf16 %v1785
    %v1934 = vunpack.c.h.bf16 %v1785
    %v1935 = vunpack.c.l.bf16 %v1786
    %v1936 = vunpack.c.h.bf16 %v1786
    %v1937 = vunpack.c.l.bf16 %v1787
    %v1938 = vunpack.c.h.bf16 %v1787
    %v1939 = vunpack.c.l.bf16 %v1788
    %v1940 = vunpack.c.h.bf16 %v1788
    %v1941 = vunpack.c.l.bf16 %v1789
    %v1942 = vunpack.c.h.bf16 %v1789
    %v1943 = vunpack.c.l.bf16 %v1790
    %v1944 = vunpack.c.h.bf16 %v1790
    %v1945 = vunpack.c.l.bf16 %v1791
    %v1946 = vunpack.c.h.bf16 %v1791
    %v1947 = vunpack.c.l.bf16 %v1792
    %v1948 = vunpack.c.h.bf16 %v1792
    %v1949 = vunpack.c.l.bf16 %v1793
    %v1950 = vunpack.c.h.bf16 %v1793
    %v1951 = vunpack.c.l.bf16 %v1794
    %v1952 = vunpack.c.h.bf16 %v1794
    %v1953 = vunpack.c.l.bf16 %v1795
    %v1954 = vunpack.c.h.bf16 %v1795
    %v1955 = vunpack.c.l.bf16 %v1796
    %v1956 = vunpack.c.h.bf16 %v1796
    %v1957 = vunpack.c.l.bf16 %v1797
    %v1958 = vunpack.c.h.bf16 %v1797
    %v1959 = vunpack.c.l.bf16 %v1798
    %v1960 = vunpack.c.h.bf16 %v1798
    %v1961 = vunpack.c.l.bf16 %v1799
    %v1962 = vunpack.c.h.bf16 %v1799
    %v1963 = vunpack.c.l.bf16 %v1800
    %v1964 = vunpack.c.h.bf16 %v1800
    %v1965 = vunpack.c.l.bf16 %v1801
    %v1966 = vunpack.c.h.bf16 %v1801
    %v1967 = vunpack.c.l.bf16 %v1802
    %v1968 = vunpack.c.h.bf16 %v1802
    %v1969 = vunpack.c.l.bf16 %v1803
    %v1970 = vunpack.c.h.bf16 %v1803
    %v1971 = vunpack.c.l.bf16 %v1804
    %v1972 = vunpack.c.h.bf16 %v1804
    %v1973 = vunpack.c.l.bf16 %v1805
    %v1974 = vunpack.c.h.bf16 %v1805
    %v1975 = vunpack.c.l.bf16 %v1806
    %v1976 = vunpack.c.h.bf16 %v1806
    %v1977 = vunpack.c.l.bf16 %v1807
    %v1978 = vunpack.c.h.bf16 %v1807
    %v1979 = vunpack.c.l.bf16 %v1808
    %v1980 = vunpack.c.h.bf16 %v1808
    %v1981 = vunpack.c.l.bf16 %v1809
    %v1982 = vunpack.c.h.bf16 %v1809
    %v1983 = vunpack.c.l.bf16 %v1810
    %v1984 = vunpack.c.h.bf16 %v1810
    %v1985 = vunpack.c.l.bf16 %v1811
    %v1986 = vunpack.c.h.bf16 %v1811
    %v1987 = vunpack.c.l.bf16 %v1812
    %v1988 = vunpack.c.h.bf16 %v1812
    %v1989 = vunpack.c.l.bf16 %v1813
    %v1990 = vunpack.c.h.bf16 %v1813
    %v1991 = vunpack.c.l.bf16 %v1814
    %v1992 = vunpack.c.h.bf16 %v1814
    %v1993 = vunpack.c.l.bf16 %v1815
    %v1994 = vunpack.c.h.bf16 %v1815
    %v1995 = vunpack.c.l.bf16 %v1816
    %v1996 = vunpack.c.h.bf16 %v1816
    %v1997 = vunpack.c.l.bf16 %v1817
    %v1998 = vunpack.c.h.bf16 %v1817
    %v1999 = vunpack.c.l.bf16 %v1818
    %v2000 = vunpack.c.h.bf16 %v1818
    %v2001 = vunpack.c.l.bf16 %v1819
    %v2002 = vunpack.c.h.bf16 %v1819
    %v2003 = vunpack.c.l.bf16 %v1820
    %v2004 = vunpack.c.h.bf16 %v1820
    %v2005 = vunpack.c.l.bf16 %v1821
    %v2006 = vunpack.c.h.bf16 %v1821
    %v2007 = vunpack.c.l.bf16 %v1822
    %v2008 = vunpack.c.h.bf16 %v1822
    %v2009 = vunpack.c.l.bf16 %v1823
    %v2010 = vunpack.c.h.bf16 %v1823
    %v2011 = vunpack.c.l.bf16 %v1824
    %v2012 = vunpack.c.h.bf16 %v1824
    %v2013 = vunpack.c.l.bf16 %v1825
    %v2014 = vunpack.c.h.bf16 %v1825
    %v2015 = vunpack.c.l.bf16 %v1826
    %v2016 = vunpack.c.h.bf16 %v1826
    %v2017 = vunpack.c.l.bf16 %v1827
    %v2018 = vunpack.c.h.bf16 %v1827
    %v2019 = vunpack.c.l.bf16 %v1828
    %v2020 = vunpack.c.h.bf16 %v1828
    %v2021 = vunpack.c.l.bf16 %v1829
    %v2022 = vunpack.c.h.bf16 %v1829
    %v2023 = vunpack.c.l.bf16 %v1830
    %v2024 = vunpack.c.h.bf16 %v1830
    %v2025 = vunpack.c.l.bf16 %v1831
    %v2026 = vunpack.c.h.bf16 %v1831
    %v2027 = vunpack.c.l.bf16 %v1832
    %v2028 = vunpack.c.h.bf16 %v1832
    %v2029 = vunpack.c.l.bf16 %v1833
    %v2030 = vunpack.c.h.bf16 %v1833
    %v2031 = vunpack.c.l.bf16 %v1834
    %v2032 = vunpack.c.h.bf16 %v1834
    %v2033 = vunpack.c.l.bf16 %v1835
    %v2034 = vunpack.c.h.bf16 %v1835
    %v2035 = vunpack.c.l.bf16 %v1836
    %v2036 = vunpack.c.h.bf16 %v1836
    %v2037 = vunpack.c.l.bf16 %v1837
    %v2038 = vunpack.c.h.bf16 %v1837
    %v2039 = vunpack.c.l.bf16 %v1838
    %v2040 = vunpack.c.h.bf16 %v1838
    %v2041 = vunpack.c.l.bf16 %v1839
    %v2042 = vunpack.c.h.bf16 %v1839
    %v2043 = vunpack.c.l.bf16 %v1840
    %v2044 = vunpack.c.h.bf16 %v1840
    %v2045 = vunpack.c.l.bf16 %v1841
    %v2046 = vunpack.c.h.bf16 %v1841
    %v2047 = vunpack.c.l.bf16 %v1842
    %v2048 = vunpack.c.h.bf16 %v1842
    %v2049 = vunpack.c.l.bf16 %v1843
    %v2050 = vunpack.c.h.bf16 %v1843
    %v2051 = vunpack.c.l.bf16 %v1844
    %v2052 = vunpack.c.h.bf16 %v1844
    %v2053 = vunpack.c.l.bf16 %v1845
    %v2054 = vunpack.c.h.bf16 %v1845
    %v2055 = vunpack.c.l.bf16 %v1846
    %v2056 = vunpack.c.h.bf16 %v1846
    %v2057 = vunpack.c.l.bf16 %v1847
    %v2058 = vunpack.c.h.bf16 %v1847
    %v2059 = vunpack.c.l.bf16 %v1848
    %v2060 = vunpack.c.h.bf16 %v1848
    %v2061 = vunpack.c.l.bf16 %v1849
    %v2062 = vunpack.c.h.bf16 %v1849
    %v2063 = vunpack.c.l.bf16 %v1850
    %v2064 = vunpack.c.h.bf16 %v1850
    %v2065 = vunpack.c.l.bf16 %v1851
    %v2066 = vunpack.c.h.bf16 %v1851
    %v2067 = vunpack.c.l.bf16 %v1852
    %v2068 = vunpack.c.h.bf16 %v1852
    %v2069 = vunpack.c.l.bf16 %v1853
    %v2070 = vunpack.c.h.bf16 %v1853
    %v2071 = vunpack.c.l.bf16 %v1854
    %v2072 = vunpack.c.h.bf16 %v1854
    %v2073 = vunpack.c.l.bf16 %v1855
    %v2074 = vunpack.c.h.bf16 %v1855
    %v2075 = vunpack.c.l.bf16 %v1856
    %v2076 = vunpack.c.h.bf16 %v1856
    %v2077 = vunpack.c.l.bf16 %v1857
    %v2078 = vunpack.c.h.bf16 %v1857
    %v2079 = vunpack.c.l.bf16 %v1858
    %v2080 = vunpack.c.h.bf16 %v1858
    %v2081 = vunpack.c.l.bf16 %v1859
    %v2082 = vunpack.c.h.bf16 %v1859
    %v2083 = vunpack.c.l.bf16 %v1860
    %v2084 = vunpack.c.h.bf16 %v1860
    %v2085 = vunpack.c.l.bf16 %v1861
    %v2086 = vunpack.c.h.bf16 %v1861
    %v2087 = vunpack.c.l.bf16 %v1862
    %v2088 = vunpack.c.h.bf16 %v1862
    %v2089 = vunpack.c.l.bf16 %v1863
    %v2090 = vunpack.c.h.bf16 %v1863
    %v2091 = vunpack.c.l.bf16 %v1864
    %v2092 = vunpack.c.h.bf16 %v1864
    %v2093 = vunpack.c.l.bf16 %v1865
    %v2094 = vunpack.c.h.bf16 %v1865
    %v2095 = vunpack.c.l.bf16 %v1866
    %v2096 = vunpack.c.h.bf16 %v1866
    %v2097 = vunpack.c.l.bf16 %v1867
    %v2098 = vunpack.c.h.bf16 %v1867
    %v2099 = vunpack.c.l.bf16 %v1868
    %v2100 = vunpack.c.h.bf16 %v1868
    %v2101 = vunpack.c.l.bf16 %v1869
    %v2102 = vunpack.c.h.bf16 %v1869
    %v2103 = vunpack.c.l.bf16 %v1870
    %v2104 = vunpack.c.h.bf16 %v1870
    %v2105 = vunpack.c.l.bf16 %v1871
    %v2106 = vunpack.c.h.bf16 %v1871
    %v2107 = vunpack.c.l.bf16 %v1872
    %v2108 = vunpack.c.h.bf16 %v1872
    %v2109 = vunpack.c.l.bf16 %v1873
    %v2110 = vunpack.c.h.bf16 %v1873
    %v2111 = vunpack.c.l.bf16 %v1874
    %v2112 = vunpack.c.h.bf16 %v1874
    %v2113 = vunpack.c.l.bf16 %v1875
    %v2114 = vunpack.c.h.bf16 %v1875
    %v2115 = vunpack.c.l.bf16 %v1876
    %v2116 = vunpack.c.h.bf16 %v1876
    %v2117 = vunpack.c.l.bf16 %v1877
    %v2118 = vunpack.c.h.bf16 %v1877
    %v2119 = vunpack.c.l.bf16 %v1878
    %v2120 = vunpack.c.h.bf16 %v1878
    %v2121 = vunpack.c.l.bf16 %v1879
    %v2122 = vunpack.c.h.bf16 %v1879
    %v2123 = vunpack.c.l.bf16 %v1880
    %v2124 = vunpack.c.h.bf16 %v1880
    %v2125 = vunpack.c.l.bf16 %v1881
    %v2126 = vunpack.c.h.bf16 %v1881
    %v2127 = vunpack.c.l.bf16 %v1882
    %v2128 = vunpack.c.h.bf16 %v1882
    %v2129 = vunpack.c.l.bf16 %v1883
    %v2130 = vunpack.c.h.bf16 %v1883
    %v2131 = vunpack.c.l.bf16 %v1884
    %v2132 = vunpack.c.h.bf16 %v1884
    %v2133 = vunpack.c.l.bf16 %v1885
    %v2134 = vunpack.c.h.bf16 %v1885
    %v2135 = vunpack.c.l.bf16 %v1886
    %v2136 = vunpack.c.h.bf16 %v1886
    %v2137 = vunpack.c.l.bf16 %v1887
    %v2138 = vunpack.c.h.bf16 %v1887
    %v2139 = vunpack.c.l.bf16 %v1888
    %v2140 = vunpack.c.h.bf16 %v1888
    %v2141 = vunpack.c.l.bf16 %v1889
    %v2142 = vunpack.c.h.bf16 %v1889
    %v2143 = vunpack.c.l.bf16 %v1890
    %v2144 = vunpack.c.h.bf16 %v1890
    %v2145 = vunpack.c.l.bf16 %v1891
    %v2146 = vunpack.c.h.bf16 %v1891
    %v2147 = vunpack.c.l.bf16 %v1892
    %v2148 = vunpack.c.h.bf16 %v1892
    %v2149 = vld [vmem:[#allocation17] sm:$0xf]
    %v2151 = vperm.slane %v2149, 0
    %v2152 = vperm.slane %v2149, 1
    %v2153 = vperm.slane %v2149, 2
    %v2154 = vperm.slane %v2149, 3
    %2159 = vmatpush.msra.mxu0 %v1953
    %2160 = vmatpush.msra.mxu0 %v1949
    %2161 = vmatpush.msra.mxu0 %v1945
    %2162 = vmatpush.msra.mxu0 %v1941
    %2163 = vmatpush.msra.mxu0 %v1937
    %2164 = vmatpush.msra.mxu0 %v1933
    %2165 = vmatpush.msra.mxu0 %v1929
    %2166 = vmatpush.msra.mxu0 %v1925
    %2167 = vmatpush.msra.mxu0 %v1921
    %2168 = vmatpush.msra.mxu0 %v1917
    %2169 = vmatpush.msra.mxu0 %v1913
    %2170 = vmatpush.msra.mxu0 %v1909
    %2171 = vmatpush.msra.mxu0 %v1905
    %2172 = vmatpush.msra.mxu0 %v1901
    %2173 = vmatpush.msra.mxu0 %v1897
    %2174 = vmatpush.msra.mxu0 %v1893
    %2175 = vmatmul.f32.gmra.mxu0 %v1047
    %v2176 = vpop.f32.mrf.mxu0
    %v2177 = vadd.f32 %v2151, %v2176
    %2178 = vdwg.mxu0
    %2179 = vmatpush.msra.mxu0 %v2017
    %2180 = vmatpush.msra.mxu0 %v2013
    %2181 = vmatpush.msra.mxu0 %v2009
    %2182 = vmatpush.msra.mxu0 %v2005
    %2183 = vmatpush.msra.mxu0 %v2001
    %2184 = vmatpush.msra.mxu0 %v1997
    %2185 = vmatpush.msra.mxu0 %v1993
    %2186 = vmatpush.msra.mxu0 %v1989
    %2187 = vmatpush.msra.mxu0 %v1985
    %2188 = vmatpush.msra.mxu0 %v1981
    %2189 = vmatpush.msra.mxu0 %v1977
    %2190 = vmatpush.msra.mxu0 %v1973
    %2191 = vmatpush.msra.mxu0 %v1969
    %2192 = vmatpush.msra.mxu0 %v1965
    %2193 = vmatpush.msra.mxu0 %v1961
    %2194 = vmatpush.msra.mxu0 %v1957
    %2195 = vmatmul.f32.gmra.mxu0 %v1048
    %v2196 = vpop.f32.mrf.mxu0
    %v2197 = vadd.f32 %v2177, %v2196
    %2198 = vdwg.mxu0
    %2199 = vmatpush.msra.mxu0 %v2081
    %2200 = vmatpush.msra.mxu0 %v2077
    %2201 = vmatpush.msra.mxu0 %v2073
    %2202 = vmatpush.msra.mxu0 %v2069
    %2203 = vmatpush.msra.mxu0 %v2065
    %2204 = vmatpush.msra.mxu0 %v2061
    %2205 = vmatpush.msra.mxu0 %v2057
    %2206 = vmatpush.msra.mxu0 %v2053
    %2207 = vmatpush.msra.mxu0 %v2049
    %2208 = vmatpush.msra.mxu0 %v2045
    %2209 = vmatpush.msra.mxu0 %v2041
    %2210 = vmatpush.msra.mxu0 %v2037
    %2211 = vmatpush.msra.mxu0 %v2033
    %2212 = vmatpush.msra.mxu0 %v2029
    %2213 = vmatpush.msra.mxu0 %v2025
    %2214 = vmatpush.msra.mxu0 %v2021
    %2215 = vmatmul.f32.gmra.mxu0 %v1049
    %v2216 = vpop.f32.mrf.mxu0
    %v2217 = vadd.f32 %v2197, %v2216
    %2218 = vdwg.mxu0
    %2219 = vmatpush.msra.mxu0 %v2145
    %2220 = vmatpush.msra.mxu0 %v2141
    %2221 = vmatpush.msra.mxu0 %v2137
    %2222 = vmatpush.msra.mxu0 %v2133
    %2223 = vmatpush.msra.mxu0 %v2129
    %2224 = vmatpush.msra.mxu0 %v2125
    %2225 = vmatpush.msra.mxu0 %v2121
    %2226 = vmatpush.msra.mxu0 %v2117
    %2227 = vmatpush.msra.mxu0 %v2113
    %2228 = vmatpush.msra.mxu0 %v2109
    %2229 = vmatpush.msra.mxu0 %v2105
    %2230 = vmatpush.msra.mxu0 %v2101
    %2231 = vmatpush.msra.mxu0 %v2097
    %2232 = vmatpush.msra.mxu0 %v2093
    %2233 = vmatpush.msra.mxu0 %v2089
    %2234 = vmatpush.msra.mxu0 %v2085
    %2235 = vmatmul.f32.gmra.mxu0 %v1050
    %v2236 = vpop.f32.mrf.mxu0
    %v2237 = vadd.f32 %v2217, %v2236
    %2238 = vdwg.mxu0
    %2239 = vmatpush.msra.mxu0 %v1954
    %2240 = vmatpush.msra.mxu0 %v1950
    %2241 = vmatpush.msra.mxu0 %v1946
    %2242 = vmatpush.msra.mxu0 %v1942
    %2243 = vmatpush.msra.mxu0 %v1938
    %2244 = vmatpush.msra.mxu0 %v1934
    %2245 = vmatpush.msra.mxu0 %v1930
    %2246 = vmatpush.msra.mxu0 %v1926
    %2247 = vmatpush.msra.mxu0 %v1922
    %2248 = vmatpush.msra.mxu0 %v1918
    %2249 = vmatpush.msra.mxu0 %v1914
    %2250 = vmatpush.msra.mxu0 %v1910
    %2251 = vmatpush.msra.mxu0 %v1906
    %2252 = vmatpush.msra.mxu0 %v1902
    %2253 = vmatpush.msra.mxu0 %v1898
    %2254 = vmatpush.msra.mxu0 %v1894
    %2255 = vmatmul.f32.gmra.mxu0 %v1047
    %v2256 = vpop.f32.mrf.mxu0
    %v2257 = vadd.f32 %v2152, %v2256
    %2258 = vdwg.mxu0
    %2259 = vmatpush.msra.mxu0 %v2018
    %2260 = vmatpush.msra.mxu0 %v2014
    %2261 = vmatpush.msra.mxu0 %v2010
    %2262 = vmatpush.msra.mxu0 %v2006
    %2263 = vmatpush.msra.mxu0 %v2002
    %2264 = vmatpush.msra.mxu0 %v1998
    %2265 = vmatpush.msra.mxu0 %v1994
    %2266 = vmatpush.msra.mxu0 %v1990
    %2267 = vmatpush.msra.mxu0 %v1986
    %2268 = vmatpush.msra.mxu0 %v1982
    %2269 = vmatpush.msra.mxu0 %v1978
    %2270 = vmatpush.msra.mxu0 %v1974
    %2271 = vmatpush.msra.mxu0 %v1970
    %2272 = vmatpush.msra.mxu0 %v1966
    %2273 = vmatpush.msra.mxu0 %v1962
    %2274 = vmatpush.msra.mxu0 %v1958
    %2275 = vmatmul.f32.gmra.mxu0 %v1048
    %v2276 = vpop.f32.mrf.mxu0
    %v2277 = vadd.f32 %v2257, %v2276
    %2278 = vdwg.mxu0
    %2279 = vmatpush.msra.mxu0 %v2082
    %2280 = vmatpush.msra.mxu0 %v2078
    %2281 = vmatpush.msra.mxu0 %v2074
    %2282 = vmatpush.msra.mxu0 %v2070
    %2283 = vmatpush.msra.mxu0 %v2066
    %2284 = vmatpush.msra.mxu0 %v2062
    %2285 = vmatpush.msra.mxu0 %v2058
    %2286 = vmatpush.msra.mxu0 %v2054
    %2287 = vmatpush.msra.mxu0 %v2050
    %2288 = vmatpush.msra.mxu0 %v2046
    %2289 = vmatpush.msra.mxu0 %v2042
    %2290 = vmatpush.msra.mxu0 %v2038
    %2291 = vmatpush.msra.mxu0 %v2034
    %2292 = vmatpush.msra.mxu0 %v2030
    %2293 = vmatpush.msra.mxu0 %v2026
    %2294 = vmatpush.msra.mxu0 %v2022
    %2295 = vmatmul.f32.gmra.mxu0 %v1049
    %v2296 = vpop.f32.mrf.mxu0
    %v2297 = vadd.f32 %v2277, %v2296
    %2298 = vdwg.mxu0
    %2299 = vmatpush.msra.mxu0 %v2146
    %2300 = vmatpush.msra.mxu0 %v2142
    %2301 = vmatpush.msra.mxu0 %v2138
    %2302 = vmatpush.msra.mxu0 %v2134
    %2303 = vmatpush.msra.mxu0 %v2130
    %2304 = vmatpush.msra.mxu0 %v2126
    %2305 = vmatpush.msra.mxu0 %v2122
    %2306 = vmatpush.msra.mxu0 %v2118
    %2307 = vmatpush.msra.mxu0 %v2114
    %2308 = vmatpush.msra.mxu0 %v2110
    %2309 = vmatpush.msra.mxu0 %v2106
    %2310 = vmatpush.msra.mxu0 %v2102
    %2311 = vmatpush.msra.mxu0 %v2098
    %2312 = vmatpush.msra.mxu0 %v2094
    %2313 = vmatpush.msra.mxu0 %v2090
    %2314 = vmatpush.msra.mxu0 %v2086
    %2315 = vmatmul.f32.gmra.mxu0 %v1050
    %v2316 = vpop.f32.mrf.mxu0
    %v2317 = vadd.f32 %v2297, %v2316
    %2318 = vdwg.mxu0
    %2319 = vmatpush.msra.mxu0 %v1955
    %2320 = vmatpush.msra.mxu0 %v1951
    %2321 = vmatpush.msra.mxu0 %v1947
    %2322 = vmatpush.msra.mxu0 %v1943
    %2323 = vmatpush.msra.mxu0 %v1939
    %2324 = vmatpush.msra.mxu0 %v1935
    %2325 = vmatpush.msra.mxu0 %v1931
    %2326 = vmatpush.msra.mxu0 %v1927
    %2327 = vmatpush.msra.mxu0 %v1923
    %2328 = vmatpush.msra.mxu0 %v1919
    %2329 = vmatpush.msra.mxu0 %v1915
    %2330 = vmatpush.msra.mxu0 %v1911
    %2331 = vmatpush.msra.mxu0 %v1907
    %2332 = vmatpush.msra.mxu0 %v1903
    %2333 = vmatpush.msra.mxu0 %v1899
    %2334 = vmatpush.msra.mxu0 %v1895
    %2335 = vmatmul.f32.gmra.mxu0 %v1047
    %v2336 = vpop.f32.mrf.mxu0
    %v2337 = vadd.f32 %v2153, %v2336
    %2338 = vdwg.mxu0
    %2339 = vmatpush.msra.mxu0 %v2019
    %2340 = vmatpush.msra.mxu0 %v2015
    %2341 = vmatpush.msra.mxu0 %v2011
    %2342 = vmatpush.msra.mxu0 %v2007
    %2343 = vmatpush.msra.mxu0 %v2003
    %2344 = vmatpush.msra.mxu0 %v1999
    %2345 = vmatpush.msra.mxu0 %v1995
    %2346 = vmatpush.msra.mxu0 %v1991
    %2347 = vmatpush.msra.mxu0 %v1987
    %2348 = vmatpush.msra.mxu0 %v1983
    %2349 = vmatpush.msra.mxu0 %v1979
    %2350 = vmatpush.msra.mxu0 %v1975
    %2351 = vmatpush.msra.mxu0 %v1971
    %2352 = vmatpush.msra.mxu0 %v1967
    %2353 = vmatpush.msra.mxu0 %v1963
    %2354 = vmatpush.msra.mxu0 %v1959
    %2355 = vmatmul.f32.gmra.mxu0 %v1048
    %v2356 = vpop.f32.mrf.mxu0
    %v2357 = vadd.f32 %v2337, %v2356
    %2358 = vdwg.mxu0
    %2359 = vmatpush.msra.mxu0 %v2083
    %2360 = vmatpush.msra.mxu0 %v2079
    %2361 = vmatpush.msra.mxu0 %v2075
    %2362 = vmatpush.msra.mxu0 %v2071
    %2363 = vmatpush.msra.mxu0 %v2067
    %2364 = vmatpush.msra.mxu0 %v2063
    %2365 = vmatpush.msra.mxu0 %v2059
    %2366 = vmatpush.msra.mxu0 %v2055
    %2367 = vmatpush.msra.mxu0 %v2051
    %2368 = vmatpush.msra.mxu0 %v2047
    %2369 = vmatpush.msra.mxu0 %v2043
    %2370 = vmatpush.msra.mxu0 %v2039
    %2371 = vmatpush.msra.mxu0 %v2035
    %2372 = vmatpush.msra.mxu0 %v2031
    %2373 = vmatpush.msra.mxu0 %v2027
    %2374 = vmatpush.msra.mxu0 %v2023
    %2375 = vmatmul.f32.gmra.mxu0 %v1049
    %v2376 = vpop.f32.mrf.mxu0
    %v2377 = vadd.f32 %v2357, %v2376
    %2378 = vdwg.mxu0
    %2379 = vmatpush.msra.mxu0 %v2147
    %2380 = vmatpush.msra.mxu0 %v2143
    %2381 = vmatpush.msra.mxu0 %v2139
    %2382 = vmatpush.msra.mxu0 %v2135
    %2383 = vmatpush.msra.mxu0 %v2131
    %2384 = vmatpush.msra.mxu0 %v2127
    %2385 = vmatpush.msra.mxu0 %v2123
    %2386 = vmatpush.msra.mxu0 %v2119
    %2387 = vmatpush.msra.mxu0 %v2115
    %2388 = vmatpush.msra.mxu0 %v2111
    %2389 = vmatpush.msra.mxu0 %v2107
    %2390 = vmatpush.msra.mxu0 %v2103
    %2391 = vmatpush.msra.mxu0 %v2099
    %2392 = vmatpush.msra.mxu0 %v2095
    %2393 = vmatpush.msra.mxu0 %v2091
    %2394 = vmatpush.msra.mxu0 %v2087
    %2395 = vmatmul.f32.gmra.mxu0 %v1050
    %v2396 = vpop.f32.mrf.mxu0
    %v2397 = vadd.f32 %v2377, %v2396
    %2398 = vdwg.mxu0
    %2399 = vmatpush.msra.mxu0 %v1956
    %2400 = vmatpush.msra.mxu0 %v1952
    %2401 = vmatpush.msra.mxu0 %v1948
    %2402 = vmatpush.msra.mxu0 %v1944
    %2403 = vmatpush.msra.mxu0 %v1940
    %2404 = vmatpush.msra.mxu0 %v1936
    %2405 = vmatpush.msra.mxu0 %v1932
    %2406 = vmatpush.msra.mxu0 %v1928
    %2407 = vmatpush.msra.mxu0 %v1924
    %2408 = vmatpush.msra.mxu0 %v1920
    %2409 = vmatpush.msra.mxu0 %v1916
    %2410 = vmatpush.msra.mxu0 %v1912
    %2411 = vmatpush.msra.mxu0 %v1908
    %2412 = vmatpush.msra.mxu0 %v1904
    %2413 = vmatpush.msra.mxu0 %v1900
    %2414 = vmatpush.msra.mxu0 %v1896
    %2415 = vmatmul.f32.gmra.mxu0 %v1047
    %v2416 = vpop.f32.mrf.mxu0
    %v2417 = vadd.f32 %v2154, %v2416
    %2418 = vdwg.mxu0
    %2419 = vmatpush.msra.mxu0 %v2020
    %2420 = vmatpush.msra.mxu0 %v2016
    %2421 = vmatpush.msra.mxu0 %v2012
    %2422 = vmatpush.msra.mxu0 %v2008
    %2423 = vmatpush.msra.mxu0 %v2004
    %2424 = vmatpush.msra.mxu0 %v2000
    %2425 = vmatpush.msra.mxu0 %v1996
    %2426 = vmatpush.msra.mxu0 %v1992
    %2427 = vmatpush.msra.mxu0 %v1988
    %2428 = vmatpush.msra.mxu0 %v1984
    %2429 = vmatpush.msra.mxu0 %v1980
    %2430 = vmatpush.msra.mxu0 %v1976
    %2431 = vmatpush.msra.mxu0 %v1972
    %2432 = vmatpush.msra.mxu0 %v1968
    %2433 = vmatpush.msra.mxu0 %v1964
    %2434 = vmatpush.msra.mxu0 %v1960
    %2435 = vmatmul.f32.gmra.mxu0 %v1048
    %v2436 = vpop.f32.mrf.mxu0
    %v2437 = vadd.f32 %v2417, %v2436
    %2438 = vdwg.mxu0
    %2439 = vmatpush.msra.mxu0 %v2084
    %2440 = vmatpush.msra.mxu0 %v2080
    %2441 = vmatpush.msra.mxu0 %v2076
    %2442 = vmatpush.msra.mxu0 %v2072
    %2443 = vmatpush.msra.mxu0 %v2068
    %2444 = vmatpush.msra.mxu0 %v2064
    %2445 = vmatpush.msra.mxu0 %v2060
    %2446 = vmatpush.msra.mxu0 %v2056
    %2447 = vmatpush.msra.mxu0 %v2052
    %2448 = vmatpush.msra.mxu0 %v2048
    %2449 = vmatpush.msra.mxu0 %v2044
    %2450 = vmatpush.msra.mxu0 %v2040
    %2451 = vmatpush.msra.mxu0 %v2036
    %2452 = vmatpush.msra.mxu0 %v2032
    %2453 = vmatpush.msra.mxu0 %v2028
    %2454 = vmatpush.msra.mxu0 %v2024
    %2455 = vmatmul.f32.gmra.mxu0 %v1049
    %v2456 = vpop.f32.mrf.mxu0
    %v2457 = vadd.f32 %v2437, %v2456
    %2458 = vdwg.mxu0
    %2459 = vmatpush.msra.mxu0 %v2148
    %2460 = vmatpush.msra.mxu0 %v2144
    %2461 = vmatpush.msra.mxu0 %v2140
    %2462 = vmatpush.msra.mxu0 %v2136
    %2463 = vmatpush.msra.mxu0 %v2132
    %2464 = vmatpush.msra.mxu0 %v2128
    %2465 = vmatpush.msra.mxu0 %v2124
    %2466 = vmatpush.msra.mxu0 %v2120
    %2467 = vmatpush.msra.mxu0 %v2116
    %2468 = vmatpush.msra.mxu0 %v2112
    %2469 = vmatpush.msra.mxu0 %v2108
    %2470 = vmatpush.msra.mxu0 %v2104
    %2471 = vmatpush.msra.mxu0 %v2100
    %2472 = vmatpush.msra.mxu0 %v2096
    %2473 = vmatpush.msra.mxu0 %v2092
    %2474 = vmatpush.msra.mxu0 %v2088
    %2475 = vmatmul.f32.gmra.mxu0 %v1050
    %v2476 = vpop.f32.mrf.mxu0
    %v2477 = vadd.f32 %v2457, %v2476
    %2478 = vdwg.mxu0
    %v2479 = vadd.f32 %v833, %v1047
    %v2480 = vadd.f32 %v834, %v1048
    %v2481 = vadd.f32 %v835, %v1049
    %v2482 = vadd.f32 %v836, %v1050
    %v2483 = vld [vmem:[#allocation20] sm:$0xff]
    %v2484 = vld [vmem:[#allocation20 + $0x8] sm:$0xff]
    %v2485 = vld [vmem:[#allocation20 + $0x10] sm:$0xff]
    %v2486 = vld [vmem:[#allocation20 + $0x18] sm:$0xff]
    %v2487 = vld [vmem:[#allocation20 + $0x20] sm:$0xff]
    %v2488 = vld [vmem:[#allocation20 + $0x28] sm:$0xff]
    %v2489 = vld [vmem:[#allocation20 + $0x30] sm:$0xff]
    %v2490 = vld [vmem:[#allocation20 + $0x38] sm:$0xff]
    %v2491 = vld [vmem:[#allocation20 + $0x40] sm:$0xff]
    %v2492 = vld [vmem:[#allocation20 + $0x48] sm:$0xff]
    %v2493 = vld [vmem:[#allocation20 + $0x50] sm:$0xff]
    %v2494 = vld [vmem:[#allocation20 + $0x58] sm:$0xff]
    %v2495 = vld [vmem:[#allocation20 + $0x60] sm:$0xff]
    %v2496 = vld [vmem:[#allocation20 + $0x68] sm:$0xff]
    %v2497 = vld [vmem:[#allocation20 + $0x70] sm:$0xff]
    %v2498 = vld [vmem:[#allocation20 + $0x78] sm:$0xff]
    %v2499 = vld [vmem:[#allocation20 + $0x80] sm:$0xff]
    %v2500 = vld [vmem:[#allocation20 + $0x88] sm:$0xff]
    %v2501 = vld [vmem:[#allocation20 + $0x90] sm:$0xff]
    %v2502 = vld [vmem:[#allocation20 + $0x98] sm:$0xff]
    %v2503 = vld [vmem:[#allocation20 + $0xa0] sm:$0xff]
    %v2504 = vld [vmem:[#allocation20 + $0xa8] sm:$0xff]
    %v2505 = vld [vmem:[#allocation20 + $0xb0] sm:$0xff]
    %v2506 = vld [vmem:[#allocation20 + $0xb8] sm:$0xff]
    %v2507 = vld [vmem:[#allocation20 + $0xc0] sm:$0xff]
    %v2508 = vld [vmem:[#allocation20 + $0xc8] sm:$0xff]
    %v2509 = vld [vmem:[#allocation20 + $0xd0] sm:$0xff]
    %v2510 = vld [vmem:[#allocation20 + $0xd8] sm:$0xff]
    %v2511 = vld [vmem:[#allocation20 + $0xe0] sm:$0xff]
    %v2512 = vld [vmem:[#allocation20 + $0xe8] sm:$0xff]
    %v2513 = vld [vmem:[#allocation20 + $0xf0] sm:$0xff]
    %v2514 = vld [vmem:[#allocation20 + $0xf8] sm:$0xff]
    %v2515 = vld [vmem:[#allocation20 + $0x100] sm:$0xff]
    %v2516 = vld [vmem:[#allocation20 + $0x108] sm:$0xff]
    %v2517 = vld [vmem:[#allocation20 + $0x110] sm:$0xff]
    %v2518 = vld [vmem:[#allocation20 + $0x118] sm:$0xff]
    %v2519 = vld [vmem:[#allocation20 + $0x120] sm:$0xff]
    %v2520 = vld [vmem:[#allocation20 + $0x128] sm:$0xff]
    %v2521 = vld [vmem:[#allocation20 + $0x130] sm:$0xff]
    %v2522 = vld [vmem:[#allocation20 + $0x138] sm:$0xff]
    %v2523 = vld [vmem:[#allocation20 + $0x140] sm:$0xff]
    %v2524 = vld [vmem:[#allocation20 + $0x148] sm:$0xff]
    %v2525 = vld [vmem:[#allocation20 + $0x150] sm:$0xff]
    %v2526 = vld [vmem:[#allocation20 + $0x158] sm:$0xff]
    %v2527 = vld [vmem:[#allocation20 + $0x160] sm:$0xff]
    %v2528 = vld [vmem:[#allocation20 + $0x168] sm:$0xff]
    %v2529 = vld [vmem:[#allocation20 + $0x170] sm:$0xff]
    %v2530 = vld [vmem:[#allocation20 + $0x178] sm:$0xff]
    %v2531 = vld [vmem:[#allocation20 + $0x180] sm:$0xff]
    %v2532 = vld [vmem:[#allocation20 + $0x188] sm:$0xff]
    %v2533 = vld [vmem:[#allocation20 + $0x190] sm:$0xff]
    %v2534 = vld [vmem:[#allocation20 + $0x198] sm:$0xff]
    %v2535 = vld [vmem:[#allocation20 + $0x1a0] sm:$0xff]
    %v2536 = vld [vmem:[#allocation20 + $0x1a8] sm:$0xff]
    %v2537 = vld [vmem:[#allocation20 + $0x1b0] sm:$0xff]
    %v2538 = vld [vmem:[#allocation20 + $0x1b8] sm:$0xff]
    %v2539 = vld [vmem:[#allocation20 + $0x1c0] sm:$0xff]
    %v2540 = vld [vmem:[#allocation20 + $0x1c8] sm:$0xff]
    %v2541 = vld [vmem:[#allocation20 + $0x1d0] sm:$0xff]
    %v2542 = vld [vmem:[#allocation20 + $0x1d8] sm:$0xff]
    %v2543 = vld [vmem:[#allocation20 + $0x1e0] sm:$0xff]
    %v2544 = vld [vmem:[#allocation20 + $0x1e8] sm:$0xff]
    %v2545 = vld [vmem:[#allocation20 + $0x1f0] sm:$0xff]
    %v2546 = vld [vmem:[#allocation20 + $0x1f8] sm:$0xff]
    %v2547 = vld [vmem:[#allocation20 + $0x200] sm:$0xff]
    %v2548 = vld [vmem:[#allocation20 + $0x208] sm:$0xff]
    %v2549 = vld [vmem:[#allocation20 + $0x210] sm:$0xff]
    %v2550 = vld [vmem:[#allocation20 + $0x218] sm:$0xff]
    %v2551 = vld [vmem:[#allocation20 + $0x220] sm:$0xff]
    %v2552 = vld [vmem:[#allocation20 + $0x228] sm:$0xff]
    %v2553 = vld [vmem:[#allocation20 + $0x230] sm:$0xff]
    %v2554 = vld [vmem:[#allocation20 + $0x238] sm:$0xff]
    %v2555 = vld [vmem:[#allocation20 + $0x240] sm:$0xff]
    %v2556 = vld [vmem:[#allocation20 + $0x248] sm:$0xff]
    %v2557 = vld [vmem:[#allocation20 + $0x250] sm:$0xff]
    %v2558 = vld [vmem:[#allocation20 + $0x258] sm:$0xff]
    %v2559 = vld [vmem:[#allocation20 + $0x260] sm:$0xff]
    %v2560 = vld [vmem:[#allocation20 + $0x268] sm:$0xff]
    %v2561 = vld [vmem:[#allocation20 + $0x270] sm:$0xff]
    %v2562 = vld [vmem:[#allocation20 + $0x278] sm:$0xff]
    %v2563 = vld [vmem:[#allocation20 + $0x280] sm:$0xff]
    %v2564 = vld [vmem:[#allocation20 + $0x288] sm:$0xff]
    %v2565 = vld [vmem:[#allocation20 + $0x290] sm:$0xff]
    %v2566 = vld [vmem:[#allocation20 + $0x298] sm:$0xff]
    %v2567 = vld [vmem:[#allocation20 + $0x2a0] sm:$0xff]
    %v2568 = vld [vmem:[#allocation20 + $0x2a8] sm:$0xff]
    %v2569 = vld [vmem:[#allocation20 + $0x2b0] sm:$0xff]
    %v2570 = vld [vmem:[#allocation20 + $0x2b8] sm:$0xff]
    %v2571 = vld [vmem:[#allocation20 + $0x2c0] sm:$0xff]
    %v2572 = vld [vmem:[#allocation20 + $0x2c8] sm:$0xff]
    %v2573 = vld [vmem:[#allocation20 + $0x2d0] sm:$0xff]
    %v2574 = vld [vmem:[#allocation20 + $0x2d8] sm:$0xff]
    %v2575 = vld [vmem:[#allocation20 + $0x2e0] sm:$0xff]
    %v2576 = vld [vmem:[#allocation20 + $0x2e8] sm:$0xff]
    %v2577 = vld [vmem:[#allocation20 + $0x2f0] sm:$0xff]
    %v2578 = vld [vmem:[#allocation20 + $0x2f8] sm:$0xff]
    %v2579 = vld [vmem:[#allocation20 + $0x300] sm:$0xff]
    %v2580 = vld [vmem:[#allocation20 + $0x308] sm:$0xff]
    %v2581 = vld [vmem:[#allocation20 + $0x310] sm:$0xff]
    %v2582 = vld [vmem:[#allocation20 + $0x318] sm:$0xff]
    %v2583 = vld [vmem:[#allocation20 + $0x320] sm:$0xff]
    %v2584 = vld [vmem:[#allocation20 + $0x328] sm:$0xff]
    %v2585 = vld [vmem:[#allocation20 + $0x330] sm:$0xff]
    %v2586 = vld [vmem:[#allocation20 + $0x338] sm:$0xff]
    %v2587 = vld [vmem:[#allocation20 + $0x340] sm:$0xff]
    %v2588 = vld [vmem:[#allocation20 + $0x348] sm:$0xff]
    %v2589 = vld [vmem:[#allocation20 + $0x350] sm:$0xff]
    %v2590 = vld [vmem:[#allocation20 + $0x358] sm:$0xff]
    %v2591 = vld [vmem:[#allocation20 + $0x360] sm:$0xff]
    %v2592 = vld [vmem:[#allocation20 + $0x368] sm:$0xff]
    %v2593 = vld [vmem:[#allocation20 + $0x370] sm:$0xff]
    %v2594 = vld [vmem:[#allocation20 + $0x378] sm:$0xff]
    %v2595 = vld [vmem:[#allocation20 + $0x380] sm:$0xff]
    %v2596 = vld [vmem:[#allocation20 + $0x388] sm:$0xff]
    %v2597 = vld [vmem:[#allocation20 + $0x390] sm:$0xff]
    %v2598 = vld [vmem:[#allocation20 + $0x398] sm:$0xff]
    %v2599 = vld [vmem:[#allocation20 + $0x3a0] sm:$0xff]
    %v2600 = vld [vmem:[#allocation20 + $0x3a8] sm:$0xff]
    %v2601 = vld [vmem:[#allocation20 + $0x3b0] sm:$0xff]
    %v2602 = vld [vmem:[#allocation20 + $0x3b8] sm:$0xff]
    %v2603 = vld [vmem:[#allocation20 + $0x3c0] sm:$0xff]
    %v2604 = vld [vmem:[#allocation20 + $0x3c8] sm:$0xff]
    %v2605 = vld [vmem:[#allocation20 + $0x3d0] sm:$0xff]
    %v2606 = vld [vmem:[#allocation20 + $0x3d8] sm:$0xff]
    %v2607 = vld [vmem:[#allocation20 + $0x3e0] sm:$0xff]
    %v2608 = vld [vmem:[#allocation20 + $0x3e8] sm:$0xff]
    %v2609 = vld [vmem:[#allocation20 + $0x3f0] sm:$0xff]
    %v2610 = vld [vmem:[#allocation20 + $0x3f8] sm:$0xff]
    %v2611 = vunpack.c.l.bf16 %v2483
    %v2612 = vunpack.c.h.bf16 %v2483
    %v2613 = vunpack.c.l.bf16 %v2484
    %v2614 = vunpack.c.h.bf16 %v2484
    %v2615 = vunpack.c.l.bf16 %v2485
    %v2616 = vunpack.c.h.bf16 %v2485
    %v2617 = vunpack.c.l.bf16 %v2486
    %v2618 = vunpack.c.h.bf16 %v2486
    %v2619 = vunpack.c.l.bf16 %v2487
    %v2620 = vunpack.c.h.bf16 %v2487
    %v2621 = vunpack.c.l.bf16 %v2488
    %v2622 = vunpack.c.h.bf16 %v2488
    %v2623 = vunpack.c.l.bf16 %v2489
    %v2624 = vunpack.c.h.bf16 %v2489
    %v2625 = vunpack.c.l.bf16 %v2490
    %v2626 = vunpack.c.h.bf16 %v2490
    %v2627 = vunpack.c.l.bf16 %v2491
    %v2628 = vunpack.c.h.bf16 %v2491
    %v2629 = vunpack.c.l.bf16 %v2492
    %v2630 = vunpack.c.h.bf16 %v2492
    %v2631 = vunpack.c.l.bf16 %v2493
    %v2632 = vunpack.c.h.bf16 %v2493
    %v2633 = vunpack.c.l.bf16 %v2494
    %v2634 = vunpack.c.h.bf16 %v2494
    %v2635 = vunpack.c.l.bf16 %v2495
    %v2636 = vunpack.c.h.bf16 %v2495
    %v2637 = vunpack.c.l.bf16 %v2496
    %v2638 = vunpack.c.h.bf16 %v2496
    %v2639 = vunpack.c.l.bf16 %v2497
    %v2640 = vunpack.c.h.bf16 %v2497
    %v2641 = vunpack.c.l.bf16 %v2498
    %v2642 = vunpack.c.h.bf16 %v2498
    %v2643 = vunpack.c.l.bf16 %v2499
    %v2644 = vunpack.c.h.bf16 %v2499
    %v2645 = vunpack.c.l.bf16 %v2500
    %v2646 = vunpack.c.h.bf16 %v2500
    %v2647 = vunpack.c.l.bf16 %v2501
    %v2648 = vunpack.c.h.bf16 %v2501
    %v2649 = vunpack.c.l.bf16 %v2502
    %v2650 = vunpack.c.h.bf16 %v2502
    %v2651 = vunpack.c.l.bf16 %v2503
    %v2652 = vunpack.c.h.bf16 %v2503
    %v2653 = vunpack.c.l.bf16 %v2504
    %v2654 = vunpack.c.h.bf16 %v2504
    %v2655 = vunpack.c.l.bf16 %v2505
    %v2656 = vunpack.c.h.bf16 %v2505
    %v2657 = vunpack.c.l.bf16 %v2506
    %v2658 = vunpack.c.h.bf16 %v2506
    %v2659 = vunpack.c.l.bf16 %v2507
    %v2660 = vunpack.c.h.bf16 %v2507
    %v2661 = vunpack.c.l.bf16 %v2508
    %v2662 = vunpack.c.h.bf16 %v2508
    %v2663 = vunpack.c.l.bf16 %v2509
    %v2664 = vunpack.c.h.bf16 %v2509
    %v2665 = vunpack.c.l.bf16 %v2510
    %v2666 = vunpack.c.h.bf16 %v2510
    %v2667 = vunpack.c.l.bf16 %v2511
    %v2668 = vunpack.c.h.bf16 %v2511
    %v2669 = vunpack.c.l.bf16 %v2512
    %v2670 = vunpack.c.h.bf16 %v2512
    %v2671 = vunpack.c.l.bf16 %v2513
    %v2672 = vunpack.c.h.bf16 %v2513
    %v2673 = vunpack.c.l.bf16 %v2514
    %v2674 = vunpack.c.h.bf16 %v2514
    %v2675 = vunpack.c.l.bf16 %v2515
    %v2676 = vunpack.c.h.bf16 %v2515
    %v2677 = vunpack.c.l.bf16 %v2516
    %v2678 = vunpack.c.h.bf16 %v2516
    %v2679 = vunpack.c.l.bf16 %v2517
    %v2680 = vunpack.c.h.bf16 %v2517
    %v2681 = vunpack.c.l.bf16 %v2518
    %v2682 = vunpack.c.h.bf16 %v2518
    %v2683 = vunpack.c.l.bf16 %v2519
    %v2684 = vunpack.c.h.bf16 %v2519
    %v2685 = vunpack.c.l.bf16 %v2520
    %v2686 = vunpack.c.h.bf16 %v2520
    %v2687 = vunpack.c.l.bf16 %v2521
    %v2688 = vunpack.c.h.bf16 %v2521
    %v2689 = vunpack.c.l.bf16 %v2522
    %v2690 = vunpack.c.h.bf16 %v2522
    %v2691 = vunpack.c.l.bf16 %v2523
    %v2692 = vunpack.c.h.bf16 %v2523
    %v2693 = vunpack.c.l.bf16 %v2524
    %v2694 = vunpack.c.h.bf16 %v2524
    %v2695 = vunpack.c.l.bf16 %v2525
    %v2696 = vunpack.c.h.bf16 %v2525
    %v2697 = vunpack.c.l.bf16 %v2526
    %v2698 = vunpack.c.h.bf16 %v2526
    %v2699 = vunpack.c.l.bf16 %v2527
    %v2700 = vunpack.c.h.bf16 %v2527
    %v2701 = vunpack.c.l.bf16 %v2528
    %v2702 = vunpack.c.h.bf16 %v2528
    %v2703 = vunpack.c.l.bf16 %v2529
    %v2704 = vunpack.c.h.bf16 %v2529
    %v2705 = vunpack.c.l.bf16 %v2530
    %v2706 = vunpack.c.h.bf16 %v2530
    %v2707 = vunpack.c.l.bf16 %v2531
    %v2708 = vunpack.c.h.bf16 %v2531
    %v2709 = vunpack.c.l.bf16 %v2532
    %v2710 = vunpack.c.h.bf16 %v2532
    %v2711 = vunpack.c.l.bf16 %v2533
    %v2712 = vunpack.c.h.bf16 %v2533
    %v2713 = vunpack.c.l.bf16 %v2534
    %v2714 = vunpack.c.h.bf16 %v2534
    %v2715 = vunpack.c.l.bf16 %v2535
    %v2716 = vunpack.c.h.bf16 %v2535
    %v2717 = vunpack.c.l.bf16 %v2536
    %v2718 = vunpack.c.h.bf16 %v2536
    %v2719 = vunpack.c.l.bf16 %v2537
    %v2720 = vunpack.c.h.bf16 %v2537
    %v2721 = vunpack.c.l.bf16 %v2538
    %v2722 = vunpack.c.h.bf16 %v2538
    %v2723 = vunpack.c.l.bf16 %v2539
    %v2724 = vunpack.c.h.bf16 %v2539
    %v2725 = vunpack.c.l.bf16 %v2540
    %v2726 = vunpack.c.h.bf16 %v2540
    %v2727 = vunpack.c.l.bf16 %v2541
    %v2728 = vunpack.c.h.bf16 %v2541
    %v2729 = vunpack.c.l.bf16 %v2542
    %v2730 = vunpack.c.h.bf16 %v2542
    %v2731 = vunpack.c.l.bf16 %v2543
    %v2732 = vunpack.c.h.bf16 %v2543
    %v2733 = vunpack.c.l.bf16 %v2544
    %v2734 = vunpack.c.h.bf16 %v2544
    %v2735 = vunpack.c.l.bf16 %v2545
    %v2736 = vunpack.c.h.bf16 %v2545
    %v2737 = vunpack.c.l.bf16 %v2546
    %v2738 = vunpack.c.h.bf16 %v2546
    %v2739 = vunpack.c.l.bf16 %v2547
    %v2740 = vunpack.c.h.bf16 %v2547
    %v2741 = vunpack.c.l.bf16 %v2548
    %v2742 = vunpack.c.h.bf16 %v2548
    %v2743 = vunpack.c.l.bf16 %v2549
    %v2744 = vunpack.c.h.bf16 %v2549
    %v2745 = vunpack.c.l.bf16 %v2550
    %v2746 = vunpack.c.h.bf16 %v2550
    %v2747 = vunpack.c.l.bf16 %v2551
    %v2748 = vunpack.c.h.bf16 %v2551
    %v2749 = vunpack.c.l.bf16 %v2552
    %v2750 = vunpack.c.h.bf16 %v2552
    %v2751 = vunpack.c.l.bf16 %v2553
    %v2752 = vunpack.c.h.bf16 %v2553
    %v2753 = vunpack.c.l.bf16 %v2554
    %v2754 = vunpack.c.h.bf16 %v2554
    %v2755 = vunpack.c.l.bf16 %v2555
    %v2756 = vunpack.c.h.bf16 %v2555
    %v2757 = vunpack.c.l.bf16 %v2556
    %v2758 = vunpack.c.h.bf16 %v2556
    %v2759 = vunpack.c.l.bf16 %v2557
    %v2760 = vunpack.c.h.bf16 %v2557
    %v2761 = vunpack.c.l.bf16 %v2558
    %v2762 = vunpack.c.h.bf16 %v2558
    %v2763 = vunpack.c.l.bf16 %v2559
    %v2764 = vunpack.c.h.bf16 %v2559
    %v2765 = vunpack.c.l.bf16 %v2560
    %v2766 = vunpack.c.h.bf16 %v2560
    %v2767 = vunpack.c.l.bf16 %v2561
    %v2768 = vunpack.c.h.bf16 %v2561
    %v2769 = vunpack.c.l.bf16 %v2562
    %v2770 = vunpack.c.h.bf16 %v2562
    %v2771 = vunpack.c.l.bf16 %v2563
    %v2772 = vunpack.c.h.bf16 %v2563
    %v2773 = vunpack.c.l.bf16 %v2564
    %v2774 = vunpack.c.h.bf16 %v2564
    %v2775 = vunpack.c.l.bf16 %v2565
    %v2776 = vunpack.c.h.bf16 %v2565
    %v2777 = vunpack.c.l.bf16 %v2566
    %v2778 = vunpack.c.h.bf16 %v2566
    %v2779 = vunpack.c.l.bf16 %v2567
    %v2780 = vunpack.c.h.bf16 %v2567
    %v2781 = vunpack.c.l.bf16 %v2568
    %v2782 = vunpack.c.h.bf16 %v2568
    %v2783 = vunpack.c.l.bf16 %v2569
    %v2784 = vunpack.c.h.bf16 %v2569
    %v2785 = vunpack.c.l.bf16 %v2570
    %v2786 = vunpack.c.h.bf16 %v2570
    %v2787 = vunpack.c.l.bf16 %v2571
    %v2788 = vunpack.c.h.bf16 %v2571
    %v2789 = vunpack.c.l.bf16 %v2572
    %v2790 = vunpack.c.h.bf16 %v2572
    %v2791 = vunpack.c.l.bf16 %v2573
    %v2792 = vunpack.c.h.bf16 %v2573
    %v2793 = vunpack.c.l.bf16 %v2574
    %v2794 = vunpack.c.h.bf16 %v2574
    %v2795 = vunpack.c.l.bf16 %v2575
    %v2796 = vunpack.c.h.bf16 %v2575
    %v2797 = vunpack.c.l.bf16 %v2576
    %v2798 = vunpack.c.h.bf16 %v2576
    %v2799 = vunpack.c.l.bf16 %v2577
    %v2800 = vunpack.c.h.bf16 %v2577
    %v2801 = vunpack.c.l.bf16 %v2578
    %v2802 = vunpack.c.h.bf16 %v2578
    %v2803 = vunpack.c.l.bf16 %v2579
    %v2804 = vunpack.c.h.bf16 %v2579
    %v2805 = vunpack.c.l.bf16 %v2580
    %v2806 = vunpack.c.h.bf16 %v2580
    %v2807 = vunpack.c.l.bf16 %v2581
    %v2808 = vunpack.c.h.bf16 %v2581
    %v2809 = vunpack.c.l.bf16 %v2582
    %v2810 = vunpack.c.h.bf16 %v2582
    %v2811 = vunpack.c.l.bf16 %v2583
    %v2812 = vunpack.c.h.bf16 %v2583
    %v2813 = vunpack.c.l.bf16 %v2584
    %v2814 = vunpack.c.h.bf16 %v2584
    %v2815 = vunpack.c.l.bf16 %v2585
    %v2816 = vunpack.c.h.bf16 %v2585
    %v2817 = vunpack.c.l.bf16 %v2586
    %v2818 = vunpack.c.h.bf16 %v2586
    %v2819 = vunpack.c.l.bf16 %v2587
    %v2820 = vunpack.c.h.bf16 %v2587
    %v2821 = vunpack.c.l.bf16 %v2588
    %v2822 = vunpack.c.h.bf16 %v2588
    %v2823 = vunpack.c.l.bf16 %v2589
    %v2824 = vunpack.c.h.bf16 %v2589
    %v2825 = vunpack.c.l.bf16 %v2590
    %v2826 = vunpack.c.h.bf16 %v2590
    %v2827 = vunpack.c.l.bf16 %v2591
    %v2828 = vunpack.c.h.bf16 %v2591
    %v2829 = vunpack.c.l.bf16 %v2592
    %v2830 = vunpack.c.h.bf16 %v2592
    %v2831 = vunpack.c.l.bf16 %v2593
    %v2832 = vunpack.c.h.bf16 %v2593
    %v2833 = vunpack.c.l.bf16 %v2594
    %v2834 = vunpack.c.h.bf16 %v2594
    %v2835 = vunpack.c.l.bf16 %v2595
    %v2836 = vunpack.c.h.bf16 %v2595
    %v2837 = vunpack.c.l.bf16 %v2596
    %v2838 = vunpack.c.h.bf16 %v2596
    %v2839 = vunpack.c.l.bf16 %v2597
    %v2840 = vunpack.c.h.bf16 %v2597
    %v2841 = vunpack.c.l.bf16 %v2598
    %v2842 = vunpack.c.h.bf16 %v2598
    %v2843 = vunpack.c.l.bf16 %v2599
    %v2844 = vunpack.c.h.bf16 %v2599
    %v2845 = vunpack.c.l.bf16 %v2600
    %v2846 = vunpack.c.h.bf16 %v2600
    %v2847 = vunpack.c.l.bf16 %v2601
    %v2848 = vunpack.c.h.bf16 %v2601
    %v2849 = vunpack.c.l.bf16 %v2602
    %v2850 = vunpack.c.h.bf16 %v2602
    %v2851 = vunpack.c.l.bf16 %v2603
    %v2852 = vunpack.c.h.bf16 %v2603
    %v2853 = vunpack.c.l.bf16 %v2604
    %v2854 = vunpack.c.h.bf16 %v2604
    %v2855 = vunpack.c.l.bf16 %v2605
    %v2856 = vunpack.c.h.bf16 %v2605
    %v2857 = vunpack.c.l.bf16 %v2606
    %v2858 = vunpack.c.h.bf16 %v2606
    %v2859 = vunpack.c.l.bf16 %v2607
    %v2860 = vunpack.c.h.bf16 %v2607
    %v2861 = vunpack.c.l.bf16 %v2608
    %v2862 = vunpack.c.h.bf16 %v2608
    %v2863 = vunpack.c.l.bf16 %v2609
    %v2864 = vunpack.c.h.bf16 %v2609
    %v2865 = vunpack.c.l.bf16 %v2610
    %v2866 = vunpack.c.h.bf16 %v2610
    %v2867 = vld [vmem:[#allocation22] sm:$0xf]
    %v2869 = vperm.slane %v2867, 0
    %v2870 = vperm.slane %v2867, 1
    %v2871 = vperm.slane %v2867, 2
    %v2872 = vperm.slane %v2867, 3
    %2877 = vmatpush.msra.mxu0 %v2671
    %2878 = vmatpush.msra.mxu0 %v2667
    %2879 = vmatpush.msra.mxu0 %v2663
    %2880 = vmatpush.msra.mxu0 %v2659
    %2881 = vmatpush.msra.mxu0 %v2655
    %2882 = vmatpush.msra.mxu0 %v2651
    %2883 = vmatpush.msra.mxu0 %v2647
    %2884 = vmatpush.msra.mxu0 %v2643
    %2885 = vmatpush.msra.mxu0 %v2639
    %2886 = vmatpush.msra.mxu0 %v2635
    %2887 = vmatpush.msra.mxu0 %v2631
    %2888 = vmatpush.msra.mxu0 %v2627
    %2889 = vmatpush.msra.mxu0 %v2623
    %2890 = vmatpush.msra.mxu0 %v2619
    %2891 = vmatpush.msra.mxu0 %v2615
    %2892 = vmatpush.msra.mxu0 %v2611
    %2893 = vmatmul.f32.gmra.mxu0 %v2479
    %v2894 = vpop.f32.mrf.mxu0
    %v2895 = vadd.f32 %v2869, %v2894
    %2896 = vdwg.mxu0
    %2897 = vmatpush.msra.mxu0 %v2735
    %2898 = vmatpush.msra.mxu0 %v2731
    %2899 = vmatpush.msra.mxu0 %v2727
    %2900 = vmatpush.msra.mxu0 %v2723
    %2901 = vmatpush.msra.mxu0 %v2719
    %2902 = vmatpush.msra.mxu0 %v2715
    %2903 = vmatpush.msra.mxu0 %v2711
    %2904 = vmatpush.msra.mxu0 %v2707
    %2905 = vmatpush.msra.mxu0 %v2703
    %2906 = vmatpush.msra.mxu0 %v2699
    %2907 = vmatpush.msra.mxu0 %v2695
    %2908 = vmatpush.msra.mxu0 %v2691
    %2909 = vmatpush.msra.mxu0 %v2687
    %2910 = vmatpush.msra.mxu0 %v2683
    %2911 = vmatpush.msra.mxu0 %v2679
    %2912 = vmatpush.msra.mxu0 %v2675
    %2913 = vmatmul.f32.gmra.mxu0 %v2480
    %v2914 = vpop.f32.mrf.mxu0
    %v2915 = vadd.f32 %v2895, %v2914
    %2916 = vdwg.mxu0
    %2917 = vmatpush.msra.mxu0 %v2799
    %2918 = vmatpush.msra.mxu0 %v2795
    %2919 = vmatpush.msra.mxu0 %v2791
    %2920 = vmatpush.msra.mxu0 %v2787
    %2921 = vmatpush.msra.mxu0 %v2783
    %2922 = vmatpush.msra.mxu0 %v2779
    %2923 = vmatpush.msra.mxu0 %v2775
    %2924 = vmatpush.msra.mxu0 %v2771
    %2925 = vmatpush.msra.mxu0 %v2767
    %2926 = vmatpush.msra.mxu0 %v2763
    %2927 = vmatpush.msra.mxu0 %v2759
    %2928 = vmatpush.msra.mxu0 %v2755
    %2929 = vmatpush.msra.mxu0 %v2751
    %2930 = vmatpush.msra.mxu0 %v2747
    %2931 = vmatpush.msra.mxu0 %v2743
    %2932 = vmatpush.msra.mxu0 %v2739
    %2933 = vmatmul.f32.gmra.mxu0 %v2481
    %v2934 = vpop.f32.mrf.mxu0
    %v2935 = vadd.f32 %v2915, %v2934
    %2936 = vdwg.mxu0
    %2937 = vmatpush.msra.mxu0 %v2863
    %2938 = vmatpush.msra.mxu0 %v2859
    %2939 = vmatpush.msra.mxu0 %v2855
    %2940 = vmatpush.msra.mxu0 %v2851
    %2941 = vmatpush.msra.mxu0 %v2847
    %2942 = vmatpush.msra.mxu0 %v2843
    %2943 = vmatpush.msra.mxu0 %v2839
    %2944 = vmatpush.msra.mxu0 %v2835
    %2945 = vmatpush.msra.mxu0 %v2831
    %2946 = vmatpush.msra.mxu0 %v2827
    %2947 = vmatpush.msra.mxu0 %v2823
    %2948 = vmatpush.msra.mxu0 %v2819
    %2949 = vmatpush.msra.mxu0 %v2815
    %2950 = vmatpush.msra.mxu0 %v2811
    %2951 = vmatpush.msra.mxu0 %v2807
    %2952 = vmatpush.msra.mxu0 %v2803
    %2953 = vmatmul.f32.gmra.mxu0 %v2482
    %v2954 = vpop.f32.mrf.mxu0
    %v2955 = vadd.f32 %v2935, %v2954
    %2956 = vdwg.mxu0
    %2957 = vmatpush.msra.mxu0 %v2672
    %2958 = vmatpush.msra.mxu0 %v2668
    %2959 = vmatpush.msra.mxu0 %v2664
    %2960 = vmatpush.msra.mxu0 %v2660
    %2961 = vmatpush.msra.mxu0 %v2656
    %2962 = vmatpush.msra.mxu0 %v2652
    %2963 = vmatpush.msra.mxu0 %v2648
    %2964 = vmatpush.msra.mxu0 %v2644
    %2965 = vmatpush.msra.mxu0 %v2640
    %2966 = vmatpush.msra.mxu0 %v2636
    %2967 = vmatpush.msra.mxu0 %v2632
    %2968 = vmatpush.msra.mxu0 %v2628
    %2969 = vmatpush.msra.mxu0 %v2624
    %2970 = vmatpush.msra.mxu0 %v2620
    %2971 = vmatpush.msra.mxu0 %v2616
    %2972 = vmatpush.msra.mxu0 %v2612
    %2973 = vmatmul.f32.gmra.mxu0 %v2479
    %v2974 = vpop.f32.mrf.mxu0
    %v2975 = vadd.f32 %v2870, %v2974
    %2976 = vdwg.mxu0
    %2977 = vmatpush.msra.mxu0 %v2736
    %2978 = vmatpush.msra.mxu0 %v2732
    %2979 = vmatpush.msra.mxu0 %v2728
    %2980 = vmatpush.msra.mxu0 %v2724
    %2981 = vmatpush.msra.mxu0 %v2720
    %2982 = vmatpush.msra.mxu0 %v2716
    %2983 = vmatpush.msra.mxu0 %v2712
    %2984 = vmatpush.msra.mxu0 %v2708
    %2985 = vmatpush.msra.mxu0 %v2704
    %2986 = vmatpush.msra.mxu0 %v2700
    %2987 = vmatpush.msra.mxu0 %v2696
    %2988 = vmatpush.msra.mxu0 %v2692
    %2989 = vmatpush.msra.mxu0 %v2688
    %2990 = vmatpush.msra.mxu0 %v2684
    %2991 = vmatpush.msra.mxu0 %v2680
    %2992 = vmatpush.msra.mxu0 %v2676
    %2993 = vmatmul.f32.gmra.mxu0 %v2480
    %v2994 = vpop.f32.mrf.mxu0
    %v2995 = vadd.f32 %v2975, %v2994
    %2996 = vdwg.mxu0
    %2997 = vmatpush.msra.mxu0 %v2800
    %2998 = vmatpush.msra.mxu0 %v2796
    %2999 = vmatpush.msra.mxu0 %v2792
    %3000 = vmatpush.msra.mxu0 %v2788
    %3001 = vmatpush.msra.mxu0 %v2784
    %3002 = vmatpush.msra.mxu0 %v2780
    %3003 = vmatpush.msra.mxu0 %v2776
    %3004 = vmatpush.msra.mxu0 %v2772
    %3005 = vmatpush.msra.mxu0 %v2768
    %3006 = vmatpush.msra.mxu0 %v2764
    %3007 = vmatpush.msra.mxu0 %v2760
    %3008 = vmatpush.msra.mxu0 %v2756
    %3009 = vmatpush.msra.mxu0 %v2752
    %3010 = vmatpush.msra.mxu0 %v2748
    %3011 = vmatpush.msra.mxu0 %v2744
    %3012 = vmatpush.msra.mxu0 %v2740
    %3013 = vmatmul.f32.gmra.mxu0 %v2481
    %v3014 = vpop.f32.mrf.mxu0
    %v3015 = vadd.f32 %v2995, %v3014
    %3016 = vdwg.mxu0
    %3017 = vmatpush.msra.mxu0 %v2864
    %3018 = vmatpush.msra.mxu0 %v2860
    %3019 = vmatpush.msra.mxu0 %v2856
    %3020 = vmatpush.msra.mxu0 %v2852
    %3021 = vmatpush.msra.mxu0 %v2848
    %3022 = vmatpush.msra.mxu0 %v2844
    %3023 = vmatpush.msra.mxu0 %v2840
    %3024 = vmatpush.msra.mxu0 %v2836
    %3025 = vmatpush.msra.mxu0 %v2832
    %3026 = vmatpush.msra.mxu0 %v2828
    %3027 = vmatpush.msra.mxu0 %v2824
    %3028 = vmatpush.msra.mxu0 %v2820
    %3029 = vmatpush.msra.mxu0 %v2816
    %3030 = vmatpush.msra.mxu0 %v2812
    %3031 = vmatpush.msra.mxu0 %v2808
    %3032 = vmatpush.msra.mxu0 %v2804
    %3033 = vmatmul.f32.gmra.mxu0 %v2482
    %v3034 = vpop.f32.mrf.mxu0
    %v3035 = vadd.f32 %v3015, %v3034
    %3036 = vdwg.mxu0
    %3037 = vmatpush.msra.mxu0 %v2673
    %3038 = vmatpush.msra.mxu0 %v2669
    %3039 = vmatpush.msra.mxu0 %v2665
    %3040 = vmatpush.msra.mxu0 %v2661
    %3041 = vmatpush.msra.mxu0 %v2657
    %3042 = vmatpush.msra.mxu0 %v2653
    %3043 = vmatpush.msra.mxu0 %v2649
    %3044 = vmatpush.msra.mxu0 %v2645
    %3045 = vmatpush.msra.mxu0 %v2641
    %3046 = vmatpush.msra.mxu0 %v2637
    %3047 = vmatpush.msra.mxu0 %v2633
    %3048 = vmatpush.msra.mxu0 %v2629
    %3049 = vmatpush.msra.mxu0 %v2625
    %3050 = vmatpush.msra.mxu0 %v2621
    %3051 = vmatpush.msra.mxu0 %v2617
    %3052 = vmatpush.msra.mxu0 %v2613
    %3053 = vmatmul.f32.gmra.mxu0 %v2479
    %v3054 = vpop.f32.mrf.mxu0
    %v3055 = vadd.f32 %v2871, %v3054
    %3056 = vdwg.mxu0
    %3057 = vmatpush.msra.mxu0 %v2737
    %3058 = vmatpush.msra.mxu0 %v2733
    %3059 = vmatpush.msra.mxu0 %v2729
    %3060 = vmatpush.msra.mxu0 %v2725
    %3061 = vmatpush.msra.mxu0 %v2721
    %3062 = vmatpush.msra.mxu0 %v2717
    %3063 = vmatpush.msra.mxu0 %v2713
    %3064 = vmatpush.msra.mxu0 %v2709
    %3065 = vmatpush.msra.mxu0 %v2705
    %3066 = vmatpush.msra.mxu0 %v2701
    %3067 = vmatpush.msra.mxu0 %v2697
    %3068 = vmatpush.msra.mxu0 %v2693
    %3069 = vmatpush.msra.mxu0 %v2689
    %3070 = vmatpush.msra.mxu0 %v2685
    %3071 = vmatpush.msra.mxu0 %v2681
    %3072 = vmatpush.msra.mxu0 %v2677
    %3073 = vmatmul.f32.gmra.mxu0 %v2480
    %v3074 = vpop.f32.mrf.mxu0
    %v3075 = vadd.f32 %v3055, %v3074
    %3076 = vdwg.mxu0
    %3077 = vmatpush.msra.mxu0 %v2801
    %3078 = vmatpush.msra.mxu0 %v2797
    %3079 = vmatpush.msra.mxu0 %v2793
    %3080 = vmatpush.msra.mxu0 %v2789
    %3081 = vmatpush.msra.mxu0 %v2785
    %3082 = vmatpush.msra.mxu0 %v2781
    %3083 = vmatpush.msra.mxu0 %v2777
    %3084 = vmatpush.msra.mxu0 %v2773
    %3085 = vmatpush.msra.mxu0 %v2769
    %3086 = vmatpush.msra.mxu0 %v2765
    %3087 = vmatpush.msra.mxu0 %v2761
    %3088 = vmatpush.msra.mxu0 %v2757
    %3089 = vmatpush.msra.mxu0 %v2753
    %3090 = vmatpush.msra.mxu0 %v2749
    %3091 = vmatpush.msra.mxu0 %v2745
    %3092 = vmatpush.msra.mxu0 %v2741
    %3093 = vmatmul.f32.gmra.mxu0 %v2481
    %v3094 = vpop.f32.mrf.mxu0
    %v3095 = vadd.f32 %v3075, %v3094
    %3096 = vdwg.mxu0
    %3097 = vmatpush.msra.mxu0 %v2865
    %3098 = vmatpush.msra.mxu0 %v2861
    %3099 = vmatpush.msra.mxu0 %v2857
    %3100 = vmatpush.msra.mxu0 %v2853
    %3101 = vmatpush.msra.mxu0 %v2849
    %3102 = vmatpush.msra.mxu0 %v2845
    %3103 = vmatpush.msra.mxu0 %v2841
    %3104 = vmatpush.msra.mxu0 %v2837
    %3105 = vmatpush.msra.mxu0 %v2833
    %3106 = vmatpush.msra.mxu0 %v2829
    %3107 = vmatpush.msra.mxu0 %v2825
    %3108 = vmatpush.msra.mxu0 %v2821
    %3109 = vmatpush.msra.mxu0 %v2817
    %3110 = vmatpush.msra.mxu0 %v2813
    %3111 = vmatpush.msra.mxu0 %v2809
    %3112 = vmatpush.msra.mxu0 %v2805
    %3113 = vmatmul.f32.gmra.mxu0 %v2482
    %v3114 = vpop.f32.mrf.mxu0
    %v3115 = vadd.f32 %v3095, %v3114
    %3116 = vdwg.mxu0
    %3117 = vmatpush.msra.mxu0 %v2674
    %3118 = vmatpush.msra.mxu0 %v2670
    %3119 = vmatpush.msra.mxu0 %v2666
    %3120 = vmatpush.msra.mxu0 %v2662
    %3121 = vmatpush.msra.mxu0 %v2658
    %3122 = vmatpush.msra.mxu0 %v2654
    %3123 = vmatpush.msra.mxu0 %v2650
    %3124 = vmatpush.msra.mxu0 %v2646
    %3125 = vmatpush.msra.mxu0 %v2642
    %3126 = vmatpush.msra.mxu0 %v2638
    %3127 = vmatpush.msra.mxu0 %v2634
    %3128 = vmatpush.msra.mxu0 %v2630
    %3129 = vmatpush.msra.mxu0 %v2626
    %3130 = vmatpush.msra.mxu0 %v2622
    %3131 = vmatpush.msra.mxu0 %v2618
    %3132 = vmatpush.msra.mxu0 %v2614
    %3133 = vmatmul.f32.gmra.mxu0 %v2479
    %v3134 = vpop.f32.mrf.mxu0
    %v3135 = vadd.f32 %v2872, %v3134
    %3136 = vdwg.mxu0
    %3137 = vmatpush.msra.mxu0 %v2738
    %3138 = vmatpush.msra.mxu0 %v2734
    %3139 = vmatpush.msra.mxu0 %v2730
    %3140 = vmatpush.msra.mxu0 %v2726
    %3141 = vmatpush.msra.mxu0 %v2722
    %3142 = vmatpush.msra.mxu0 %v2718
    %3143 = vmatpush.msra.mxu0 %v2714
    %3144 = vmatpush.msra.mxu0 %v2710
    %3145 = vmatpush.msra.mxu0 %v2706
    %3146 = vmatpush.msra.mxu0 %v2702
    %3147 = vmatpush.msra.mxu0 %v2698
    %3148 = vmatpush.msra.mxu0 %v2694
    %3149 = vmatpush.msra.mxu0 %v2690
    %3150 = vmatpush.msra.mxu0 %v2686
    %3151 = vmatpush.msra.mxu0 %v2682
    %3152 = vmatpush.msra.mxu0 %v2678
    %3153 = vmatmul.f32.gmra.mxu0 %v2480
    %v3154 = vpop.f32.mrf.mxu0
    %v3155 = vadd.f32 %v3135, %v3154
    %3156 = vdwg.mxu0
    %3157 = vmatpush.msra.mxu0 %v2802
    %3158 = vmatpush.msra.mxu0 %v2798
    %3159 = vmatpush.msra.mxu0 %v2794
    %3160 = vmatpush.msra.mxu0 %v2790
    %3161 = vmatpush.msra.mxu0 %v2786
    %3162 = vmatpush.msra.mxu0 %v2782
    %3163 = vmatpush.msra.mxu0 %v2778
    %3164 = vmatpush.msra.mxu0 %v2774
    %3165 = vmatpush.msra.mxu0 %v2770
    %3166 = vmatpush.msra.mxu0 %v2766
    %3167 = vmatpush.msra.mxu0 %v2762
    %3168 = vmatpush.msra.mxu0 %v2758
    %3169 = vmatpush.msra.mxu0 %v2754
    %3170 = vmatpush.msra.mxu0 %v2750
    %3171 = vmatpush.msra.mxu0 %v2746
    %3172 = vmatpush.msra.mxu0 %v2742
    %3173 = vmatmul.f32.gmra.mxu0 %v2481
    %v3174 = vpop.f32.mrf.mxu0
    %v3175 = vadd.f32 %v3155, %v3174
    %3176 = vdwg.mxu0
    %3177 = vmatpush.msra.mxu0 %v2866
    %3178 = vmatpush.msra.mxu0 %v2862
    %3179 = vmatpush.msra.mxu0 %v2858
    %3180 = vmatpush.msra.mxu0 %v2854
    %3181 = vmatpush.msra.mxu0 %v2850
    %3182 = vmatpush.msra.mxu0 %v2846
    %3183 = vmatpush.msra.mxu0 %v2842
    %3184 = vmatpush.msra.mxu0 %v2838
    %3185 = vmatpush.msra.mxu0 %v2834
    %3186 = vmatpush.msra.mxu0 %v2830
    %3187 = vmatpush.msra.mxu0 %v2826
    %3188 = vmatpush.msra.mxu0 %v2822
    %3189 = vmatpush.msra.mxu0 %v2818
    %3190 = vmatpush.msra.mxu0 %v2814
    %3191 = vmatpush.msra.mxu0 %v2810
    %3192 = vmatpush.msra.mxu0 %v2806
    %3193 = vmatmul.f32.gmra.mxu0 %v2482
    %v3194 = vpop.f32.mrf.mxu0
    %v3195 = vadd.f32 %v3175, %v3194
    %3196 = vdwg.mxu0
    %vm3197 = vcmask 64512
    %v3199 = vsel %vm3197, %v446, 0
    %3201 = vmatpush.msra.mxu0 0.0
    %3202 = vmatpush.msra.mxu0 0.0
    %3203 = vmatpush.msra.mxu0 0.0
    %3204 = vmatpush.msra.mxu0 0.0
    %3205 = vmatpush.msra.mxu0 0.0
    %3206 = vmatpush.msra.mxu0 0.0
    %3207 = vmatpush.msra.mxu0 0.0
    %3208 = vmatpush.msra.mxu0 0.0
    %3209 = vmatpush.msra.mxu0 0.0
    %3210 = vmatpush.msra.mxu0 0.0
    %3211 = vmatpush.msra.mxu0 0.0
    %3212 = vmatpush.msra.mxu0 0.0
    %3213 = vmatpush.msra.mxu0 0.0
    %3214 = vmatpush.msra.mxu0 0.0
    %3215 = vmatpush.msra.mxu0 0.0
    %3216 = vmatpush.msra.mxu0 %v1523
    %3217 = vmatmul.f32.gmra.mxu0 %v3199
    %v3218 = vpop.f32.mrf.mxu0
    %v3219 = vadd.f32 0.0, %v3218
    %3220 = vdwg.mxu0
    %3221 = vmatpush.msra.mxu0 0.0
    %3222 = vmatpush.msra.mxu0 0.0
    %3223 = vmatpush.msra.mxu0 0.0
    %3224 = vmatpush.msra.mxu0 0.0
    %3225 = vmatpush.msra.mxu0 0.0
    %3226 = vmatpush.msra.mxu0 0.0
    %3227 = vmatpush.msra.mxu0 0.0
    %3228 = vmatpush.msra.mxu0 0.0
    %3229 = vmatpush.msra.mxu0 0.0
    %3230 = vmatpush.msra.mxu0 0.0
    %3231 = vmatpush.msra.mxu0 0.0
    %3232 = vmatpush.msra.mxu0 0.0
    %3233 = vmatpush.msra.mxu0 0.0
    %3234 = vmatpush.msra.mxu0 0.0
    %3235 = vmatpush.msra.mxu0 0.0
    %3236 = vmatpush.msra.mxu0 %v1603
    %3237 = vmatmul.f32.gmra.mxu0 %v3199
    %v3238 = vpop.f32.mrf.mxu0
    %v3239 = vadd.f32 0.0, %v3238
    %3240 = vdwg.mxu0
    %3241 = vmatpush.msra.mxu0 0.0
    %3242 = vmatpush.msra.mxu0 0.0
    %3243 = vmatpush.msra.mxu0 0.0
    %3244 = vmatpush.msra.mxu0 0.0
    %3245 = vmatpush.msra.mxu0 0.0
    %3246 = vmatpush.msra.mxu0 0.0
    %3247 = vmatpush.msra.mxu0 0.0
    %3248 = vmatpush.msra.mxu0 0.0
    %3249 = vmatpush.msra.mxu0 0.0
    %3250 = vmatpush.msra.mxu0 0.0
    %3251 = vmatpush.msra.mxu0 0.0
    %3252 = vmatpush.msra.mxu0 0.0
    %3253 = vmatpush.msra.mxu0 0.0
    %3254 = vmatpush.msra.mxu0 0.0
    %3255 = vmatpush.msra.mxu0 0.0
    %3256 = vmatpush.msra.mxu0 %v1683
    %3257 = vmatmul.f32.gmra.mxu0 %v3199
    %v3258 = vpop.f32.mrf.mxu0
    %v3259 = vadd.f32 0.0, %v3258
    %3260 = vdwg.mxu0
    %3261 = vmatpush.msra.mxu0 0.0
    %3262 = vmatpush.msra.mxu0 0.0
    %3263 = vmatpush.msra.mxu0 0.0
    %3264 = vmatpush.msra.mxu0 0.0
    %3265 = vmatpush.msra.mxu0 0.0
    %3266 = vmatpush.msra.mxu0 0.0
    %3267 = vmatpush.msra.mxu0 0.0
    %3268 = vmatpush.msra.mxu0 0.0
    %3269 = vmatpush.msra.mxu0 0.0
    %3270 = vmatpush.msra.mxu0 0.0
    %3271 = vmatpush.msra.mxu0 0.0
    %3272 = vmatpush.msra.mxu0 0.0
    %3273 = vmatpush.msra.mxu0 0.0
    %3274 = vmatpush.msra.mxu0 0.0
    %3275 = vmatpush.msra.mxu0 0.0
    %3276 = vmatpush.msra.mxu0 %v1763
    %3277 = vmatmul.f32.gmra.mxu0 %v3199
    %v3278 = vpop.f32.mrf.mxu0
    %v3279 = vadd.f32 0.0, %v3278
    %3280 = vdwg.mxu0
    %3281 = vmatpush.msra.mxu0 0.0
    %3282 = vmatpush.msra.mxu0 0.0
    %3283 = vmatpush.msra.mxu0 0.0
    %3284 = vmatpush.msra.mxu0 0.0
    %3285 = vmatpush.msra.mxu0 0.0
    %3286 = vmatpush.msra.mxu0 0.0
    %3287 = vmatpush.msra.mxu0 0.0
    %3288 = vmatpush.msra.mxu0 0.0
    %3289 = vmatpush.msra.mxu0 0.0
    %3290 = vmatpush.msra.mxu0 0.0
    %3291 = vmatpush.msra.mxu0 0.0
    %3292 = vmatpush.msra.mxu0 0.0
    %3293 = vmatpush.msra.mxu0 0.0
    %3294 = vmatpush.msra.mxu0 0.0
    %3295 = vmatpush.msra.mxu0 0.0
    %3296 = vmatpush.msra.mxu0 %v2237
    %3297 = vmatmul.f32.gmra.mxu0 %v3199
    %v3298 = vpop.f32.mrf.mxu0
    %v3299 = vadd.f32 0.0, %v3298
    %3300 = vdwg.mxu0
    %3301 = vmatpush.msra.mxu0 0.0
    %3302 = vmatpush.msra.mxu0 0.0
    %3303 = vmatpush.msra.mxu0 0.0
    %3304 = vmatpush.msra.mxu0 0.0
    %3305 = vmatpush.msra.mxu0 0.0
    %3306 = vmatpush.msra.mxu0 0.0
    %3307 = vmatpush.msra.mxu0 0.0
    %3308 = vmatpush.msra.mxu0 0.0
    %3309 = vmatpush.msra.mxu0 0.0
    %3310 = vmatpush.msra.mxu0 0.0
    %3311 = vmatpush.msra.mxu0 0.0
    %3312 = vmatpush.msra.mxu0 0.0
    %3313 = vmatpush.msra.mxu0 0.0
    %3314 = vmatpush.msra.mxu0 0.0
    %3315 = vmatpush.msra.mxu0 0.0
    %3316 = vmatpush.msra.mxu0 %v2317
    %3317 = vmatmul.f32.gmra.mxu0 %v3199
    %v3318 = vpop.f32.mrf.mxu0
    %v3319 = vadd.f32 0.0, %v3318
    %3320 = vdwg.mxu0
    %3321 = vmatpush.msra.mxu0 0.0
    %3322 = vmatpush.msra.mxu0 0.0
    %3323 = vmatpush.msra.mxu0 0.0
    %3324 = vmatpush.msra.mxu0 0.0
    %3325 = vmatpush.msra.mxu0 0.0
    %3326 = vmatpush.msra.mxu0 0.0
    %3327 = vmatpush.msra.mxu0 0.0
    %3328 = vmatpush.msra.mxu0 0.0
    %3329 = vmatpush.msra.mxu0 0.0
    %3330 = vmatpush.msra.mxu0 0.0
    %3331 = vmatpush.msra.mxu0 0.0
    %3332 = vmatpush.msra.mxu0 0.0
    %3333 = vmatpush.msra.mxu0 0.0
    %3334 = vmatpush.msra.mxu0 0.0
    %3335 = vmatpush.msra.mxu0 0.0
    %3336 = vmatpush.msra.mxu0 %v2397
    %3337 = vmatmul.f32.gmra.mxu0 %v3199
    %v3338 = vpop.f32.mrf.mxu0
    %v3339 = vadd.f32 0.0, %v3338
    %3340 = vdwg.mxu0
    %3341 = vmatpush.msra.mxu0 0.0
    %3342 = vmatpush.msra.mxu0 0.0
    %3343 = vmatpush.msra.mxu0 0.0
    %3344 = vmatpush.msra.mxu0 0.0
    %3345 = vmatpush.msra.mxu0 0.0
    %3346 = vmatpush.msra.mxu0 0.0
    %3347 = vmatpush.msra.mxu0 0.0
    %3348 = vmatpush.msra.mxu0 0.0
    %3349 = vmatpush.msra.mxu0 0.0
    %3350 = vmatpush.msra.mxu0 0.0
    %3351 = vmatpush.msra.mxu0 0.0
    %3352 = vmatpush.msra.mxu0 0.0
    %3353 = vmatpush.msra.mxu0 0.0
    %3354 = vmatpush.msra.mxu0 0.0
    %3355 = vmatpush.msra.mxu0 0.0
    %3356 = vmatpush.msra.mxu0 %v2477
    %3357 = vmatmul.f32.gmra.mxu0 %v3199
    %v3358 = vpop.f32.mrf.mxu0
    %v3359 = vadd.f32 0.0, %v3358
    %3360 = vdwg.mxu0
    %3361 = vmatpush.msra.mxu0 0.0
    %3362 = vmatpush.msra.mxu0 0.0
    %3363 = vmatpush.msra.mxu0 0.0
    %3364 = vmatpush.msra.mxu0 0.0
    %3365 = vmatpush.msra.mxu0 0.0
    %3366 = vmatpush.msra.mxu0 0.0
    %3367 = vmatpush.msra.mxu0 0.0
    %3368 = vmatpush.msra.mxu0 0.0
    %3369 = vmatpush.msra.mxu0 0.0
    %3370 = vmatpush.msra.mxu0 0.0
    %3371 = vmatpush.msra.mxu0 0.0
    %3372 = vmatpush.msra.mxu0 0.0
    %3373 = vmatpush.msra.mxu0 0.0
    %3374 = vmatpush.msra.mxu0 0.0
    %3375 = vmatpush.msra.mxu0 0.0
    %3376 = vmatpush.msra.mxu0 %v2955
    %3377 = vmatmul.f32.gmra.mxu0 %v3199
    %v3378 = vpop.f32.mrf.mxu0
    %v3379 = vadd.f32 0.0, %v3378
    %3380 = vdwg.mxu0
    %3381 = vmatpush.msra.mxu0 0.0
    %3382 = vmatpush.msra.mxu0 0.0
    %3383 = vmatpush.msra.mxu0 0.0
    %3384 = vmatpush.msra.mxu0 0.0
    %3385 = vmatpush.msra.mxu0 0.0
    %3386 = vmatpush.msra.mxu0 0.0
    %3387 = vmatpush.msra.mxu0 0.0
    %3388 = vmatpush.msra.mxu0 0.0
    %3389 = vmatpush.msra.mxu0 0.0
    %3390 = vmatpush.msra.mxu0 0.0
    %3391 = vmatpush.msra.mxu0 0.0
    %3392 = vmatpush.msra.mxu0 0.0
    %3393 = vmatpush.msra.mxu0 0.0
    %3394 = vmatpush.msra.mxu0 0.0
    %3395 = vmatpush.msra.mxu0 0.0
    %3396 = vmatpush.msra.mxu0 %v3035
    %3397 = vmatmul.f32.gmra.mxu0 %v3199
    %v3398 = vpop.f32.mrf.mxu0
    %v3399 = vadd.f32 0.0, %v3398
    %3400 = vdwg.mxu0
    %3401 = vmatpush.msra.mxu0 0.0
    %3402 = vmatpush.msra.mxu0 0.0
    %3403 = vmatpush.msra.mxu0 0.0
    %3404 = vmatpush.msra.mxu0 0.0
    %3405 = vmatpush.msra.mxu0 0.0
    %3406 = vmatpush.msra.mxu0 0.0
    %3407 = vmatpush.msra.mxu0 0.0
    %3408 = vmatpush.msra.mxu0 0.0
    %3409 = vmatpush.msra.mxu0 0.0
    %3410 = vmatpush.msra.mxu0 0.0
    %3411 = vmatpush.msra.mxu0 0.0
    %3412 = vmatpush.msra.mxu0 0.0
    %3413 = vmatpush.msra.mxu0 0.0
    %3414 = vmatpush.msra.mxu0 0.0
    %3415 = vmatpush.msra.mxu0 0.0
    %3416 = vmatpush.msra.mxu0 %v3115
    %3417 = vmatmul.f32.gmra.mxu0 %v3199
    %v3418 = vpop.f32.mrf.mxu0
    %v3419 = vadd.f32 0.0, %v3418
    %3420 = vdwg.mxu0
    %3421 = vmatpush.msra.mxu0 0.0
    %3422 = vmatpush.msra.mxu0 0.0
    %3423 = vmatpush.msra.mxu0 0.0
    %3424 = vmatpush.msra.mxu0 0.0
    %3425 = vmatpush.msra.mxu0 0.0
    %3426 = vmatpush.msra.mxu0 0.0
    %3427 = vmatpush.msra.mxu0 0.0
    %3428 = vmatpush.msra.mxu0 0.0
    %3429 = vmatpush.msra.mxu0 0.0
    %3430 = vmatpush.msra.mxu0 0.0
    %3431 = vmatpush.msra.mxu0 0.0
    %3432 = vmatpush.msra.mxu0 0.0
    %3433 = vmatpush.msra.mxu0 0.0
    %3434 = vmatpush.msra.mxu0 0.0
    %3435 = vmatpush.msra.mxu0 0.0
    %3436 = vmatpush.msra.mxu0 %v3195
    %3437 = vmatmul.f32.gmra.mxu0 %v3199
    %v3438 = vpop.f32.mrf.mxu0
    %v3439 = vadd.f32 0.0, %v3438
    %3440 = vdwg.mxu0
    %v3441 = vld [vmem:[#allocation11] sm:$0xf]
    %v3443 = vperm.slane %v3441, 0
    %v3444 = vperm.slane %v3441, 1
    %v3445 = vperm.slane %v3441, 2
    %v3446 = vperm.slane %v3441, 3
    %v3451 = vadd.f32 %v3219, %v3443
    %v3452 = vadd.f32 %v3239, %v3444
    %v3453 = vadd.f32 %v3259, %v3445
    %v3454 = vadd.f32 %v3279, %v3446
    %v3455 = vmax.f32 %v3451, 0.0
    %v3456 = vmax.f32 %v3452, 0.0
    %v3457 = vmax.f32 %v3453, 0.0
    %v3458 = vmax.f32 %v3454, 0.0
    %v3459 = vld [vmem:[#allocation19] sm:$0xf]
    %v3461 = vperm.slane %v3459, 0
    %v3462 = vperm.slane %v3459, 1
    %v3463 = vperm.slane %v3459, 2
    %v3464 = vperm.slane %v3459, 3
    %v3469 = vadd.f32 %v3299, %v3461
    %v3470 = vadd.f32 %v3319, %v3462
    %v3471 = vadd.f32 %v3339, %v3463
    %v3472 = vadd.f32 %v3359, %v3464
    %v3473 = vmax.f32 %v3469, 0.0
    %v3474 = vmax.f32 %v3470, 0.0
    %v3475 = vmax.f32 %v3471, 0.0
    %v3476 = vmax.f32 %v3472, 0.0
    %v3477 = vadd.f32 %v3379, %v2955
    %v3478 = vadd.f32 %v3399, %v3035
    %v3479 = vadd.f32 %v3419, %v3115
    %v3480 = vadd.f32 %v3439, %v3195
    %v3481 = vld [vmem:[#allocation23] sm:$0xf]
    %v3483 = vperm.slane %v3481, 0
    %v3484 = vperm.slane %v3481, 1
    %v3485 = vperm.slane %v3481, 2
    %v3486 = vperm.slane %v3481, 3
    %v3491 = vadd.f32 %v3477, %v3483
    %v3492 = vadd.f32 %v3478, %v3484
    %v3493 = vadd.f32 %v3479, %v3485
    %v3494 = vadd.f32 %v3480, %v3486
    %v3495 = vmax.f32 %v3491, 0.0
    %v3496 = vmax.f32 %v3492, 0.0
    %v3497 = vmax.f32 %v3493, 0.0
    %v3498 = vmax.f32 %v3494, 0.0
    %v3499 = vld [vmem:[%s33] sm:$0xf]
    %v3500 = vld [vmem:[%s33 + $0x4] sm:$0xf]
    %v3501 = vld [vmem:[%s33 + $0x8] sm:$0xf]
    %v3502 = vld [vmem:[%s33 + $0xc] sm:$0xf]
    %v3503 = vld [vmem:[%s33 + $0x10] sm:$0xf]
    %v3504 = vld [vmem:[%s33 + $0x14] sm:$0xf]
    %v3505 = vld [vmem:[%s33 + $0x18] sm:$0xf]
    %v3506 = vld [vmem:[%s33 + $0x1c] sm:$0xf]
    %v3507 = vld [vmem:[%s33 + $0x20] sm:$0xf]
    %v3508 = vld [vmem:[%s33 + $0x24] sm:$0xf]
    %v3509 = vld [vmem:[%s33 + $0x28] sm:$0xf]
    %v3510 = vld [vmem:[%s33 + $0x2c] sm:$0xf]
    %v3511 = vld [vmem:[%s33 + $0x30] sm:$0xf]
    %v3512 = vld [vmem:[%s33 + $0x34] sm:$0xf]
    %v3513 = vld [vmem:[%s33 + $0x38] sm:$0xf]
    %v3514 = vld [vmem:[%s33 + $0x3c] sm:$0xf]
    %v3515 = vld [vmem:[%s33 + $0x40] sm:$0xf]
    %v3516 = vld [vmem:[%s33 + $0x44] sm:$0xf]
    %v3517 = vld [vmem:[%s33 + $0x48] sm:$0xf]
    %v3518 = vld [vmem:[%s33 + $0x4c] sm:$0xf]
    %v3519 = vld [vmem:[%s33 + $0x50] sm:$0xf]
    %v3520 = vld [vmem:[%s33 + $0x54] sm:$0xf]
    %v3521 = vld [vmem:[%s33 + $0x58] sm:$0xf]
    %v3522 = vld [vmem:[%s33 + $0x5c] sm:$0xf]
    %v3523 = vld [vmem:[%s33 + $0x60] sm:$0xf]
    %v3524 = vld [vmem:[%s33 + $0x64] sm:$0xf]
    %v3525 = vld [vmem:[%s33 + $0x68] sm:$0xf]
    %v3526 = vld [vmem:[%s33 + $0x6c] sm:$0xf]
    %v3527 = vld [vmem:[%s33 + $0x70] sm:$0xf]
    %v3528 = vld [vmem:[%s33 + $0x74] sm:$0xf]
    %v3529 = vld [vmem:[%s33 + $0x78] sm:$0xf]
    %v3530 = vld [vmem:[%s33 + $0x7c] sm:$0xf]
    %v3531 = vld [vmem:[%s33 + $0x80] sm:$0xf]
    %v3532 = vld [vmem:[%s33 + $0x84] sm:$0xf]
    %v3533 = vld [vmem:[%s33 + $0x88] sm:$0xf]
    %v3534 = vld [vmem:[%s33 + $0x8c] sm:$0xf]
    %v3535 = vld [vmem:[%s33 + $0x90] sm:$0xf]
    %v3536 = vld [vmem:[%s33 + $0x94] sm:$0xf]
    %v3537 = vld [vmem:[%s33 + $0x98] sm:$0xf]
    %v3538 = vld [vmem:[%s33 + $0x9c] sm:$0xf]
    %v3539 = vld [vmem:[%s33 + $0xa0] sm:$0xf]
    %v3540 = vld [vmem:[%s33 + $0xa4] sm:$0xf]
    %v3541 = vld [vmem:[%s33 + $0xa8] sm:$0xf]
    %v3542 = vld [vmem:[%s33 + $0xac] sm:$0xf]
    %v3543 = vld [vmem:[%s33 + $0xb0] sm:$0xf]
    %v3544 = vld [vmem:[%s33 + $0xb4] sm:$0xf]
    %v3545 = vld [vmem:[%s33 + $0xb8] sm:$0xf]
    %v3546 = vld [vmem:[%s33 + $0xbc] sm:$0xf]
    %v3547 = vld [vmem:[%s33 + $0xc0] sm:$0xf]
    %v3548 = vld [vmem:[%s33 + $0xc4] sm:$0xf]
    %v3549 = vld [vmem:[%s33 + $0xc8] sm:$0xf]
    %v3550 = vld [vmem:[%s33 + $0xcc] sm:$0xf]
    %v3551 = vld [vmem:[%s33 + $0xd0] sm:$0xf]
    %v3552 = vld [vmem:[%s33 + $0xd4] sm:$0xf]
    %v3553 = vld [vmem:[%s33 + $0xd8] sm:$0xf]
    %v3554 = vld [vmem:[%s33 + $0xdc] sm:$0xf]
    %v3555 = vld [vmem:[%s33 + $0xe0] sm:$0xf]
    %v3556 = vld [vmem:[%s33 + $0xe4] sm:$0xf]
    %v3557 = vld [vmem:[%s33 + $0xe8] sm:$0xf]
    %v3558 = vld [vmem:[%s33 + $0xec] sm:$0xf]
    %v3559 = vld [vmem:[%s33 + $0xf0] sm:$0xf]
    %v3560 = vld [vmem:[%s33 + $0xf4] sm:$0xf]
    %v3561 = vld [vmem:[%s33 + $0xf8] sm:$0xf]
    %v3562 = vld [vmem:[%s33 + $0xfc] sm:$0xf]
    %v3563 = vunpack.c.l.bf16 %v3499
    %v3564 = vunpack.c.l.bf16 %v3500
    %v3565 = vunpack.c.l.bf16 %v3501
    %v3566 = vunpack.c.l.bf16 %v3502
    %v3567 = vunpack.c.l.bf16 %v3503
    %v3568 = vunpack.c.l.bf16 %v3504
    %v3569 = vunpack.c.l.bf16 %v3505
    %v3570 = vunpack.c.l.bf16 %v3506
    %v3571 = vunpack.c.l.bf16 %v3507
    %v3572 = vunpack.c.l.bf16 %v3508
    %v3573 = vunpack.c.l.bf16 %v3509
    %v3574 = vunpack.c.l.bf16 %v3510
    %v3575 = vunpack.c.l.bf16 %v3511
    %v3576 = vunpack.c.l.bf16 %v3512
    %v3577 = vunpack.c.l.bf16 %v3513
    %v3578 = vunpack.c.l.bf16 %v3514
    %v3579 = vunpack.c.l.bf16 %v3515
    %v3580 = vunpack.c.l.bf16 %v3516
    %v3581 = vunpack.c.l.bf16 %v3517
    %v3582 = vunpack.c.l.bf16 %v3518
    %v3583 = vunpack.c.l.bf16 %v3519
    %v3584 = vunpack.c.l.bf16 %v3520
    %v3585 = vunpack.c.l.bf16 %v3521
    %v3586 = vunpack.c.l.bf16 %v3522
    %v3587 = vunpack.c.l.bf16 %v3523
    %v3588 = vunpack.c.l.bf16 %v3524
    %v3589 = vunpack.c.l.bf16 %v3525
    %v3590 = vunpack.c.l.bf16 %v3526
    %v3591 = vunpack.c.l.bf16 %v3527
    %v3592 = vunpack.c.l.bf16 %v3528
    %v3593 = vunpack.c.l.bf16 %v3529
    %v3594 = vunpack.c.l.bf16 %v3530
    %v3595 = vunpack.c.l.bf16 %v3531
    %v3596 = vunpack.c.l.bf16 %v3532
    %v3597 = vunpack.c.l.bf16 %v3533
    %v3598 = vunpack.c.l.bf16 %v3534
    %v3599 = vunpack.c.l.bf16 %v3535
    %v3600 = vunpack.c.l.bf16 %v3536
    %v3601 = vunpack.c.l.bf16 %v3537
    %v3602 = vunpack.c.l.bf16 %v3538
    %v3603 = vunpack.c.l.bf16 %v3539
    %v3604 = vunpack.c.l.bf16 %v3540
    %v3605 = vunpack.c.l.bf16 %v3541
    %v3606 = vunpack.c.l.bf16 %v3542
    %v3607 = vunpack.c.l.bf16 %v3543
    %v3608 = vunpack.c.l.bf16 %v3544
    %v3609 = vunpack.c.l.bf16 %v3545
    %v3610 = vunpack.c.l.bf16 %v3546
    %v3611 = vunpack.c.l.bf16 %v3547
    %v3612 = vunpack.c.l.bf16 %v3548
    %v3613 = vunpack.c.l.bf16 %v3549
    %v3614 = vunpack.c.l.bf16 %v3550
    %v3615 = vunpack.c.l.bf16 %v3551
    %v3616 = vunpack.c.l.bf16 %v3552
    %v3617 = vunpack.c.l.bf16 %v3553
    %v3618 = vunpack.c.l.bf16 %v3554
    %v3619 = vunpack.c.l.bf16 %v3555
    %v3620 = vunpack.c.l.bf16 %v3556
    %v3621 = vunpack.c.l.bf16 %v3557
    %v3622 = vunpack.c.l.bf16 %v3558
    %v3623 = vunpack.c.l.bf16 %v3559
    %v3624 = vunpack.c.l.bf16 %v3560
    %v3625 = vunpack.c.l.bf16 %v3561
    %v3626 = vunpack.c.l.bf16 %v3562
    %v3627 = vld [vmem:[#allocation25] sm:$0x1]
    %v3629 = vperm.slane %v3627, 0
    %3631 = vmatpush.msra.mxu0 %v3578
    %3632 = vmatpush.msra.mxu0 %v3577
    %3633 = vmatpush.msra.mxu0 %v3576
    %3634 = vmatpush.msra.mxu0 %v3575
    %3635 = vmatpush.msra.mxu0 %v3574
    %3636 = vmatpush.msra.mxu0 %v3573
    %3637 = vmatpush.msra.mxu0 %v3572
    %3638 = vmatpush.msra.mxu0 %v3571
    %3639 = vmatpush.msra.mxu0 %v3570
    %3640 = vmatpush.msra.mxu0 %v3569
    %3641 = vmatpush.msra.mxu0 %v3568
    %3642 = vmatpush.msra.mxu0 %v3567
    %3643 = vmatpush.msra.mxu0 %v3566
    %3644 = vmatpush.msra.mxu0 %v3565
    %3645 = vmatpush.msra.mxu0 %v3564
    %3646 = vmatpush.msra.mxu0 %v3563
    %3647 = vmatmul.f32.gmra.mxu0 %v3495
    %v3648 = vpop.f32.mrf.mxu0
    %v3649 = vadd.f32 %v3629, %v3648
    %3650 = vdwg.mxu0
    %3651 = vmatpush.msra.mxu0 %v3594
    %3652 = vmatpush.msra.mxu0 %v3593
    %3653 = vmatpush.msra.mxu0 %v3592
    %3654 = vmatpush.msra.mxu0 %v3591
    %3655 = vmatpush.msra.mxu0 %v3590
    %3656 = vmatpush.msra.mxu0 %v3589
    %3657 = vmatpush.msra.mxu0 %v3588
    %3658 = vmatpush.msra.mxu0 %v3587
    %3659 = vmatpush.msra.mxu0 %v3586
    %3660 = vmatpush.msra.mxu0 %v3585
    %3661 = vmatpush.msra.mxu0 %v3584
    %3662 = vmatpush.msra.mxu0 %v3583
    %3663 = vmatpush.msra.mxu0 %v3582
    %3664 = vmatpush.msra.mxu0 %v3581
    %3665 = vmatpush.msra.mxu0 %v3580
    %3666 = vmatpush.msra.mxu0 %v3579
    %3667 = vmatmul.f32.gmra.mxu0 %v3496
    %v3668 = vpop.f32.mrf.mxu0
    %v3669 = vadd.f32 %v3649, %v3668
    %3670 = vdwg.mxu0
    %3671 = vmatpush.msra.mxu0 %v3610
    %3672 = vmatpush.msra.mxu0 %v3609
    %3673 = vmatpush.msra.mxu0 %v3608
    %3674 = vmatpush.msra.mxu0 %v3607
    %3675 = vmatpush.msra.mxu0 %v3606
    %3676 = vmatpush.msra.mxu0 %v3605
    %3677 = vmatpush.msra.mxu0 %v3604
    %3678 = vmatpush.msra.mxu0 %v3603
    %3679 = vmatpush.msra.mxu0 %v3602
    %3680 = vmatpush.msra.mxu0 %v3601
    %3681 = vmatpush.msra.mxu0 %v3600
    %3682 = vmatpush.msra.mxu0 %v3599
    %3683 = vmatpush.msra.mxu0 %v3598
    %3684 = vmatpush.msra.mxu0 %v3597
    %3685 = vmatpush.msra.mxu0 %v3596
    %3686 = vmatpush.msra.mxu0 %v3595
    %3687 = vmatmul.f32.gmra.mxu0 %v3497
    %v3688 = vpop.f32.mrf.mxu0
    %v3689 = vadd.f32 %v3669, %v3688
    %3690 = vdwg.mxu0
    %3691 = vmatpush.msra.mxu0 %v3626
    %3692 = vmatpush.msra.mxu0 %v3625
    %3693 = vmatpush.msra.mxu0 %v3624
    %3694 = vmatpush.msra.mxu0 %v3623
    %3695 = vmatpush.msra.mxu0 %v3622
    %3696 = vmatpush.msra.mxu0 %v3621
    %3697 = vmatpush.msra.mxu0 %v3620
    %3698 = vmatpush.msra.mxu0 %v3619
    %3699 = vmatpush.msra.mxu0 %v3618
    %3700 = vmatpush.msra.mxu0 %v3617
    %3701 = vmatpush.msra.mxu0 %v3616
    %3702 = vmatpush.msra.mxu0 %v3615
    %3703 = vmatpush.msra.mxu0 %v3614
    %3704 = vmatpush.msra.mxu0 %v3613
    %3705 = vmatpush.msra.mxu0 %v3612
    %3706 = vmatpush.msra.mxu0 %v3611
    %3707 = vmatmul.f32.gmra.mxu0 %v3498
    %v3708 = vpop.f32.mrf.mxu0
    %v3709 = vadd.f32 %v3689, %v3708
    %3710 = vdwg.mxu0
    %v3711 = vld [vmem:[%s37] sm:$0xf]
    %v3712 = vld [vmem:[%s37 + $0x4] sm:$0xf]
    %v3713 = vld [vmem:[%s37 + $0x8] sm:$0xf]
    %v3714 = vld [vmem:[%s37 + $0xc] sm:$0xf]
    %v3715 = vld [vmem:[%s37 + $0x10] sm:$0xf]
    %v3716 = vld [vmem:[%s37 + $0x14] sm:$0xf]
    %v3717 = vld [vmem:[%s37 + $0x18] sm:$0xf]
    %v3718 = vld [vmem:[%s37 + $0x1c] sm:$0xf]
    %v3719 = vld [vmem:[%s37 + $0x20] sm:$0xf]
    %v3720 = vld [vmem:[%s37 + $0x24] sm:$0xf]
    %v3721 = vld [vmem:[%s37 + $0x28] sm:$0xf]
    %v3722 = vld [vmem:[%s37 + $0x2c] sm:$0xf]
    %v3723 = vld [vmem:[%s37 + $0x30] sm:$0xf]
    %v3724 = vld [vmem:[%s37 + $0x34] sm:$0xf]
    %v3725 = vld [vmem:[%s37 + $0x38] sm:$0xf]
    %v3726 = vld [vmem:[%s37 + $0x3c] sm:$0xf]
    %v3727 = vld [vmem:[%s37 + $0x40] sm:$0xf]
    %v3728 = vld [vmem:[%s37 + $0x44] sm:$0xf]
    %v3729 = vld [vmem:[%s37 + $0x48] sm:$0xf]
    %v3730 = vld [vmem:[%s37 + $0x4c] sm:$0xf]
    %v3731 = vld [vmem:[%s37 + $0x50] sm:$0xf]
    %v3732 = vld [vmem:[%s37 + $0x54] sm:$0xf]
    %v3733 = vld [vmem:[%s37 + $0x58] sm:$0xf]
    %v3734 = vld [vmem:[%s37 + $0x5c] sm:$0xf]
    %v3735 = vld [vmem:[%s37 + $0x60] sm:$0xf]
    %v3736 = vld [vmem:[%s37 + $0x64] sm:$0xf]
    %v3737 = vld [vmem:[%s37 + $0x68] sm:$0xf]
    %v3738 = vld [vmem:[%s37 + $0x6c] sm:$0xf]
    %v3739 = vld [vmem:[%s37 + $0x70] sm:$0xf]
    %v3740 = vld [vmem:[%s37 + $0x74] sm:$0xf]
    %v3741 = vld [vmem:[%s37 + $0x78] sm:$0xf]
    %v3742 = vld [vmem:[%s37 + $0x7c] sm:$0xf]
    %v3743 = vld [vmem:[%s37 + $0x80] sm:$0xf]
    %v3744 = vld [vmem:[%s37 + $0x84] sm:$0xf]
    %v3745 = vld [vmem:[%s37 + $0x88] sm:$0xf]
    %v3746 = vld [vmem:[%s37 + $0x8c] sm:$0xf]
    %v3747 = vld [vmem:[%s37 + $0x90] sm:$0xf]
    %v3748 = vld [vmem:[%s37 + $0x94] sm:$0xf]
    %v3749 = vld [vmem:[%s37 + $0x98] sm:$0xf]
    %v3750 = vld [vmem:[%s37 + $0x9c] sm:$0xf]
    %v3751 = vld [vmem:[%s37 + $0xa0] sm:$0xf]
    %v3752 = vld [vmem:[%s37 + $0xa4] sm:$0xf]
    %v3753 = vld [vmem:[%s37 + $0xa8] sm:$0xf]
    %v3754 = vld [vmem:[%s37 + $0xac] sm:$0xf]
    %v3755 = vld [vmem:[%s37 + $0xb0] sm:$0xf]
    %v3756 = vld [vmem:[%s37 + $0xb4] sm:$0xf]
    %v3757 = vld [vmem:[%s37 + $0xb8] sm:$0xf]
    %v3758 = vld [vmem:[%s37 + $0xbc] sm:$0xf]
    %v3759 = vld [vmem:[%s37 + $0xc0] sm:$0xf]
    %v3760 = vld [vmem:[%s37 + $0xc4] sm:$0xf]
    %v3761 = vld [vmem:[%s37 + $0xc8] sm:$0xf]
    %v3762 = vld [vmem:[%s37 + $0xcc] sm:$0xf]
    %v3763 = vld [vmem:[%s37 + $0xd0] sm:$0xf]
    %v3764 = vld [vmem:[%s37 + $0xd4] sm:$0xf]
    %v3765 = vld [vmem:[%s37 + $0xd8] sm:$0xf]
    %v3766 = vld [vmem:[%s37 + $0xdc] sm:$0xf]
    %v3767 = vld [vmem:[%s37 + $0xe0] sm:$0xf]
    %v3768 = vld [vmem:[%s37 + $0xe4] sm:$0xf]
    %v3769 = vld [vmem:[%s37 + $0xe8] sm:$0xf]
    %v3770 = vld [vmem:[%s37 + $0xec] sm:$0xf]
    %v3771 = vld [vmem:[%s37 + $0xf0] sm:$0xf]
    %v3772 = vld [vmem:[%s37 + $0xf4] sm:$0xf]
    %v3773 = vld [vmem:[%s37 + $0xf8] sm:$0xf]
    %v3774 = vld [vmem:[%s37 + $0xfc] sm:$0xf]
    %v3775 = vunpack.c.l.bf16 %v3711
    %v3776 = vunpack.c.l.bf16 %v3712
    %v3777 = vunpack.c.l.bf16 %v3713
    %v3778 = vunpack.c.l.bf16 %v3714
    %v3779 = vunpack.c.l.bf16 %v3715
    %v3780 = vunpack.c.l.bf16 %v3716
    %v3781 = vunpack.c.l.bf16 %v3717
    %v3782 = vunpack.c.l.bf16 %v3718
    %v3783 = vunpack.c.l.bf16 %v3719
    %v3784 = vunpack.c.l.bf16 %v3720
    %v3785 = vunpack.c.l.bf16 %v3721
    %v3786 = vunpack.c.l.bf16 %v3722
    %v3787 = vunpack.c.l.bf16 %v3723
    %v3788 = vunpack.c.l.bf16 %v3724
    %v3789 = vunpack.c.l.bf16 %v3725
    %v3790 = vunpack.c.l.bf16 %v3726
    %v3791 = vunpack.c.l.bf16 %v3727
    %v3792 = vunpack.c.l.bf16 %v3728
    %v3793 = vunpack.c.l.bf16 %v3729
    %v3794 = vunpack.c.l.bf16 %v3730
    %v3795 = vunpack.c.l.bf16 %v3731
    %v3796 = vunpack.c.l.bf16 %v3732
    %v3797 = vunpack.c.l.bf16 %v3733
    %v3798 = vunpack.c.l.bf16 %v3734
    %v3799 = vunpack.c.l.bf16 %v3735
    %v3800 = vunpack.c.l.bf16 %v3736
    %v3801 = vunpack.c.l.bf16 %v3737
    %v3802 = vunpack.c.l.bf16 %v3738
    %v3803 = vunpack.c.l.bf16 %v3739
    %v3804 = vunpack.c.l.bf16 %v3740
    %v3805 = vunpack.c.l.bf16 %v3741
    %v3806 = vunpack.c.l.bf16 %v3742
    %v3807 = vunpack.c.l.bf16 %v3743
    %v3808 = vunpack.c.l.bf16 %v3744
    %v3809 = vunpack.c.l.bf16 %v3745
    %v3810 = vunpack.c.l.bf16 %v3746
    %v3811 = vunpack.c.l.bf16 %v3747
    %v3812 = vunpack.c.l.bf16 %v3748
    %v3813 = vunpack.c.l.bf16 %v3749
    %v3814 = vunpack.c.l.bf16 %v3750
    %v3815 = vunpack.c.l.bf16 %v3751
    %v3816 = vunpack.c.l.bf16 %v3752
    %v3817 = vunpack.c.l.bf16 %v3753
    %v3818 = vunpack.c.l.bf16 %v3754
    %v3819 = vunpack.c.l.bf16 %v3755
    %v3820 = vunpack.c.l.bf16 %v3756
    %v3821 = vunpack.c.l.bf16 %v3757
    %v3822 = vunpack.c.l.bf16 %v3758
    %v3823 = vunpack.c.l.bf16 %v3759
    %v3824 = vunpack.c.l.bf16 %v3760
    %v3825 = vunpack.c.l.bf16 %v3761
    %v3826 = vunpack.c.l.bf16 %v3762
    %v3827 = vunpack.c.l.bf16 %v3763
    %v3828 = vunpack.c.l.bf16 %v3764
    %v3829 = vunpack.c.l.bf16 %v3765
    %v3830 = vunpack.c.l.bf16 %v3766
    %v3831 = vunpack.c.l.bf16 %v3767
    %v3832 = vunpack.c.l.bf16 %v3768
    %v3833 = vunpack.c.l.bf16 %v3769
    %v3834 = vunpack.c.l.bf16 %v3770
    %v3835 = vunpack.c.l.bf16 %v3771
    %v3836 = vunpack.c.l.bf16 %v3772
    %v3837 = vunpack.c.l.bf16 %v3773
    %v3838 = vunpack.c.l.bf16 %v3774
    %3839 = vmatpush.msra.mxu0 %v3790
    %3840 = vmatpush.msra.mxu0 %v3789
    %3841 = vmatpush.msra.mxu0 %v3788
    %3842 = vmatpush.msra.mxu0 %v3787
    %3843 = vmatpush.msra.mxu0 %v3786
    %3844 = vmatpush.msra.mxu0 %v3785
    %3845 = vmatpush.msra.mxu0 %v3784
    %3846 = vmatpush.msra.mxu0 %v3783
    %3847 = vmatpush.msra.mxu0 %v3782
    %3848 = vmatpush.msra.mxu0 %v3781
    %3849 = vmatpush.msra.mxu0 %v3780
    %3850 = vmatpush.msra.mxu0 %v3779
    %3851 = vmatpush.msra.mxu0 %v3778
    %3852 = vmatpush.msra.mxu0 %v3777
    %3853 = vmatpush.msra.mxu0 %v3776
    %3854 = vmatpush.msra.mxu0 %v3775
    %3855 = vmatmul.f32.gmra.mxu0 %v3455
    %v3856 = vpop.f32.mrf.mxu0
    %v3857 = vadd.f32 0.0, %v3856
    %3858 = vdwg.mxu0
    %3859 = vmatpush.msra.mxu0 %v3806
    %3860 = vmatpush.msra.mxu0 %v3805
    %3861 = vmatpush.msra.mxu0 %v3804
    %3862 = vmatpush.msra.mxu0 %v3803
    %3863 = vmatpush.msra.mxu0 %v3802
    %3864 = vmatpush.msra.mxu0 %v3801
    %3865 = vmatpush.msra.mxu0 %v3800
    %3866 = vmatpush.msra.mxu0 %v3799
    %3867 = vmatpush.msra.mxu0 %v3798
    %3868 = vmatpush.msra.mxu0 %v3797
    %3869 = vmatpush.msra.mxu0 %v3796
    %3870 = vmatpush.msra.mxu0 %v3795
    %3871 = vmatpush.msra.mxu0 %v3794
    %3872 = vmatpush.msra.mxu0 %v3793
    %3873 = vmatpush.msra.mxu0 %v3792
    %3874 = vmatpush.msra.mxu0 %v3791
    %3875 = vmatmul.f32.gmra.mxu0 %v3456
    %v3876 = vpop.f32.mrf.mxu0
    %v3877 = vadd.f32 %v3857, %v3876
    %3878 = vdwg.mxu0
    %3879 = vmatpush.msra.mxu0 %v3822
    %3880 = vmatpush.msra.mxu0 %v3821
    %3881 = vmatpush.msra.mxu0 %v3820
    %3882 = vmatpush.msra.mxu0 %v3819
    %3883 = vmatpush.msra.mxu0 %v3818
    %3884 = vmatpush.msra.mxu0 %v3817
    %3885 = vmatpush.msra.mxu0 %v3816
    %3886 = vmatpush.msra.mxu0 %v3815
    %3887 = vmatpush.msra.mxu0 %v3814
    %3888 = vmatpush.msra.mxu0 %v3813
    %3889 = vmatpush.msra.mxu0 %v3812
    %3890 = vmatpush.msra.mxu0 %v3811
    %3891 = vmatpush.msra.mxu0 %v3810
    %3892 = vmatpush.msra.mxu0 %v3809
    %3893 = vmatpush.msra.mxu0 %v3808
    %3894 = vmatpush.msra.mxu0 %v3807
    %3895 = vmatmul.f32.gmra.mxu0 %v3457
    %v3896 = vpop.f32.mrf.mxu0
    %v3897 = vadd.f32 %v3877, %v3896
    %3898 = vdwg.mxu0
    %3899 = vmatpush.msra.mxu0 %v3838
    %3900 = vmatpush.msra.mxu0 %v3837
    %3901 = vmatpush.msra.mxu0 %v3836
    %3902 = vmatpush.msra.mxu0 %v3835
    %3903 = vmatpush.msra.mxu0 %v3834
    %3904 = vmatpush.msra.mxu0 %v3833
    %3905 = vmatpush.msra.mxu0 %v3832
    %3906 = vmatpush.msra.mxu0 %v3831
    %3907 = vmatpush.msra.mxu0 %v3830
    %3908 = vmatpush.msra.mxu0 %v3829
    %3909 = vmatpush.msra.mxu0 %v3828
    %3910 = vmatpush.msra.mxu0 %v3827
    %3911 = vmatpush.msra.mxu0 %v3826
    %3912 = vmatpush.msra.mxu0 %v3825
    %3913 = vmatpush.msra.mxu0 %v3824
    %3914 = vmatpush.msra.mxu0 %v3823
    %3915 = vmatmul.f32.gmra.mxu0 %v3458
    %v3916 = vpop.f32.mrf.mxu0
    %v3917 = vadd.f32 %v3897, %v3916
    %3918 = vdwg.mxu0
    %3920 = vrot.lane.b32.xlu0 %v3917, 32
    %v3921 = vpop.permute.xlu0 %3920
    %v3923 = vadd.f32 %v3709, %v3921
    %v3924 = vld [vmem:[%s39] sm:$0xf]
    %v3925 = vld [vmem:[%s39 + $0x4] sm:$0xf]
    %v3926 = vld [vmem:[%s39 + $0x8] sm:$0xf]
    %v3927 = vld [vmem:[%s39 + $0xc] sm:$0xf]
    %v3928 = vld [vmem:[%s39 + $0x10] sm:$0xf]
    %v3929 = vld [vmem:[%s39 + $0x14] sm:$0xf]
    %v3930 = vld [vmem:[%s39 + $0x18] sm:$0xf]
    %v3931 = vld [vmem:[%s39 + $0x1c] sm:$0xf]
    %v3932 = vld [vmem:[%s39 + $0x20] sm:$0xf]
    %v3933 = vld [vmem:[%s39 + $0x24] sm:$0xf]
    %v3934 = vld [vmem:[%s39 + $0x28] sm:$0xf]
    %v3935 = vld [vmem:[%s39 + $0x2c] sm:$0xf]
    %v3936 = vld [vmem:[%s39 + $0x30] sm:$0xf]
    %v3937 = vld [vmem:[%s39 + $0x34] sm:$0xf]
    %v3938 = vld [vmem:[%s39 + $0x38] sm:$0xf]
    %v3939 = vld [vmem:[%s39 + $0x3c] sm:$0xf]
    %v3940 = vld [vmem:[%s39 + $0x40] sm:$0xf]
    %v3941 = vld [vmem:[%s39 + $0x44] sm:$0xf]
    %v3942 = vld [vmem:[%s39 + $0x48] sm:$0xf]
    %v3943 = vld [vmem:[%s39 + $0x4c] sm:$0xf]
    %v3944 = vld [vmem:[%s39 + $0x50] sm:$0xf]
    %v3945 = vld [vmem:[%s39 + $0x54] sm:$0xf]
    %v3946 = vld [vmem:[%s39 + $0x58] sm:$0xf]
    %v3947 = vld [vmem:[%s39 + $0x5c] sm:$0xf]
    %v3948 = vld [vmem:[%s39 + $0x60] sm:$0xf]
    %v3949 = vld [vmem:[%s39 + $0x64] sm:$0xf]
    %v3950 = vld [vmem:[%s39 + $0x68] sm:$0xf]
    %v3951 = vld [vmem:[%s39 + $0x6c] sm:$0xf]
    %v3952 = vld [vmem:[%s39 + $0x70] sm:$0xf]
    %v3953 = vld [vmem:[%s39 + $0x74] sm:$0xf]
    %v3954 = vld [vmem:[%s39 + $0x78] sm:$0xf]
    %v3955 = vld [vmem:[%s39 + $0x7c] sm:$0xf]
    %v3956 = vld [vmem:[%s39 + $0x80] sm:$0xf]
    %v3957 = vld [vmem:[%s39 + $0x84] sm:$0xf]
    %v3958 = vld [vmem:[%s39 + $0x88] sm:$0xf]
    %v3959 = vld [vmem:[%s39 + $0x8c] sm:$0xf]
    %v3960 = vld [vmem:[%s39 + $0x90] sm:$0xf]
    %v3961 = vld [vmem:[%s39 + $0x94] sm:$0xf]
    %v3962 = vld [vmem:[%s39 + $0x98] sm:$0xf]
    %v3963 = vld [vmem:[%s39 + $0x9c] sm:$0xf]
    %v3964 = vld [vmem:[%s39 + $0xa0] sm:$0xf]
    %v3965 = vld [vmem:[%s39 + $0xa4] sm:$0xf]
    %v3966 = vld [vmem:[%s39 + $0xa8] sm:$0xf]
    %v3967 = vld [vmem:[%s39 + $0xac] sm:$0xf]
    %v3968 = vld [vmem:[%s39 + $0xb0] sm:$0xf]
    %v3969 = vld [vmem:[%s39 + $0xb4] sm:$0xf]
    %v3970 = vld [vmem:[%s39 + $0xb8] sm:$0xf]
    %v3971 = vld [vmem:[%s39 + $0xbc] sm:$0xf]
    %v3972 = vld [vmem:[%s39 + $0xc0] sm:$0xf]
    %v3973 = vld [vmem:[%s39 + $0xc4] sm:$0xf]
    %v3974 = vld [vmem:[%s39 + $0xc8] sm:$0xf]
    %v3975 = vld [vmem:[%s39 + $0xcc] sm:$0xf]
    %v3976 = vld [vmem:[%s39 + $0xd0] sm:$0xf]
    %v3977 = vld [vmem:[%s39 + $0xd4] sm:$0xf]
    %v3978 = vld [vmem:[%s39 + $0xd8] sm:$0xf]
    %v3979 = vld [vmem:[%s39 + $0xdc] sm:$0xf]
    %v3980 = vld [vmem:[%s39 + $0xe0] sm:$0xf]
    %v3981 = vld [vmem:[%s39 + $0xe4] sm:$0xf]
    %v3982 = vld [vmem:[%s39 + $0xe8] sm:$0xf]
    %v3983 = vld [vmem:[%s39 + $0xec] sm:$0xf]
    %v3984 = vld [vmem:[%s39 + $0xf0] sm:$0xf]
    %v3985 = vld [vmem:[%s39 + $0xf4] sm:$0xf]
    %v3986 = vld [vmem:[%s39 + $0xf8] sm:$0xf]
    %v3987 = vld [vmem:[%s39 + $0xfc] sm:$0xf]
    %v3988 = vunpack.c.l.bf16 %v3924
    %v3989 = vunpack.c.l.bf16 %v3925
    %v3990 = vunpack.c.l.bf16 %v3926
    %v3991 = vunpack.c.l.bf16 %v3927
    %v3992 = vunpack.c.l.bf16 %v3928
    %v3993 = vunpack.c.l.bf16 %v3929
    %v3994 = vunpack.c.l.bf16 %v3930
    %v3995 = vunpack.c.l.bf16 %v3931
    %v3996 = vunpack.c.l.bf16 %v3932
    %v3997 = vunpack.c.l.bf16 %v3933
    %v3998 = vunpack.c.l.bf16 %v3934
    %v3999 = vunpack.c.l.bf16 %v3935
    %v4000 = vunpack.c.l.bf16 %v3936
    %v4001 = vunpack.c.l.bf16 %v3937
    %v4002 = vunpack.c.l.bf16 %v3938
    %v4003 = vunpack.c.l.bf16 %v3939
    %v4004 = vunpack.c.l.bf16 %v3940
    %v4005 = vunpack.c.l.bf16 %v3941
    %v4006 = vunpack.c.l.bf16 %v3942
    %v4007 = vunpack.c.l.bf16 %v3943
    %v4008 = vunpack.c.l.bf16 %v3944
    %v4009 = vunpack.c.l.bf16 %v3945
    %v4010 = vunpack.c.l.bf16 %v3946
    %v4011 = vunpack.c.l.bf16 %v3947
    %v4012 = vunpack.c.l.bf16 %v3948
    %v4013 = vunpack.c.l.bf16 %v3949
    %v4014 = vunpack.c.l.bf16 %v3950
    %v4015 = vunpack.c.l.bf16 %v3951
    %v4016 = vunpack.c.l.bf16 %v3952
    %v4017 = vunpack.c.l.bf16 %v3953
    %v4018 = vunpack.c.l.bf16 %v3954
    %v4019 = vunpack.c.l.bf16 %v3955
    %v4020 = vunpack.c.l.bf16 %v3956
    %v4021 = vunpack.c.l.bf16 %v3957
    %v4022 = vunpack.c.l.bf16 %v3958
    %v4023 = vunpack.c.l.bf16 %v3959
    %v4024 = vunpack.c.l.bf16 %v3960
    %v4025 = vunpack.c.l.bf16 %v3961
    %v4026 = vunpack.c.l.bf16 %v3962
    %v4027 = vunpack.c.l.bf16 %v3963
    %v4028 = vunpack.c.l.bf16 %v3964
    %v4029 = vunpack.c.l.bf16 %v3965
    %v4030 = vunpack.c.l.bf16 %v3966
    %v4031 = vunpack.c.l.bf16 %v3967
    %v4032 = vunpack.c.l.bf16 %v3968
    %v4033 = vunpack.c.l.bf16 %v3969
    %v4034 = vunpack.c.l.bf16 %v3970
    %v4035 = vunpack.c.l.bf16 %v3971
    %v4036 = vunpack.c.l.bf16 %v3972
    %v4037 = vunpack.c.l.bf16 %v3973
    %v4038 = vunpack.c.l.bf16 %v3974
    %v4039 = vunpack.c.l.bf16 %v3975
    %v4040 = vunpack.c.l.bf16 %v3976
    %v4041 = vunpack.c.l.bf16 %v3977
    %v4042 = vunpack.c.l.bf16 %v3978
    %v4043 = vunpack.c.l.bf16 %v3979
    %v4044 = vunpack.c.l.bf16 %v3980
    %v4045 = vunpack.c.l.bf16 %v3981
    %v4046 = vunpack.c.l.bf16 %v3982
    %v4047 = vunpack.c.l.bf16 %v3983
    %v4048 = vunpack.c.l.bf16 %v3984
    %v4049 = vunpack.c.l.bf16 %v3985
    %v4050 = vunpack.c.l.bf16 %v3986
    %v4051 = vunpack.c.l.bf16 %v3987
    %4052 = vmatpush.msra.mxu0 %v4003
    %4053 = vmatpush.msra.mxu0 %v4002
    %4054 = vmatpush.msra.mxu0 %v4001
    %4055 = vmatpush.msra.mxu0 %v4000
    %4056 = vmatpush.msra.mxu0 %v3999
    %4057 = vmatpush.msra.mxu0 %v3998
    %4058 = vmatpush.msra.mxu0 %v3997
    %4059 = vmatpush.msra.mxu0 %v3996
    %4060 = vmatpush.msra.mxu0 %v3995
    %4061 = vmatpush.msra.mxu0 %v3994
    %4062 = vmatpush.msra.mxu0 %v3993
    %4063 = vmatpush.msra.mxu0 %v3992
    %4064 = vmatpush.msra.mxu0 %v3991
    %4065 = vmatpush.msra.mxu0 %v3990
    %4066 = vmatpush.msra.mxu0 %v3989
    %4067 = vmatpush.msra.mxu0 %v3988
    %4068 = vmatmul.f32.gmra.mxu0 %v3473
    %v4069 = vpop.f32.mrf.mxu0
    %v4070 = vadd.f32 0.0, %v4069
    %4071 = vdwg.mxu0
    %4072 = vmatpush.msra.mxu0 %v4019
    %4073 = vmatpush.msra.mxu0 %v4018
    %4074 = vmatpush.msra.mxu0 %v4017
    %4075 = vmatpush.msra.mxu0 %v4016
    %4076 = vmatpush.msra.mxu0 %v4015
    %4077 = vmatpush.msra.mxu0 %v4014
    %4078 = vmatpush.msra.mxu0 %v4013
    %4079 = vmatpush.msra.mxu0 %v4012
    %4080 = vmatpush.msra.mxu0 %v4011
    %4081 = vmatpush.msra.mxu0 %v4010
    %4082 = vmatpush.msra.mxu0 %v4009
    %4083 = vmatpush.msra.mxu0 %v4008
    %4084 = vmatpush.msra.mxu0 %v4007
    %4085 = vmatpush.msra.mxu0 %v4006
    %4086 = vmatpush.msra.mxu0 %v4005
    %4087 = vmatpush.msra.mxu0 %v4004
    %4088 = vmatmul.f32.gmra.mxu0 %v3474
    %v4089 = vpop.f32.mrf.mxu0
    %v4090 = vadd.f32 %v4070, %v4089
    %4091 = vdwg.mxu0
    %4092 = vmatpush.msra.mxu0 %v4035
    %4093 = vmatpush.msra.mxu0 %v4034
    %4094 = vmatpush.msra.mxu0 %v4033
    %4095 = vmatpush.msra.mxu0 %v4032
    %4096 = vmatpush.msra.mxu0 %v4031
    %4097 = vmatpush.msra.mxu0 %v4030
    %4098 = vmatpush.msra.mxu0 %v4029
    %4099 = vmatpush.msra.mxu0 %v4028
    %4100 = vmatpush.msra.mxu0 %v4027
    %4101 = vmatpush.msra.mxu0 %v4026
    %4102 = vmatpush.msra.mxu0 %v4025
    %4103 = vmatpush.msra.mxu0 %v4024
    %4104 = vmatpush.msra.mxu0 %v4023
    %4105 = vmatpush.msra.mxu0 %v4022
    %4106 = vmatpush.msra.mxu0 %v4021
    %4107 = vmatpush.msra.mxu0 %v4020
    %4108 = vmatmul.f32.gmra.mxu0 %v3475
    %v4109 = vpop.f32.mrf.mxu0
    %v4110 = vadd.f32 %v4090, %v4109
    %4111 = vdwg.mxu0
    %4112 = vmatpush.msra.mxu0 %v4051
    %4113 = vmatpush.msra.mxu0 %v4050
    %4114 = vmatpush.msra.mxu0 %v4049
    %4115 = vmatpush.msra.mxu0 %v4048
    %4116 = vmatpush.msra.mxu0 %v4047
    %4117 = vmatpush.msra.mxu0 %v4046
    %4118 = vmatpush.msra.mxu0 %v4045
    %4119 = vmatpush.msra.mxu0 %v4044
    %4120 = vmatpush.msra.mxu0 %v4043
    %4121 = vmatpush.msra.mxu0 %v4042
    %4122 = vmatpush.msra.mxu0 %v4041
    %4123 = vmatpush.msra.mxu0 %v4040
    %4124 = vmatpush.msra.mxu0 %v4039
    %4125 = vmatpush.msra.mxu0 %v4038
    %4126 = vmatpush.msra.mxu0 %v4037
    %4127 = vmatpush.msra.mxu0 %v4036
    %4128 = vmatmul.f32.gmra.mxu0 %v3476
    %v4129 = vpop.f32.mrf.mxu0
    %v4130 = vadd.f32 %v4110, %v4129
    %4131 = vdwg.mxu0
    %4133 = vrot.lane.b32.xlu0 %v4130, 64
    %v4134 = vpop.permute.xlu0 %4133
    %v4136 = vadd.f32 %v3709, %v4134
    %4138 = vrot.lane.b32.xlu0 %v3923, 96
    %v4139 = vpop.permute.xlu0 %4138
    %4142 = vrot.lane.b32.xlu0 %v3709, 32
    %v4143 = vpop.permute.xlu0 %4142
    %vm4145 = vcmask 261120
    %v4146 = vsel %vm4145, %v4139, %v4143
    %vm4147 = vcmask 523264
    %v4148 = vsel %vm4147, %v4146, %v4136
    %v4149 = vld [vmem:[%s41] sm:$0xf]
    %v4150 = vld [vmem:[%s41 + $0x4] sm:$0xf]
    %v4151 = vld [vmem:[%s41 + $0x8] sm:$0xf]
    %v4152 = vld [vmem:[%s41 + $0xc] sm:$0xf]
    %v4153 = vld [vmem:[%s41 + $0x10] sm:$0xf]
    %v4154 = vld [vmem:[%s41 + $0x14] sm:$0xf]
    %v4155 = vld [vmem:[%s41 + $0x18] sm:$0xf]
    %v4156 = vld [vmem:[%s41 + $0x1c] sm:$0xf]
    %v4157 = vld [vmem:[%s41 + $0x20] sm:$0xf]
    %v4158 = vld [vmem:[%s41 + $0x24] sm:$0xf]
    %v4159 = vld [vmem:[%s41 + $0x28] sm:$0xf]
    %v4160 = vld [vmem:[%s41 + $0x2c] sm:$0xf]
    %v4161 = vunpack.c.l.bf16 %v4149
    %v4162 = vunpack.c.l.bf16 %v4150
    %v4163 = vunpack.c.l.bf16 %v4151
    %v4164 = vunpack.c.l.bf16 %v4152
    %v4165 = vunpack.c.l.bf16 %v4153
    %v4166 = vunpack.c.l.bf16 %v4154
    %v4167 = vunpack.c.l.bf16 %v4155
    %v4168 = vunpack.c.l.bf16 %v4156
    %v4169 = vunpack.c.l.bf16 %v4157
    %v4170 = vunpack.c.l.bf16 %v4158
    %v4171 = vunpack.c.l.bf16 %v4159
    %v4172 = vunpack.c.l.bf16 %v4160
    %v4173 = vld [vmem:[#allocation26] sm:$0x1]
    %v4175 = vperm.slane %v4173, 0
    %vm4177 = vcmask 785408
    %v4179 = vsel %vm4177, %v4148, 0
    %4181 = vmatpush.msra.mxu0 0.0
    %4182 = vmatpush.msra.mxu0 0.0
    %4183 = vmatpush.msra.mxu0 0.0
    %4184 = vmatpush.msra.mxu0 0.0
    %4185 = vmatpush.msra.mxu0 %v4172
    %4186 = vmatpush.msra.mxu0 %v4171
    %4187 = vmatpush.msra.mxu0 %v4170
    %4188 = vmatpush.msra.mxu0 %v4169
    %4189 = vmatpush.msra.mxu0 %v4168
    %4190 = vmatpush.msra.mxu0 %v4167
    %4191 = vmatpush.msra.mxu0 %v4166
    %4192 = vmatpush.msra.mxu0 %v4165
    %4193 = vmatpush.msra.mxu0 %v4164
    %4194 = vmatpush.msra.mxu0 %v4163
    %4195 = vmatpush.msra.mxu0 %v4162
    %4196 = vmatpush.msra.mxu0 %v4161
    %4197 = vmatmul.f32.gmra.mxu0 %v4179
    %v4198 = vpop.f32.mrf.mxu0
    %v4199 = vadd.f32 %v4175, %v4198
    %4200 = vdwg.mxu0
    %v4201 = vtanh.pop %v4199
    %vm4202 = vcmp.gt.f32.partialorder %v4201, 0.0
    %vm4203 = vcmp.lt.f32.partialorder %v4201, 0.0
    %v4204 = vsel %vm4203, -1.0, 0.0
    %v4205 = vsel %vm4202, 1.0, %v4204
    %v4206 = vtanh.pop %v3923
    %4208 = vrot.lane.b32.xlu0 %v4206, 96
    %v4209 = vpop.permute.xlu0 %4208
    %v4211 = vadd.f32 %v4201, %v4209
    %v4212 = vtanh.pop %v4136
    %4214 = vrot.lane.b32.xlu0 %v4212, 64
    %v4215 = vpop.permute.xlu0 %4214
    %v4217 = vadd.f32 %v4201, %v4215
    %v4218 = vld [vmem:[%s45] sm:$0xff]
    %v4219 = vld [vmem:[%s45 + $0x8] sm:$0xff]
    %v4220 = vld [vmem:[%s45 + $0x10] sm:$0xff]
    %v4221 = vld [vmem:[%s45 + $0x18] sm:$0xff]
    %v4222 = vld [vmem:[%s45 + $0x20] sm:$0xff]
    %v4223 = vld [vmem:[%s45 + $0x28] sm:$0xff]
    %v4224 = vld [vmem:[%s45 + $0x30] sm:$0xff]
    %v4225 = vld [vmem:[%s45 + $0x38] sm:$0xff]
    %v4226 = vunpack.c.l.bf16 %v4218
    %v4227 = vunpack.c.h.bf16 %v4218
    %v4228 = vunpack.c.l.bf16 %v4219
    %v4229 = vunpack.c.h.bf16 %v4219
    %v4230 = vunpack.c.l.bf16 %v4220
    %v4231 = vunpack.c.h.bf16 %v4220
    %v4232 = vunpack.c.l.bf16 %v4221
    %v4233 = vunpack.c.h.bf16 %v4221
    %v4234 = vunpack.c.l.bf16 %v4222
    %v4235 = vunpack.c.h.bf16 %v4222
    %v4236 = vunpack.c.l.bf16 %v4223
    %v4237 = vunpack.c.h.bf16 %v4223
    %v4238 = vunpack.c.l.bf16 %v4224
    %v4239 = vunpack.c.h.bf16 %v4224
    %v4240 = vunpack.c.l.bf16 %v4225
    %v4241 = vunpack.c.h.bf16 %v4225
    %v4242 = vld [vmem:[#allocation28] sm:$0xf]
    %v4244 = vperm.slane %v4242, 0
    %v4245 = vperm.slane %v4242, 1
    %v4246 = vperm.slane %v4242, 2
    %v4247 = vperm.slane %v4242, 3
    %v4253 = vsel %vm4145, %v4211, 0
    %4255 = vmatpush.msra.mxu0 0.0
    %4256 = vmatpush.msra.mxu0 0.0
    %4257 = vmatpush.msra.mxu0 0.0
    %4258 = vmatpush.msra.mxu0 0.0
    %4259 = vmatpush.msra.mxu0 0.0
    %4260 = vmatpush.msra.mxu0 0.0
    %4261 = vmatpush.msra.mxu0 0.0
    %4262 = vmatpush.msra.mxu0 0.0
    %4263 = vmatpush.msra.mxu0 0.0
    %4264 = vmatpush.msra.mxu0 0.0
    %4265 = vmatpush.msra.mxu0 0.0
    %4266 = vmatpush.msra.mxu0 0.0
    %4267 = vmatpush.msra.mxu0 %v4238
    %4268 = vmatpush.msra.mxu0 %v4234
    %4269 = vmatpush.msra.mxu0 %v4230
    %4270 = vmatpush.msra.mxu0 %v4226
    %4271 = vmatmul.f32.gmra.mxu0 %v4253
    %v4272 = vpop.f32.mrf.mxu0
    %v4273 = vadd.f32 %v4244, %v4272
    %4274 = vdwg.mxu0
    %4275 = vmatpush.msra.mxu0 0.0
    %4276 = vmatpush.msra.mxu0 0.0
    %4277 = vmatpush.msra.mxu0 0.0
    %4278 = vmatpush.msra.mxu0 0.0
    %4279 = vmatpush.msra.mxu0 0.0
    %4280 = vmatpush.msra.mxu0 0.0
    %4281 = vmatpush.msra.mxu0 0.0
    %4282 = vmatpush.msra.mxu0 0.0
    %4283 = vmatpush.msra.mxu0 0.0
    %4284 = vmatpush.msra.mxu0 0.0
    %4285 = vmatpush.msra.mxu0 0.0
    %4286 = vmatpush.msra.mxu0 0.0
    %4287 = vmatpush.msra.mxu0 %v4239
    %4288 = vmatpush.msra.mxu0 %v4235
    %4289 = vmatpush.msra.mxu0 %v4231
    %4290 = vmatpush.msra.mxu0 %v4227
    %4291 = vmatmul.f32.gmra.mxu0 %v4253
    %v4292 = vpop.f32.mrf.mxu0
    %v4293 = vadd.f32 %v4245, %v4292
    %4294 = vdwg.mxu0
    %4295 = vmatpush.msra.mxu0 0.0
    %4296 = vmatpush.msra.mxu0 0.0
    %4297 = vmatpush.msra.mxu0 0.0
    %4298 = vmatpush.msra.mxu0 0.0
    %4299 = vmatpush.msra.mxu0 0.0
    %4300 = vmatpush.msra.mxu0 0.0
    %4301 = vmatpush.msra.mxu0 0.0
    %4302 = vmatpush.msra.mxu0 0.0
    %4303 = vmatpush.msra.mxu0 0.0
    %4304 = vmatpush.msra.mxu0 0.0
    %4305 = vmatpush.msra.mxu0 0.0
    %4306 = vmatpush.msra.mxu0 0.0
    %4307 = vmatpush.msra.mxu0 %v4240
    %4308 = vmatpush.msra.mxu0 %v4236
    %4309 = vmatpush.msra.mxu0 %v4232
    %4310 = vmatpush.msra.mxu0 %v4228
    %4311 = vmatmul.f32.gmra.mxu0 %v4253
    %v4312 = vpop.f32.mrf.mxu0
    %v4313 = vadd.f32 %v4246, %v4312
    %4314 = vdwg.mxu0
    %4315 = vmatpush.msra.mxu0 0.0
    %4316 = vmatpush.msra.mxu0 0.0
    %4317 = vmatpush.msra.mxu0 0.0
    %4318 = vmatpush.msra.mxu0 0.0
    %4319 = vmatpush.msra.mxu0 0.0
    %4320 = vmatpush.msra.mxu0 0.0
    %4321 = vmatpush.msra.mxu0 0.0
    %4322 = vmatpush.msra.mxu0 0.0
    %4323 = vmatpush.msra.mxu0 0.0
    %4324 = vmatpush.msra.mxu0 0.0
    %4325 = vmatpush.msra.mxu0 0.0
    %4326 = vmatpush.msra.mxu0 0.0
    %4327 = vmatpush.msra.mxu0 %v4241
    %4328 = vmatpush.msra.mxu0 %v4237
    %4329 = vmatpush.msra.mxu0 %v4233
    %4330 = vmatpush.msra.mxu0 %v4229
    %4331 = vmatmul.f32.gmra.mxu0 %v4253
    %v4332 = vpop.f32.mrf.mxu0
    %v4333 = vadd.f32 %v4247, %v4332
    %4334 = vdwg.mxu0
    %v4335 = vmax.f32 %v4273, 0.0
    %v4336 = vmax.f32 %v4293, 0.0
    %v4337 = vmax.f32 %v4313, 0.0
    %v4338 = vmax.f32 %v4333, 0.0
    %v4339 = vld [vmem:[#allocation29] sm:$0xff]
    %v4340 = vld [vmem:[#allocation29 + $0x8] sm:$0xff]
    %v4341 = vld [vmem:[#allocation29 + $0x10] sm:$0xff]
    %v4342 = vld [vmem:[#allocation29 + $0x18] sm:$0xff]
    %v4343 = vld [vmem:[#allocation29 + $0x20] sm:$0xff]
    %v4344 = vld [vmem:[#allocation29 + $0x28] sm:$0xff]
    %v4345 = vld [vmem:[#allocation29 + $0x30] sm:$0xff]
    %v4346 = vld [vmem:[#allocation29 + $0x38] sm:$0xff]
    %v4347 = vld [vmem:[#allocation29 + $0x40] sm:$0xff]
    %v4348 = vld [vmem:[#allocation29 + $0x48] sm:$0xff]
    %v4349 = vld [vmem:[#allocation29 + $0x50] sm:$0xff]
    %v4350 = vld [vmem:[#allocation29 + $0x58] sm:$0xff]
    %v4351 = vld [vmem:[#allocation29 + $0x60] sm:$0xff]
    %v4352 = vld [vmem:[#allocation29 + $0x68] sm:$0xff]
    %v4353 = vld [vmem:[#allocation29 + $0x70] sm:$0xff]
    %v4354 = vld [vmem:[#allocation29 + $0x78] sm:$0xff]
    %v4355 = vld [vmem:[#allocation29 + $0x80] sm:$0xff]
    %v4356 = vld [vmem:[#allocation29 + $0x88] sm:$0xff]
    %v4357 = vld [vmem:[#allocation29 + $0x90] sm:$0xff]
    %v4358 = vld [vmem:[#allocation29 + $0x98] sm:$0xff]
    %v4359 = vld [vmem:[#allocation29 + $0xa0] sm:$0xff]
    %v4360 = vld [vmem:[#allocation29 + $0xa8] sm:$0xff]
    %v4361 = vld [vmem:[#allocation29 + $0xb0] sm:$0xff]
    %v4362 = vld [vmem:[#allocation29 + $0xb8] sm:$0xff]
    %v4363 = vld [vmem:[#allocation29 + $0xc0] sm:$0xff]
    %v4364 = vld [vmem:[#allocation29 + $0xc8] sm:$0xff]
    %v4365 = vld [vmem:[#allocation29 + $0xd0] sm:$0xff]
    %v4366 = vld [vmem:[#allocation29 + $0xd8] sm:$0xff]
    %v4367 = vld [vmem:[#allocation29 + $0xe0] sm:$0xff]
    %v4368 = vld [vmem:[#allocation29 + $0xe8] sm:$0xff]
    %v4369 = vld [vmem:[#allocation29 + $0xf0] sm:$0xff]
    %v4370 = vld [vmem:[#allocation29 + $0xf8] sm:$0xff]
    %v4371 = vld [vmem:[#allocation29 + $0x100] sm:$0xff]
    %v4372 = vld [vmem:[#allocation29 + $0x108] sm:$0xff]
    %v4373 = vld [vmem:[#allocation29 + $0x110] sm:$0xff]
    %v4374 = vld [vmem:[#allocation29 + $0x118] sm:$0xff]
    %v4375 = vld [vmem:[#allocation29 + $0x120] sm:$0xff]
    %v4376 = vld [vmem:[#allocation29 + $0x128] sm:$0xff]
    %v4377 = vld [vmem:[#allocation29 + $0x130] sm:$0xff]
    %v4378 = vld [vmem:[#allocation29 + $0x138] sm:$0xff]
    %v4379 = vld [vmem:[#allocation29 + $0x140] sm:$0xff]
    %v4380 = vld [vmem:[#allocation29 + $0x148] sm:$0xff]
    %v4381 = vld [vmem:[#allocation29 + $0x150] sm:$0xff]
    %v4382 = vld [vmem:[#allocation29 + $0x158] sm:$0xff]
    %v4383 = vld [vmem:[#allocation29 + $0x160] sm:$0xff]
    %v4384 = vld [vmem:[#allocation29 + $0x168] sm:$0xff]
    %v4385 = vld [vmem:[#allocation29 + $0x170] sm:$0xff]
    %v4386 = vld [vmem:[#allocation29 + $0x178] sm:$0xff]
    %v4387 = vld [vmem:[#allocation29 + $0x180] sm:$0xff]
    %v4388 = vld [vmem:[#allocation29 + $0x188] sm:$0xff]
    %v4389 = vld [vmem:[#allocation29 + $0x190] sm:$0xff]
    %v4390 = vld [vmem:[#allocation29 + $0x198] sm:$0xff]
    %v4391 = vld [vmem:[#allocation29 + $0x1a0] sm:$0xff]
    %v4392 = vld [vmem:[#allocation29 + $0x1a8] sm:$0xff]
    %v4393 = vld [vmem:[#allocation29 + $0x1b0] sm:$0xff]
    %v4394 = vld [vmem:[#allocation29 + $0x1b8] sm:$0xff]
    %v4395 = vld [vmem:[#allocation29 + $0x1c0] sm:$0xff]
    %v4396 = vld [vmem:[#allocation29 + $0x1c8] sm:$0xff]
    %v4397 = vld [vmem:[#allocation29 + $0x1d0] sm:$0xff]
    %v4398 = vld [vmem:[#allocation29 + $0x1d8] sm:$0xff]
    %v4399 = vld [vmem:[#allocation29 + $0x1e0] sm:$0xff]
    %v4400 = vld [vmem:[#allocation29 + $0x1e8] sm:$0xff]
    %v4401 = vld [vmem:[#allocation29 + $0x1f0] sm:$0xff]
    %v4402 = vld [vmem:[#allocation29 + $0x1f8] sm:$0xff]
    %v4403 = vunpack.c.l.bf16 %v4339
    %v4404 = vunpack.c.h.bf16 %v4339
    %v4405 = vunpack.c.l.bf16 %v4340
    %v4406 = vunpack.c.h.bf16 %v4340
    %v4407 = vunpack.c.l.bf16 %v4341
    %v4408 = vunpack.c.h.bf16 %v4341
    %v4409 = vunpack.c.l.bf16 %v4342
    %v4410 = vunpack.c.h.bf16 %v4342
    %v4411 = vunpack.c.l.bf16 %v4343
    %v4412 = vunpack.c.h.bf16 %v4343
    %v4413 = vunpack.c.l.bf16 %v4344
    %v4414 = vunpack.c.h.bf16 %v4344
    %v4415 = vunpack.c.l.bf16 %v4345
    %v4416 = vunpack.c.h.bf16 %v4345
    %v4417 = vunpack.c.l.bf16 %v4346
    %v4418 = vunpack.c.h.bf16 %v4346
    %v4419 = vunpack.c.l.bf16 %v4347
    %v4420 = vunpack.c.h.bf16 %v4347
    %v4421 = vunpack.c.l.bf16 %v4348
    %v4422 = vunpack.c.h.bf16 %v4348
    %v4423 = vunpack.c.l.bf16 %v4349
    %v4424 = vunpack.c.h.bf16 %v4349
    %v4425 = vunpack.c.l.bf16 %v4350
    %v4426 = vunpack.c.h.bf16 %v4350
    %v4427 = vunpack.c.l.bf16 %v4351
    %v4428 = vunpack.c.h.bf16 %v4351
    %v4429 = vunpack.c.l.bf16 %v4352
    %v4430 = vunpack.c.h.bf16 %v4352
    %v4431 = vunpack.c.l.bf16 %v4353
    %v4432 = vunpack.c.h.bf16 %v4353
    %v4433 = vunpack.c.l.bf16 %v4354
    %v4434 = vunpack.c.h.bf16 %v4354
    %v4435 = vunpack.c.l.bf16 %v4355
    %v4436 = vunpack.c.h.bf16 %v4355
    %v4437 = vunpack.c.l.bf16 %v4356
    %v4438 = vunpack.c.h.bf16 %v4356
    %v4439 = vunpack.c.l.bf16 %v4357
    %v4440 = vunpack.c.h.bf16 %v4357
    %v4441 = vunpack.c.l.bf16 %v4358
    %v4442 = vunpack.c.h.bf16 %v4358
    %v4443 = vunpack.c.l.bf16 %v4359
    %v4444 = vunpack.c.h.bf16 %v4359
    %v4445 = vunpack.c.l.bf16 %v4360
    %v4446 = vunpack.c.h.bf16 %v4360
    %v4447 = vunpack.c.l.bf16 %v4361
    %v4448 = vunpack.c.h.bf16 %v4361
    %v4449 = vunpack.c.l.bf16 %v4362
    %v4450 = vunpack.c.h.bf16 %v4362
    %v4451 = vunpack.c.l.bf16 %v4363
    %v4452 = vunpack.c.h.bf16 %v4363
    %v4453 = vunpack.c.l.bf16 %v4364
    %v4454 = vunpack.c.h.bf16 %v4364
    %v4455 = vunpack.c.l.bf16 %v4365
    %v4456 = vunpack.c.h.bf16 %v4365
    %v4457 = vunpack.c.l.bf16 %v4366
    %v4458 = vunpack.c.h.bf16 %v4366
    %v4459 = vunpack.c.l.bf16 %v4367
    %v4460 = vunpack.c.h.bf16 %v4367
    %v4461 = vunpack.c.l.bf16 %v4368
    %v4462 = vunpack.c.h.bf16 %v4368
    %v4463 = vunpack.c.l.bf16 %v4369
    %v4464 = vunpack.c.h.bf16 %v4369
    %v4465 = vunpack.c.l.bf16 %v4370
    %v4466 = vunpack.c.h.bf16 %v4370
    %v4467 = vunpack.c.l.bf16 %v4371
    %v4468 = vunpack.c.h.bf16 %v4371
    %v4469 = vunpack.c.l.bf16 %v4372
    %v4470 = vunpack.c.h.bf16 %v4372
    %v4471 = vunpack.c.l.bf16 %v4373
    %v4472 = vunpack.c.h.bf16 %v4373
    %v4473 = vunpack.c.l.bf16 %v4374
    %v4474 = vunpack.c.h.bf16 %v4374
    %v4475 = vunpack.c.l.bf16 %v4375
    %v4476 = vunpack.c.h.bf16 %v4375
    %v4477 = vunpack.c.l.bf16 %v4376
    %v4478 = vunpack.c.h.bf16 %v4376
    %v4479 = vunpack.c.l.bf16 %v4377
    %v4480 = vunpack.c.h.bf16 %v4377
    %v4481 = vunpack.c.l.bf16 %v4378
    %v4482 = vunpack.c.h.bf16 %v4378
    %v4483 = vunpack.c.l.bf16 %v4379
    %v4484 = vunpack.c.h.bf16 %v4379
    %v4485 = vunpack.c.l.bf16 %v4380
    %v4486 = vunpack.c.h.bf16 %v4380
    %v4487 = vunpack.c.l.bf16 %v4381
    %v4488 = vunpack.c.h.bf16 %v4381
    %v4489 = vunpack.c.l.bf16 %v4382
    %v4490 = vunpack.c.h.bf16 %v4382
    %v4491 = vunpack.c.l.bf16 %v4383
    %v4492 = vunpack.c.h.bf16 %v4383
    %v4493 = vunpack.c.l.bf16 %v4384
    %v4494 = vunpack.c.h.bf16 %v4384
    %v4495 = vunpack.c.l.bf16 %v4385
    %v4496 = vunpack.c.h.bf16 %v4385
    %v4497 = vunpack.c.l.bf16 %v4386
    %v4498 = vunpack.c.h.bf16 %v4386
    %v4499 = vunpack.c.l.bf16 %v4387
    %v4500 = vunpack.c.h.bf16 %v4387
    %v4501 = vunpack.c.l.bf16 %v4388
    %v4502 = vunpack.c.h.bf16 %v4388
    %v4503 = vunpack.c.l.bf16 %v4389
    %v4504 = vunpack.c.h.bf16 %v4389
    %v4505 = vunpack.c.l.bf16 %v4390
    %v4506 = vunpack.c.h.bf16 %v4390
    %v4507 = vunpack.c.l.bf16 %v4391
    %v4508 = vunpack.c.h.bf16 %v4391
    %v4509 = vunpack.c.l.bf16 %v4392
    %v4510 = vunpack.c.h.bf16 %v4392
    %v4511 = vunpack.c.l.bf16 %v4393
    %v4512 = vunpack.c.h.bf16 %v4393
    %v4513 = vunpack.c.l.bf16 %v4394
    %v4514 = vunpack.c.h.bf16 %v4394
    %v4515 = vunpack.c.l.bf16 %v4395
    %v4516 = vunpack.c.h.bf16 %v4395
    %v4517 = vunpack.c.l.bf16 %v4396
    %v4518 = vunpack.c.h.bf16 %v4396
    %v4519 = vunpack.c.l.bf16 %v4397
    %v4520 = vunpack.c.h.bf16 %v4397
    %v4521 = vunpack.c.l.bf16 %v4398
    %v4522 = vunpack.c.h.bf16 %v4398
    %v4523 = vunpack.c.l.bf16 %v4399
    %v4524 = vunpack.c.h.bf16 %v4399
    %v4525 = vunpack.c.l.bf16 %v4400
    %v4526 = vunpack.c.h.bf16 %v4400
    %v4527 = vunpack.c.l.bf16 %v4401
    %v4528 = vunpack.c.h.bf16 %v4401
    %v4529 = vunpack.c.l.bf16 %v4402
    %v4530 = vunpack.c.h.bf16 %v4402
    %v4531 = vld [vmem:[#allocation31] sm:$0x3]
    %v4533 = vperm.slane %v4531, 0
    %v4534 = vperm.slane %v4531, 1
    %4537 = vmatpush.msra.mxu0 %v4433
    %4538 = vmatpush.msra.mxu0 %v4431
    %4539 = vmatpush.msra.mxu0 %v4429
    %4540 = vmatpush.msra.mxu0 %v4427
    %4541 = vmatpush.msra.mxu0 %v4425
    %4542 = vmatpush.msra.mxu0 %v4423
    %4543 = vmatpush.msra.mxu0 %v4421
    %4544 = vmatpush.msra.mxu0 %v4419
    %4545 = vmatpush.msra.mxu0 %v4417
    %4546 = vmatpush.msra.mxu0 %v4415
    %4547 = vmatpush.msra.mxu0 %v4413
    %4548 = vmatpush.msra.mxu0 %v4411
    %4549 = vmatpush.msra.mxu0 %v4409
    %4550 = vmatpush.msra.mxu0 %v4407
    %4551 = vmatpush.msra.mxu0 %v4405
    %4552 = vmatpush.msra.mxu0 %v4403
    %4553 = vmatmul.f32.gmra.mxu0 %v4335
    %v4554 = vpop.f32.mrf.mxu0
    %v4555 = vadd.f32 %v4533, %v4554
    %4556 = vdwg.mxu0
    %4557 = vmatpush.msra.mxu0 %v4465
    %4558 = vmatpush.msra.mxu0 %v4463
    %4559 = vmatpush.msra.mxu0 %v4461
    %4560 = vmatpush.msra.mxu0 %v4459
    %4561 = vmatpush.msra.mxu0 %v4457
    %4562 = vmatpush.msra.mxu0 %v4455
    %4563 = vmatpush.msra.mxu0 %v4453
    %4564 = vmatpush.msra.mxu0 %v4451
    %4565 = vmatpush.msra.mxu0 %v4449
    %4566 = vmatpush.msra.mxu0 %v4447
    %4567 = vmatpush.msra.mxu0 %v4445
    %4568 = vmatpush.msra.mxu0 %v4443
    %4569 = vmatpush.msra.mxu0 %v4441
    %4570 = vmatpush.msra.mxu0 %v4439
    %4571 = vmatpush.msra.mxu0 %v4437
    %4572 = vmatpush.msra.mxu0 %v4435
    %4573 = vmatmul.f32.gmra.mxu0 %v4336
    %v4574 = vpop.f32.mrf.mxu0
    %v4575 = vadd.f32 %v4555, %v4574
    %4576 = vdwg.mxu0
    %4577 = vmatpush.msra.mxu0 %v4497
    %4578 = vmatpush.msra.mxu0 %v4495
    %4579 = vmatpush.msra.mxu0 %v4493
    %4580 = vmatpush.msra.mxu0 %v4491
    %4581 = vmatpush.msra.mxu0 %v4489
    %4582 = vmatpush.msra.mxu0 %v4487
    %4583 = vmatpush.msra.mxu0 %v4485
    %4584 = vmatpush.msra.mxu0 %v4483
    %4585 = vmatpush.msra.mxu0 %v4481
    %4586 = vmatpush.msra.mxu0 %v4479
    %4587 = vmatpush.msra.mxu0 %v4477
    %4588 = vmatpush.msra.mxu0 %v4475
    %4589 = vmatpush.msra.mxu0 %v4473
    %4590 = vmatpush.msra.mxu0 %v4471
    %4591 = vmatpush.msra.mxu0 %v4469
    %4592 = vmatpush.msra.mxu0 %v4467
    %4593 = vmatmul.f32.gmra.mxu0 %v4337
    %v4594 = vpop.f32.mrf.mxu0
    %v4595 = vadd.f32 %v4575, %v4594
    %4596 = vdwg.mxu0
    %4597 = vmatpush.msra.mxu0 %v4529
    %4598 = vmatpush.msra.mxu0 %v4527
    %4599 = vmatpush.msra.mxu0 %v4525
    %4600 = vmatpush.msra.mxu0 %v4523
    %4601 = vmatpush.msra.mxu0 %v4521
    %4602 = vmatpush.msra.mxu0 %v4519
    %4603 = vmatpush.msra.mxu0 %v4517
    %4604 = vmatpush.msra.mxu0 %v4515
    %4605 = vmatpush.msra.mxu0 %v4513
    %4606 = vmatpush.msra.mxu0 %v4511
    %4607 = vmatpush.msra.mxu0 %v4509
    %4608 = vmatpush.msra.mxu0 %v4507
    %4609 = vmatpush.msra.mxu0 %v4505
    %4610 = vmatpush.msra.mxu0 %v4503
    %4611 = vmatpush.msra.mxu0 %v4501
    %4612 = vmatpush.msra.mxu0 %v4499
    %4613 = vmatmul.f32.gmra.mxu0 %v4338
    %v4614 = vpop.f32.mrf.mxu0
    %v4615 = vadd.f32 %v4595, %v4614
    %4616 = vdwg.mxu0
    %4617 = vmatpush.msra.mxu0 %v4434
    %4618 = vmatpush.msra.mxu0 %v4432
    %4619 = vmatpush.msra.mxu0 %v4430
    %4620 = vmatpush.msra.mxu0 %v4428
    %4621 = vmatpush.msra.mxu0 %v4426
    %4622 = vmatpush.msra.mxu0 %v4424
    %4623 = vmatpush.msra.mxu0 %v4422
    %4624 = vmatpush.msra.mxu0 %v4420
    %4625 = vmatpush.msra.mxu0 %v4418
    %4626 = vmatpush.msra.mxu0 %v4416
    %4627 = vmatpush.msra.mxu0 %v4414
    %4628 = vmatpush.msra.mxu0 %v4412
    %4629 = vmatpush.msra.mxu0 %v4410
    %4630 = vmatpush.msra.mxu0 %v4408
    %4631 = vmatpush.msra.mxu0 %v4406
    %4632 = vmatpush.msra.mxu0 %v4404
    %4633 = vmatmul.f32.gmra.mxu0 %v4335
    %v4634 = vpop.f32.mrf.mxu0
    %v4635 = vadd.f32 %v4534, %v4634
    %4636 = vdwg.mxu0
    %4637 = vmatpush.msra.mxu0 %v4466
    %4638 = vmatpush.msra.mxu0 %v4464
    %4639 = vmatpush.msra.mxu0 %v4462
    %4640 = vmatpush.msra.mxu0 %v4460
    %4641 = vmatpush.msra.mxu0 %v4458
    %4642 = vmatpush.msra.mxu0 %v4456
    %4643 = vmatpush.msra.mxu0 %v4454
    %4644 = vmatpush.msra.mxu0 %v4452
    %4645 = vmatpush.msra.mxu0 %v4450
    %4646 = vmatpush.msra.mxu0 %v4448
    %4647 = vmatpush.msra.mxu0 %v4446
    %4648 = vmatpush.msra.mxu0 %v4444
    %4649 = vmatpush.msra.mxu0 %v4442
    %4650 = vmatpush.msra.mxu0 %v4440
    %4651 = vmatpush.msra.mxu0 %v4438
    %4652 = vmatpush.msra.mxu0 %v4436
    %4653 = vmatmul.f32.gmra.mxu0 %v4336
    %v4654 = vpop.f32.mrf.mxu0
    %v4655 = vadd.f32 %v4635, %v4654
    %4656 = vdwg.mxu0
    %4657 = vmatpush.msra.mxu0 %v4498
    %4658 = vmatpush.msra.mxu0 %v4496
    %4659 = vmatpush.msra.mxu0 %v4494
    %4660 = vmatpush.msra.mxu0 %v4492
    %4661 = vmatpush.msra.mxu0 %v4490
    %4662 = vmatpush.msra.mxu0 %v4488
    %4663 = vmatpush.msra.mxu0 %v4486
    %4664 = vmatpush.msra.mxu0 %v4484
    %4665 = vmatpush.msra.mxu0 %v4482
    %4666 = vmatpush.msra.mxu0 %v4480
    %4667 = vmatpush.msra.mxu0 %v4478
    %4668 = vmatpush.msra.mxu0 %v4476
    %4669 = vmatpush.msra.mxu0 %v4474
    %4670 = vmatpush.msra.mxu0 %v4472
    %4671 = vmatpush.msra.mxu0 %v4470
    %4672 = vmatpush.msra.mxu0 %v4468
    %4673 = vmatmul.f32.gmra.mxu0 %v4337
    %v4674 = vpop.f32.mrf.mxu0
    %v4675 = vadd.f32 %v4655, %v4674
    %4676 = vdwg.mxu0
    %4677 = vmatpush.msra.mxu0 %v4530
    %4678 = vmatpush.msra.mxu0 %v4528
    %4679 = vmatpush.msra.mxu0 %v4526
    %4680 = vmatpush.msra.mxu0 %v4524
    %4681 = vmatpush.msra.mxu0 %v4522
    %4682 = vmatpush.msra.mxu0 %v4520
    %4683 = vmatpush.msra.mxu0 %v4518
    %4684 = vmatpush.msra.mxu0 %v4516
    %4685 = vmatpush.msra.mxu0 %v4514
    %4686 = vmatpush.msra.mxu0 %v4512
    %4687 = vmatpush.msra.mxu0 %v4510
    %4688 = vmatpush.msra.mxu0 %v4508
    %4689 = vmatpush.msra.mxu0 %v4506
    %4690 = vmatpush.msra.mxu0 %v4504
    %4691 = vmatpush.msra.mxu0 %v4502
    %4692 = vmatpush.msra.mxu0 %v4500
    %4693 = vmatmul.f32.gmra.mxu0 %v4338
    %v4694 = vpop.f32.mrf.mxu0
    %v4695 = vadd.f32 %v4675, %v4694
    %4696 = vdwg.mxu0
    %4697 = vst [vmem:[#allocation37] sm:$0xff] %v4615
    %4698 = vst [vmem:[#allocation37 + $0x8] sm:$0xff] %v4695
    %v4699 = vld [vmem:[%s53] sm:$0xff]
    %v4700 = vld [vmem:[%s53 + $0x8] sm:$0xff]
    %v4701 = vld [vmem:[%s53 + $0x10] sm:$0xff]
    %v4702 = vld [vmem:[%s53 + $0x18] sm:$0xff]
    %v4703 = vld [vmem:[%s53 + $0x20] sm:$0xff]
    %v4704 = vld [vmem:[%s53 + $0x28] sm:$0xff]
    %v4705 = vld [vmem:[%s53 + $0x30] sm:$0xff]
    %v4706 = vld [vmem:[%s53 + $0x38] sm:$0xff]
    %v4707 = vunpack.c.l.bf16 %v4699
    %v4708 = vunpack.c.h.bf16 %v4699
    %v4709 = vunpack.c.l.bf16 %v4700
    %v4710 = vunpack.c.h.bf16 %v4700
    %v4711 = vunpack.c.l.bf16 %v4701
    %v4712 = vunpack.c.h.bf16 %v4701
    %v4713 = vunpack.c.l.bf16 %v4702
    %v4714 = vunpack.c.h.bf16 %v4702
    %v4715 = vunpack.c.l.bf16 %v4703
    %v4716 = vunpack.c.h.bf16 %v4703
    %v4717 = vunpack.c.l.bf16 %v4704
    %v4718 = vunpack.c.h.bf16 %v4704
    %v4719 = vunpack.c.l.bf16 %v4705
    %v4720 = vunpack.c.h.bf16 %v4705
    %v4721 = vunpack.c.l.bf16 %v4706
    %v4722 = vunpack.c.h.bf16 %v4706
    %v4723 = vld [vmem:[#allocation32] sm:$0xf]
    %v4725 = vperm.slane %v4723, 0
    %v4726 = vperm.slane %v4723, 1
    %v4727 = vperm.slane %v4723, 2
    %v4728 = vperm.slane %v4723, 3
    %v4734 = vsel %vm4145, %v4217, 0
    %4736 = vmatpush.msra.mxu0 0.0
    %4737 = vmatpush.msra.mxu0 0.0
    %4738 = vmatpush.msra.mxu0 0.0
    %4739 = vmatpush.msra.mxu0 0.0
    %4740 = vmatpush.msra.mxu0 0.0
    %4741 = vmatpush.msra.mxu0 0.0
    %4742 = vmatpush.msra.mxu0 0.0
    %4743 = vmatpush.msra.mxu0 0.0
    %4744 = vmatpush.msra.mxu0 0.0
    %4745 = vmatpush.msra.mxu0 0.0
    %4746 = vmatpush.msra.mxu0 0.0
    %4747 = vmatpush.msra.mxu0 0.0
    %4748 = vmatpush.msra.mxu0 %v4719
    %4749 = vmatpush.msra.mxu0 %v4715
    %4750 = vmatpush.msra.mxu0 %v4711
    %4751 = vmatpush.msra.mxu0 %v4707
    %4752 = vmatmul.f32.gmra.mxu0 %v4734
    %v4753 = vpop.f32.mrf.mxu0
    %v4754 = vadd.f32 %v4725, %v4753
    %4755 = vdwg.mxu0
    %4756 = vmatpush.msra.mxu0 0.0
    %4757 = vmatpush.msra.mxu0 0.0
    %4758 = vmatpush.msra.mxu0 0.0
    %4759 = vmatpush.msra.mxu0 0.0
    %4760 = vmatpush.msra.mxu0 0.0
    %4761 = vmatpush.msra.mxu0 0.0
    %4762 = vmatpush.msra.mxu0 0.0
    %4763 = vmatpush.msra.mxu0 0.0
    %4764 = vmatpush.msra.mxu0 0.0
    %4765 = vmatpush.msra.mxu0 0.0
    %4766 = vmatpush.msra.mxu0 0.0
    %4767 = vmatpush.msra.mxu0 0.0
    %4768 = vmatpush.msra.mxu0 %v4720
    %4769 = vmatpush.msra.mxu0 %v4716
    %4770 = vmatpush.msra.mxu0 %v4712
    %4771 = vmatpush.msra.mxu0 %v4708
    %4772 = vmatmul.f32.gmra.mxu0 %v4734
    %v4773 = vpop.f32.mrf.mxu0
    %v4774 = vadd.f32 %v4726, %v4773
    %4775 = vdwg.mxu0
    %4776 = vmatpush.msra.mxu0 0.0
    %4777 = vmatpush.msra.mxu0 0.0
    %4778 = vmatpush.msra.mxu0 0.0
    %4779 = vmatpush.msra.mxu0 0.0
    %4780 = vmatpush.msra.mxu0 0.0
    %4781 = vmatpush.msra.mxu0 0.0
    %4782 = vmatpush.msra.mxu0 0.0
    %4783 = vmatpush.msra.mxu0 0.0
    %4784 = vmatpush.msra.mxu0 0.0
    %4785 = vmatpush.msra.mxu0 0.0
    %4786 = vmatpush.msra.mxu0 0.0
    %4787 = vmatpush.msra.mxu0 0.0
    %4788 = vmatpush.msra.mxu0 %v4721
    %4789 = vmatpush.msra.mxu0 %v4717
    %4790 = vmatpush.msra.mxu0 %v4713
    %4791 = vmatpush.msra.mxu0 %v4709
    %4792 = vmatmul.f32.gmra.mxu0 %v4734
    %v4793 = vpop.f32.mrf.mxu0
    %v4794 = vadd.f32 %v4727, %v4793
    %4795 = vdwg.mxu0
    %4796 = vmatpush.msra.mxu0 0.0
    %4797 = vmatpush.msra.mxu0 0.0
    %4798 = vmatpush.msra.mxu0 0.0
    %4799 = vmatpush.msra.mxu0 0.0
    %4800 = vmatpush.msra.mxu0 0.0
    %4801 = vmatpush.msra.mxu0 0.0
    %4802 = vmatpush.msra.mxu0 0.0
    %4803 = vmatpush.msra.mxu0 0.0
    %4804 = vmatpush.msra.mxu0 0.0
    %4805 = vmatpush.msra.mxu0 0.0
    %4806 = vmatpush.msra.mxu0 0.0
    %4807 = vmatpush.msra.mxu0 0.0
    %4808 = vmatpush.msra.mxu0 %v4722
    %4809 = vmatpush.msra.mxu0 %v4718
    %4810 = vmatpush.msra.mxu0 %v4714
    %4811 = vmatpush.msra.mxu0 %v4710
    %4812 = vmatmul.f32.gmra.mxu0 %v4734
    %v4813 = vpop.f32.mrf.mxu0
    %v4814 = vadd.f32 %v4728, %v4813
    %4815 = vdwg.mxu0
    %v4816 = vmax.f32 %v4754, 0.0
    %v4817 = vmax.f32 %v4774, 0.0
    %v4818 = vmax.f32 %v4794, 0.0
    %v4819 = vmax.f32 %v4814, 0.0
    %v4820 = vld [vmem:[#allocation34] sm:$0xf]
    %v4821 = vld [vmem:[#allocation34 + $0x4] sm:$0xf]
    %v4822 = vld [vmem:[#allocation34 + $0x8] sm:$0xf]
    %v4823 = vld [vmem:[#allocation34 + $0xc] sm:$0xf]
    %v4824 = vld [vmem:[#allocation34 + $0x10] sm:$0xf]
    %v4825 = vld [vmem:[#allocation34 + $0x14] sm:$0xf]
    %v4826 = vld [vmem:[#allocation34 + $0x18] sm:$0xf]
    %v4827 = vld [vmem:[#allocation34 + $0x1c] sm:$0xf]
    %v4828 = vld [vmem:[#allocation34 + $0x20] sm:$0xf]
    %v4829 = vld [vmem:[#allocation34 + $0x24] sm:$0xf]
    %v4830 = vld [vmem:[#allocation34 + $0x28] sm:$0xf]
    %v4831 = vld [vmem:[#allocation34 + $0x2c] sm:$0xf]
    %v4832 = vld [vmem:[#allocation34 + $0x30] sm:$0xf]
    %v4833 = vld [vmem:[#allocation34 + $0x34] sm:$0xf]
    %v4834 = vld [vmem:[#allocation34 + $0x38] sm:$0xf]
    %v4835 = vld [vmem:[#allocation34 + $0x3c] sm:$0xf]
    %v4836 = vld [vmem:[#allocation34 + $0x40] sm:$0xf]
    %v4837 = vld [vmem:[#allocation34 + $0x44] sm:$0xf]
    %v4838 = vld [vmem:[#allocation34 + $0x48] sm:$0xf]
    %v4839 = vld [vmem:[#allocation34 + $0x4c] sm:$0xf]
    %v4840 = vld [vmem:[#allocation34 + $0x50] sm:$0xf]
    %v4841 = vld [vmem:[#allocation34 + $0x54] sm:$0xf]
    %v4842 = vld [vmem:[#allocation34 + $0x58] sm:$0xf]
    %v4843 = vld [vmem:[#allocation34 + $0x5c] sm:$0xf]
    %v4844 = vld [vmem:[#allocation34 + $0x60] sm:$0xf]
    %v4845 = vld [vmem:[#allocation34 + $0x64] sm:$0xf]
    %v4846 = vld [vmem:[#allocation34 + $0x68] sm:$0xf]
    %v4847 = vld [vmem:[#allocation34 + $0x6c] sm:$0xf]
    %v4848 = vld [vmem:[#allocation34 + $0x70] sm:$0xf]
    %v4849 = vld [vmem:[#allocation34 + $0x74] sm:$0xf]
    %v4850 = vld [vmem:[#allocation34 + $0x78] sm:$0xf]
    %v4851 = vld [vmem:[#allocation34 + $0x7c] sm:$0xf]
    %v4852 = vld [vmem:[#allocation34 + $0x80] sm:$0xf]
    %v4853 = vld [vmem:[#allocation34 + $0x84] sm:$0xf]
    %v4854 = vld [vmem:[#allocation34 + $0x88] sm:$0xf]
    %v4855 = vld [vmem:[#allocation34 + $0x8c] sm:$0xf]
    %v4856 = vld [vmem:[#allocation34 + $0x90] sm:$0xf]
    %v4857 = vld [vmem:[#allocation34 + $0x94] sm:$0xf]
    %v4858 = vld [vmem:[#allocation34 + $0x98] sm:$0xf]
    %v4859 = vld [vmem:[#allocation34 + $0x9c] sm:$0xf]
    %v4860 = vld [vmem:[#allocation34 + $0xa0] sm:$0xf]
    %v4861 = vld [vmem:[#allocation34 + $0xa4] sm:$0xf]
    %v4862 = vld [vmem:[#allocation34 + $0xa8] sm:$0xf]
    %v4863 = vld [vmem:[#allocation34 + $0xac] sm:$0xf]
    %v4864 = vld [vmem:[#allocation34 + $0xb0] sm:$0xf]
    %v4865 = vld [vmem:[#allocation34 + $0xb4] sm:$0xf]
    %v4866 = vld [vmem:[#allocation34 + $0xb8] sm:$0xf]
    %v4867 = vld [vmem:[#allocation34 + $0xbc] sm:$0xf]
    %v4868 = vld [vmem:[#allocation34 + $0xc0] sm:$0xf]
    %v4869 = vld [vmem:[#allocation34 + $0xc4] sm:$0xf]
    %v4870 = vld [vmem:[#allocation34 + $0xc8] sm:$0xf]
    %v4871 = vld [vmem:[#allocation34 + $0xcc] sm:$0xf]
    %v4872 = vld [vmem:[#allocation34 + $0xd0] sm:$0xf]
    %v4873 = vld [vmem:[#allocation34 + $0xd4] sm:$0xf]
    %v4874 = vld [vmem:[#allocation34 + $0xd8] sm:$0xf]
    %v4875 = vld [vmem:[#allocation34 + $0xdc] sm:$0xf]
    %v4876 = vld [vmem:[#allocation34 + $0xe0] sm:$0xf]
    %v4877 = vld [vmem:[#allocation34 + $0xe4] sm:$0xf]
    %v4878 = vld [vmem:[#allocation34 + $0xe8] sm:$0xf]
    %v4879 = vld [vmem:[#allocation34 + $0xec] sm:$0xf]
    %v4880 = vld [vmem:[#allocation34 + $0xf0] sm:$0xf]
    %v4881 = vld [vmem:[#allocation34 + $0xf4] sm:$0xf]
    %v4882 = vld [vmem:[#allocation34 + $0xf8] sm:$0xf]
    %v4883 = vld [vmem:[#allocation34 + $0xfc] sm:$0xf]
    %v4884 = vunpack.c.l.bf16 %v4820
    %v4885 = vunpack.c.l.bf16 %v4821
    %v4886 = vunpack.c.l.bf16 %v4822
    %v4887 = vunpack.c.l.bf16 %v4823
    %v4888 = vunpack.c.l.bf16 %v4824
    %v4889 = vunpack.c.l.bf16 %v4825
    %v4890 = vunpack.c.l.bf16 %v4826
    %v4891 = vunpack.c.l.bf16 %v4827
    %v4892 = vunpack.c.l.bf16 %v4828
    %v4893 = vunpack.c.l.bf16 %v4829
    %v4894 = vunpack.c.l.bf16 %v4830
    %v4895 = vunpack.c.l.bf16 %v4831
    %v4896 = vunpack.c.l.bf16 %v4832
    %v4897 = vunpack.c.l.bf16 %v4833
    %v4898 = vunpack.c.l.bf16 %v4834
    %v4899 = vunpack.c.l.bf16 %v4835
    %v4900 = vunpack.c.l.bf16 %v4836
    %v4901 = vunpack.c.l.bf16 %v4837
    %v4902 = vunpack.c.l.bf16 %v4838
    %v4903 = vunpack.c.l.bf16 %v4839
    %v4904 = vunpack.c.l.bf16 %v4840
    %v4905 = vunpack.c.l.bf16 %v4841
    %v4906 = vunpack.c.l.bf16 %v4842
    %v4907 = vunpack.c.l.bf16 %v4843
    %v4908 = vunpack.c.l.bf16 %v4844
    %v4909 = vunpack.c.l.bf16 %v4845
    %v4910 = vunpack.c.l.bf16 %v4846
    %v4911 = vunpack.c.l.bf16 %v4847
    %v4912 = vunpack.c.l.bf16 %v4848
    %v4913 = vunpack.c.l.bf16 %v4849
    %v4914 = vunpack.c.l.bf16 %v4850
    %v4915 = vunpack.c.l.bf16 %v4851
    %v4916 = vunpack.c.l.bf16 %v4852
    %v4917 = vunpack.c.l.bf16 %v4853
    %v4918 = vunpack.c.l.bf16 %v4854
    %v4919 = vunpack.c.l.bf16 %v4855
    %v4920 = vunpack.c.l.bf16 %v4856
    %v4921 = vunpack.c.l.bf16 %v4857
    %v4922 = vunpack.c.l.bf16 %v4858
    %v4923 = vunpack.c.l.bf16 %v4859
    %v4924 = vunpack.c.l.bf16 %v4860
    %v4925 = vunpack.c.l.bf16 %v4861
    %v4926 = vunpack.c.l.bf16 %v4862
    %v4927 = vunpack.c.l.bf16 %v4863
    %v4928 = vunpack.c.l.bf16 %v4864
    %v4929 = vunpack.c.l.bf16 %v4865
    %v4930 = vunpack.c.l.bf16 %v4866
    %v4931 = vunpack.c.l.bf16 %v4867
    %v4932 = vunpack.c.l.bf16 %v4868
    %v4933 = vunpack.c.l.bf16 %v4869
    %v4934 = vunpack.c.l.bf16 %v4870
    %v4935 = vunpack.c.l.bf16 %v4871
    %v4936 = vunpack.c.l.bf16 %v4872
    %v4937 = vunpack.c.l.bf16 %v4873
    %v4938 = vunpack.c.l.bf16 %v4874
    %v4939 = vunpack.c.l.bf16 %v4875
    %v4940 = vunpack.c.l.bf16 %v4876
    %v4941 = vunpack.c.l.bf16 %v4877
    %v4942 = vunpack.c.l.bf16 %v4878
    %v4943 = vunpack.c.l.bf16 %v4879
    %v4944 = vunpack.c.l.bf16 %v4880
    %v4945 = vunpack.c.l.bf16 %v4881
    %v4946 = vunpack.c.l.bf16 %v4882
    %v4947 = vunpack.c.l.bf16 %v4883
    %v4948 = vld [vmem:[#allocation35] sm:$0x1]
    %v4950 = vperm.slane %v4948, 0
    %4952 = vmatpush.msra.mxu0 %v4899
    %4953 = vmatpush.msra.mxu0 %v4898
    %4954 = vmatpush.msra.mxu0 %v4897
    %4955 = vmatpush.msra.mxu0 %v4896
    %4956 = vmatpush.msra.mxu0 %v4895
    %4957 = vmatpush.msra.mxu0 %v4894
    %4958 = vmatpush.msra.mxu0 %v4893
    %4959 = vmatpush.msra.mxu0 %v4892
    %4960 = vmatpush.msra.mxu0 %v4891
    %4961 = vmatpush.msra.mxu0 %v4890
    %4962 = vmatpush.msra.mxu0 %v4889
    %4963 = vmatpush.msra.mxu0 %v4888
    %4964 = vmatpush.msra.mxu0 %v4887
    %4965 = vmatpush.msra.mxu0 %v4886
    %4966 = vmatpush.msra.mxu0 %v4885
    %4967 = vmatpush.msra.mxu0 %v4884
    %4968 = vmatmul.f32.gmra.mxu0 %v4816
    %v4969 = vpop.f32.mrf.mxu0
    %v4970 = vadd.f32 %v4950, %v4969
    %4971 = vdwg.mxu0
    %4972 = vmatpush.msra.mxu0 %v4915
    %4973 = vmatpush.msra.mxu0 %v4914
    %4974 = vmatpush.msra.mxu0 %v4913
    %4975 = vmatpush.msra.mxu0 %v4912
    %4976 = vmatpush.msra.mxu0 %v4911
    %4977 = vmatpush.msra.mxu0 %v4910
    %4978 = vmatpush.msra.mxu0 %v4909
    %4979 = vmatpush.msra.mxu0 %v4908
    %4980 = vmatpush.msra.mxu0 %v4907
    %4981 = vmatpush.msra.mxu0 %v4906
    %4982 = vmatpush.msra.mxu0 %v4905
    %4983 = vmatpush.msra.mxu0 %v4904
    %4984 = vmatpush.msra.mxu0 %v4903
    %4985 = vmatpush.msra.mxu0 %v4902
    %4986 = vmatpush.msra.mxu0 %v4901
    %4987 = vmatpush.msra.mxu0 %v4900
    %4988 = vmatmul.f32.gmra.mxu0 %v4817
    %v4989 = vpop.f32.mrf.mxu0
    %v4990 = vadd.f32 %v4970, %v4989
    %4991 = vdwg.mxu0
    %4992 = vmatpush.msra.mxu0 %v4931
    %4993 = vmatpush.msra.mxu0 %v4930
    %4994 = vmatpush.msra.mxu0 %v4929
    %4995 = vmatpush.msra.mxu0 %v4928
    %4996 = vmatpush.msra.mxu0 %v4927
    %4997 = vmatpush.msra.mxu0 %v4926
    %4998 = vmatpush.msra.mxu0 %v4925
    %4999 = vmatpush.msra.mxu0 %v4924
    %5000 = vmatpush.msra.mxu0 %v4923
    %5001 = vmatpush.msra.mxu0 %v4922
    %5002 = vmatpush.msra.mxu0 %v4921
    %5003 = vmatpush.msra.mxu0 %v4920
    %5004 = vmatpush.msra.mxu0 %v4919
    %5005 = vmatpush.msra.mxu0 %v4918
    %5006 = vmatpush.msra.mxu0 %v4917
    %5007 = vmatpush.msra.mxu0 %v4916
    %5008 = vmatmul.f32.gmra.mxu0 %v4818
    %v5009 = vpop.f32.mrf.mxu0
    %v5010 = vadd.f32 %v4990, %v5009
    %5011 = vdwg.mxu0
    %5012 = vmatpush.msra.mxu0 %v4947
    %5013 = vmatpush.msra.mxu0 %v4946
    %5014 = vmatpush.msra.mxu0 %v4945
    %5015 = vmatpush.msra.mxu0 %v4944
    %5016 = vmatpush.msra.mxu0 %v4943
    %5017 = vmatpush.msra.mxu0 %v4942
    %5018 = vmatpush.msra.mxu0 %v4941
    %5019 = vmatpush.msra.mxu0 %v4940
    %5020 = vmatpush.msra.mxu0 %v4939
    %5021 = vmatpush.msra.mxu0 %v4938
    %5022 = vmatpush.msra.mxu0 %v4937
    %5023 = vmatpush.msra.mxu0 %v4936
    %5024 = vmatpush.msra.mxu0 %v4935
    %5025 = vmatpush.msra.mxu0 %v4934
    %5026 = vmatpush.msra.mxu0 %v4933
    %5027 = vmatpush.msra.mxu0 %v4932
    %5028 = vmatmul.f32.gmra.mxu0 %v4819
    %v5029 = vpop.f32.mrf.mxu0
    %v5030 = vadd.f32 %v5010, %v5029
    %5031 = vdwg.mxu0
    %5032 = vst [vmem:[#allocation38] sm:$0xff] %v5030
    %5034 = vrot.lane.b32.xlu0 %v4136, 96
    %v5035 = vpop.permute.xlu0 %5034
    %5038 = vrot.lane.b32.xlu0 %v4201, 64
    %v5039 = vpop.permute.xlu0 %5038
    %5042 = vrot.lane.b32.xlu0 %v4205, 96
    %v5043 = vpop.permute.xlu0 %5042
    %v5045 = vsel %vm4145, %v4139, %v5035
    %v5046 = vsel %vm4147, %v5045, %v5039
    %v5047 = vsel %vm4177, %v5046, %v5043
    %5048 = vst [vmem:[%s61] sm:$0xff] %v5047
    // Predicated region
    $region210: #{cirh_forward.1} parent=1 // pred_check
      _
    $region211: #{cirh_forward.1} parent=1 // pred_check_branch
      %5050 = sbr.rel (0) target = $region213
    $region212: #{cirh_forward.1} parent=1 // pred_region
      _
    $region213: #{cirh_forward.1} parent=1 // pred_fallthru
      _
    // Predicated region
    $region214: #{cirh_forward.1} parent=1 // pred_check
      _
    $region215: #{cirh_forward.1} parent=1 // pred_check_branch
      %5052 = sbr.rel (0) target = $region217
    $region216: #{cirh_forward.1} parent=1 // pred_region
      %5054 = vsyncadd [#allocation4], 0
      %s5056 = sshll.u32 [#allocation37], 4
      %s5057 = int_to_ptr.vmem [resolvable:$true] %s5056
      %s5058 = sshll.u32 %s63, 4
      %s5059 = int_to_ptr.hbm [resolvable:$true] %s5058
      %5061 = dma.vmem_to_hbm [thread:$0]  %s5057, 256, %s5059, [#allocation4]
    $region217: #{cirh_forward.1} parent=1 // pred_fallthru
      _
    // Predicated region
    $region218: #{cirh_forward.1} parent=1 // pred_check
      _
    $region219: #{cirh_forward.1} parent=1 // pred_check_branch
      %5063 = sbr.rel (0) target = $region221
    $region220: #{cirh_forward.1} parent=1 // pred_region
      %5065 = vsyncadd [#allocation39], 0
      %s5067 = sshll.u32 [#allocation38], 4
      %s5068 = int_to_ptr.vmem [resolvable:$true] %s5067
      %s5069 = sshll.u32 %s65, 4
      %s5070 = int_to_ptr.hbm [resolvable:$true] %s5069
      %5072 = dma.vmem_to_hbm [thread:$0]  %s5068, 128, %s5070, [#allocation39]
    $region221: #{cirh_forward.1} parent=1 // pred_fallthru
      _
    // Predicated region
    $region222: #{cirh_forward.1} parent=1 // pred_check
      _
    $region223: #{cirh_forward.1} parent=1 // pred_check_branch
      %5074 = sbr.rel (0) target = $region225
    $region224: #{cirh_forward.1} parent=1 // pred_region
      _
    $region225: #{cirh_forward.1} parent=1 // pred_fallthru
      _
    // Predicated region
    $region226: #{cirh_forward.1} parent=1 // pred_check
      _
    $region227: #{cirh_forward.1} parent=1 // pred_check_branch
      %5076 = sbr.rel (0) target = $region229
    $region228: #{cirh_forward.1} parent=1 // pred_region
      %5078 = dma.done [#allocation4], 256
    $region229: #{cirh_forward.1} parent=1 // pred_fallthru
      _
    // Predicated region
    $region230: #{cirh_forward.1} parent=1 // pred_check
      _
    $region231: #{cirh_forward.1} parent=1 // pred_check_branch
      %5080 = sbr.rel (0) target = $region233
    $region232: #{cirh_forward.1} parent=1 // pred_region
      %5082 = dma.done [#allocation39], 128
    $region233: #{cirh_forward.1} parent=1 // pred_fallthru
      _
    %5083 = vsyncpa [#allocation3], 1
    %5084 = vsyncpa [#allocation6], 1
    %5085 = vsyncpa [#allocation9], 1
    %5086 = vsyncpa [#allocation12], 1
    %5087 = vsyncpa [#allocation15], 1
    %5088 = vsyncpa [#allocation18], 1
    %5089 = vsyncpa [#allocation21], 1
    %5090 = vsyncpa [#allocation24], 1
    %5091 = vsyncpa [#allocation27], 1
    %5092 = vsyncpa [#allocation30], 1
    %5093 = vsyncpa [#allocation33], 1
    %5094 = vsyncpa [#allocation36], 1
    %5095 = vsyncpa [#allocation4], 1
    %5096 = vsyncpa [#allocation39], 1

</llo_original>
